<compile_context>
chip_gen: v6e
topology: v6e:2x2x1
jax: 0.10.0
libtpu: 0.0.40
codegen_flags: <defaults>
</compile_context>

<pallas_src>
import functools
import numpy as np
import jax
import jax.numpy as jnp
from jax.experimental import pallas as pl
from jax.experimental.pallas import tpu as pltpu


_VMEM_LIMIT = 48 * 1024 * 1024  # above default scoped limits, below v7x physical


# ----------------------------------------------------------------------------- helpers
def bilinear_matrix(out_size, in_size):
    """Interpolation matrix M (out, in) for F.interpolate(..., mode='bilinear',
    align_corners=True) applied separably along one axis."""
    M = np.zeros((out_size, in_size), np.float32)
    if in_size == 1:
        M[:, 0] = 1.0
        return M
    if out_size == 1:
        M[0, 0] = 1.0
        return M
    scale = (in_size - 1) / (out_size - 1)
    for i in range(out_size):
        src = i * scale
        i0 = int(np.floor(src))
        i1 = min(i0 + 1, in_size - 1)
        f = src - i0
        M[i, i0] += 1.0 - f
        M[i, i1] += f
    return M


def conv3x3_to_taps(w):  # PyTorch (cout, cin, 3, 3) -> (9, cin, cout), tap = dy*3+dx
    return jnp.transpose(w, (2, 3, 1, 0)).reshape(9, w.shape[1], w.shape[0])


def fold_bn(gamma, beta, mean, var, eps=1e-5):
    scale = gamma / jnp.sqrt(var + eps)
    bias = beta - mean * scale
    return scale.reshape(1, -1), bias.reshape(1, -1)


@functools.lru_cache(maxsize=None)
def _buffered_ok():
    """True iff this JAX build supports pl.BlockSpec(..., pipeline_mode=pl.Buffered(1))."""
    try:
        spec = pl.BlockSpec((8, 128), lambda i: (0, 0), pipeline_mode=pl.Buffered(1))

        def k(x_ref, o_ref):
            o_ref[...] = x_ref[...] + 1.0

        fn = pl.pallas_call(
            k,
            out_shape=jax.ShapeDtypeStruct((8, 128), jnp.float32),
            grid=(1,),
            in_specs=[spec],
            out_specs=pl.BlockSpec((8, 128), lambda i: (0, 0)))
        jax.jit(fn).lower(jnp.zeros((8, 128), jnp.float32)).compile()
        return True
    except Exception:
        return False


def _choose_row_tile(H, W):
    # Untiled fast path while the double-buffered f32 output block stays small
    # (e.g. v6e: 128 MiB VMEM); otherwise pick a multiple-of-8 row tile <= 256 so
    # per-step VMEM is bounded and the row axis can be sharded across TensorCores.
    if 2 * H * W * 4 <= 16 * 1024 * 1024:
        return H
    for t in range(256, 7, -8):
        if H % t == 0:
            return t
    return H


# ----------------------------------------------------------------------------- backbone (synthetic stand-in)
def _conv1x1_vpu_relu_kernel(x_ref, w_ref, b_ref, o_ref, *, h, w, cin, cout):
    # cin is tiny (RGB): a K=3 matmul would use 3/256 of the MXU contraction dim,
    # so do the weighted channel sum on the VPU instead.
    x = x_ref[0].reshape(h * w, cin)
    acc = x[:, 0:1] * w_ref[0:1, :]
    for c in range(1, cin):
        acc = acc + x[:, c:c + 1] * w_ref[c:c + 1, :]
    y = jnp.maximum(acc + b_ref[...], 0.0)
    o_ref[0] = y.reshape(h, w, cout).astype(o_ref.dtype)


def _conv1x1_mxu_relu_kernel(x_ref, w_ref, b_ref, o_ref, *, h, w, cin, cout):
    x = x_ref[0].reshape(h * w, cin).astype(jnp.bfloat16)      # bf16 MXU operands
    y = jnp.dot(x, w_ref[...], preferred_element_type=jnp.float32) + b_ref[...]
    o_ref[0] = jnp.maximum(y, 0.0).reshape(h, w, cout).astype(o_ref.dtype)


def _conv1x1_relu(kernel_fn, x, w, b, out_dtype):
    n, h, wd, cin = x.shape
    cout = w.shape[1]
    kern = functools.partial(kernel_fn, h=h, w=wd, cin=cin, cout=cout)
    return pl.pallas_call(
        kern,
        out_shape=jax.ShapeDtypeStruct((n, h, wd, cout), out_dtype),
        grid=(n,),
        in_specs=[
            pl.BlockSpec((1, h, wd, cin), lambda i: (i, 0, 0, 0)),
            pl.BlockSpec((cin, cout), lambda i: (0, 0)),
            pl.BlockSpec((1, cout), lambda i: (0, 0)),
        ],
        out_specs=pl.BlockSpec((1, h, wd, cout), lambda i: (i, 0, 0, 0)),
        compiler_params=pltpu.CompilerParams(
            dimension_semantics=("parallel",), vmem_limit_bytes=_VMEM_LIMIT),
    )(x, w, b)


def conv1x1_vpu_relu(x, w, b, out_dtype=jnp.float32):
    return _conv1x1_relu(_conv1x1_vpu_relu_kernel, x, w, b, out_dtype)


def conv1x1_mxu_relu(x, w, b, out_dtype=jnp.float32):
    return _conv1x1_relu(_conv1x1_mxu_relu_kernel, x, w, b, out_dtype)


# ----------------------------------------------------------------------------- FCN heads kernel
def _fcn_heads_kernel(c4_ref, c3_ref,
                      h_w1_ref, h_bns_ref, h_bnb_ref, h_w2_ref, h_b2_ref,
                      a_w1_ref, a_bns_ref, a_bnb_ref, a_w2_ref, a_b2_ref,
                      f8_ref, f4_ref,
                      pad8_ref, col8_ref, pad4_ref, col4_ref,
                      *, h8, w8, c2, h4, w4, c1):
    def head(x_ref, pad_ref, col_ref, w1_ref, bns_ref, bnb_ref, w2_ref, b2_ref,
             out_ref, h, w, cin):
        # 1-pixel zero halo (Conv2d padding=1): zero only the 4 border strips —
        # the interior is fully overwritten below.  (Cannot be done once-per-call:
        # the batch grid axis is "parallel", so scratch is per-core on 2-TC parts.)
        pad_ref[0:1, :, :] = jnp.zeros((1, w + 2, cin), pad_ref.dtype)
        pad_ref[h + 1:h + 2, :, :] = jnp.zeros((1, w + 2, cin), pad_ref.dtype)
        pad_ref[:, 0:1, :] = jnp.zeros((h + 2, 1, cin), pad_ref.dtype)
        pad_ref[:, w + 1:w + 2, :] = jnp.zeros((h + 2, 1, cin), pad_ref.dtype)
        pad_ref[1:h + 1, 1:w + 1, :] = x_ref[0].astype(pad_ref.dtype)
        xp = pad_ref[...]                                      # (h+2, w+2, cin) f32

        # im2col into a bf16 VMEM scratch -> ONE K=9*cin MXU matmul (f32 acc)
        # instead of 9 short shifted-tap passes.
        t = 0
        for dy in range(3):
            for dx in range(3):
                col_ref[:, t * cin:(t + 1) * cin] = (
                    xp[dy:dy + h, dx:dx + w, :].reshape(h * w, cin)
                    .astype(jnp.bfloat16))
                t += 1
        acc = jnp.dot(col_ref[...], w1_ref[...],
                      preferred_element_type=jnp.float32)      # (h*w, cmid) f32

        # BN (eval, folded) + ReLU; Dropout(0.1) is eval-mode identity.
        y = jnp.maximum(acc * bns_ref[...] + bnb_ref[...], 0.0)

        # 1x1 conv with ncls==1 (out-conv scalar pre-folded into w2/b2): VPU
        # broadcast-mul + lane reduction instead of a width-1 MXU matmul.
        z = jnp.sum(y * w2_ref[...], axis=-1, keepdims=True) + b2_ref[...]
        out_ref[0] = z.reshape(h, w, 1)[:, :, 0].astype(out_ref.dtype)

    head(c4_ref, pad8_ref, col8_ref, h_w1_ref, h_bns_ref, h_bnb_ref,
         h_w2_ref, h_b2_ref, f8_ref, h8, w8, c2)
    head(c3_ref, pad4_ref, col4_ref, a_w1_ref, a_bns_ref, a_bnb_ref,
         a_w2_ref, a_b2_ref, f4_ref, h4, w4, c1)


def fcn_heads(c4, c3, p):
    n, h8, w8, c2 = c4.shape
    _, h4, w4, c1 = c3.shape
    m8 = p["h_w1"].shape[1]
    m4 = p["a_w1"].shape[1]
    buffered = _buffered_ok()

    def const(shape):
        idx = lambda i: (0,) * len(shape)
        if buffered:   # grid-invariant: single-buffer to save VMEM (no DMA overlap needed)
            return pl.BlockSpec(shape, idx, pipeline_mode=pl.Buffered(1))
        return pl.BlockSpec(shape, idx)

    kern = functools.partial(_fcn_heads_kernel, h8=h8, w8=w8, c2=c2,
                             h4=h4, w4=w4, c1=c1)
    return pl.pallas_call(
        kern,
        out_shape=(jax.ShapeDtypeStruct((n, h8, w8), jnp.bfloat16),
                   jax.ShapeDtypeStruct((n, h4, w4), jnp.bfloat16)),
        grid=(n,),
        in_specs=[
            pl.BlockSpec((1, h8, w8, c2), lambda i: (i, 0, 0, 0)),
            pl.BlockSpec((1, h4, w4, c1), lambda i: (i, 0, 0, 0)),
            const((9 * c2, m8)), const((1, m8)), const((1, m8)),
            const((1, m8)), const((1, 1)),
            const((9 * c1, m4)), const((1, m4)), const((1, m4)),
            const((1, m4)), const((1, 1)),
        ],
        out_specs=(pl.BlockSpec((1, h8, w8), lambda i: (i, 0, 0)),
                   pl.BlockSpec((1, h4, w4), lambda i: (i, 0, 0))),
        scratch_shapes=[pltpu.VMEM((h8 + 2, w8 + 2, c2), jnp.float32),
                        pltpu.VMEM((h8 * w8, 9 * c2), jnp.bfloat16),
                        pltpu.VMEM((h4 + 2, w4 + 2, c1), jnp.float32),
                        pltpu.VMEM((h4 * w4, 9 * c1), jnp.bfloat16)],
        compiler_params=pltpu.CompilerParams(
            dimension_semantics=("parallel",), vmem_limit_bytes=_VMEM_LIMIT),
    )(c4, c3,
      p["h_w1"], p["h_bn_s"], p["h_bn_b"], p["h_w2"], p["h_b2"],
      p["a_w1"], p["a_bn_s"], p["a_bn_b"], p["a_w2"], p["a_b2"])


# ----------------------------------------------------------------------------- upsample + add kernel
def _upsample_add_kernel(f8_ref, f4_ref, wh8_ref, ww8_ref, wh4_ref, ww4_ref, o_ref):
    # bilinear (align_corners=True) as two small matmuls per head, row-interp
    # first so nothing is recomputed across row tiles; bf16 operands, f32 acc.
    r8 = jnp.dot(wh8_ref[...], f8_ref[0], preferred_element_type=jnp.float32)
    up8 = jnp.dot(r8.astype(jnp.bfloat16), ww8_ref[...],
                  preferred_element_type=jnp.float32)
    r4 = jnp.dot(wh4_ref[...], f4_ref[0], preferred_element_type=jnp.float32)
    up4 = jnp.dot(r4.astype(jnp.bfloat16), ww4_ref[...],
                  preferred_element_type=jnp.float32)
    # channel-cat + bias-free 1x1 out-conv pre-folded into the heads -> plain add,
    # stored as one lane-dense (row_tile, W) slab.
    o_ref[0] = (up8 + up4).astype(o_ref.dtype)


def seg_upsample_add(f8, f4, out_hw, row_tile=None):
    n, h8, w8 = f8.shape
    _, h4, w4 = f4.shape
    H, W = out_hw
    if row_tile is None:
        row_tile = _choose_row_tile(H, W)
    assert H % row_tile == 0 and (row_tile == H or row_tile % 8 == 0), (H, row_tile)

    wh8 = jnp.asarray(bilinear_matrix(H, h8), jnp.bfloat16)
    ww8 = jnp.asarray(bilinear_matrix(W, w8).T, jnp.bfloat16)
    wh4 = jnp.asarray(bilinear_matrix(H, h4), jnp.bfloat16)
    ww4 = jnp.asarray(bilinear_matrix(W, w4).T, jnp.bfloat16)

    buffered = _buffered_ok()

    def const(shape):
        idx = lambda i, r: (0, 0)
        if buffered:
            return pl.BlockSpec(shape, idx, pipeline_mode=pl.Buffered(1))
        return pl.BlockSpec(shape, idx)

    return pl.pallas_call(
        _upsample_add_kernel,
        out_shape=jax.ShapeDtypeStruct((n, H, W), jnp.float32),
        grid=(n, H // row_tile),
        in_specs=[
            pl.BlockSpec((1, h8, w8), lambda i, r: (i, 0, 0)),
            pl.BlockSpec((1, h4, w4), lambda i, r: (i, 0, 0)),
            pl.BlockSpec((row_tile, h8), lambda i, r: (r, 0)),
            const((w8, W)),
            pl.BlockSpec((row_tile, h4), lambda i, r: (r, 0)),
            const((w4, W)),
        ],
        out_specs=pl.BlockSpec((1, row_tile, W), lambda i, r: (i, r, 0)),
        compiler_params=pltpu.CompilerParams(
            dimension_semantics=("parallel", "parallel"),
            vmem_limit_bytes=_VMEM_LIMIT),
    )(f8, f4, wh8, ww8, wh4, ww4)


# ----------------------------------------------------------------------------- model
def efficientnet_seg_forward(x_nchw, p, row_tile=None):
    x = jnp.transpose(x_nchw, (0, 2, 3, 1)).astype(jnp.float32)      # NCHW -> NHWC
    n, H, W, cimg = x.shape

    # Synthetic backbone stand-in (injected dependency in the PyTorch module):
    # avg-pool + 1x1 conv + ReLU giving c3 (stride 4) and c4 (stride 8), both bf16.
    p4 = x.reshape(n, H // 4, 4, W // 4, 4, cimg).mean(axis=(2, 4))
    c3 = conv1x1_vpu_relu(p4, p["bb1_w"], p["bb1_b"], out_dtype=jnp.bfloat16)
    p2 = (c3.astype(jnp.float32)
            .reshape(n, H // 8, 2, W // 8, 2, c3.shape[-1]).mean(axis=(2, 4)))
    c4 = conv1x1_mxu_relu(p2, p["bb2_w"], p["bb2_b"], out_dtype=jnp.bfloat16)

    # EfficientNetSeg body.
    f8, f4 = fcn_heads(c4, c3, p)                        # bf16 (n,H/8,W/8), (n,H/4,W/4)
    out = seg_upsample_add(f8, f4, (H, W), row_tile=row_tile)        # (n, H, W) f32
    return out[:, None, :, :]                                        # (n, nclass=1, H, W)


def make_params(key, c1, c2, nclass, cimg=3):
    assert nclass == 1, "nn.Conv2d(2, nclass, 1) requires nclass == 1"
    ks = jax.random.split(key, 20)
    nrm = lambda k, s, scale=0.1: jax.random.normal(k, s, jnp.float32) * scale

    params = {}
    # synthetic backbone (stand-in for the injected dependency)
    params["bb1_w"] = nrm(ks[0], (cimg, c1))                          # f32, VPU path
    params["bb1_b"] = nrm(ks[1], (1, c1))
    params["bb2_w"] = nrm(ks[2], (c1, c2)).astype(jnp.bfloat16)
    params["bb2_b"] = nrm(ks[3], (1, c2))

    # out = Conv2d(2, nclass, 1, bias=False): linear in each head, so fold its two
    # scalars into the heads' final conv1x1 weights/biases (exact up to f32 rounding).
    out_w = nrm(ks[18], (nclass, 2, 1, 1))
    wa = out_w[0, 0, 0, 0]
    wb = out_w[0, 1, 0, 0]

    # head = FCNHead(c2, nclass)
    hm = c2 // 4
    h_conv1 = nrm(ks[4], (hm, c2, 3, 3))                              # PyTorch layout
    h_bn = (1.0 + nrm(ks[5], (hm,)), nrm(ks[6], (hm,)),
            nrm(ks[7], (hm,)), 1.0 + jnp.abs(nrm(ks[8], (hm,))))
    h_conv2 = nrm(ks[9], (nclass, hm, 1, 1)); h_b2 = nrm(ks[10], (nclass,))
    params["h_w1"] = conv3x3_to_taps(h_conv1).reshape(9 * c2, hm).astype(jnp.bfloat16)
    params["h_bn_s"], params["h_bn_b"] = fold_bn(*h_bn)
    params["h_w2"] = h_conv2[:, :, 0, 0] * wa                         # (1, hm)
    params["h_b2"] = (h_b2 * wa).reshape(1, nclass)                   # (1, 1)

    # auxlayer = FCNHead(c1, nclass)
    am = c1 // 4
    a_conv1 = nrm(ks[11], (am, c1, 3, 3))
    a_bn = (1.0 + nrm(ks[12], (am,)), nrm(ks[13], (am,)),
            nrm(ks[14], (am,)), 1.0 + jnp.abs(nrm(ks[15], (am,))))
    a_conv2 = nrm(ks[16], (nclass, am, 1, 1)); a_b2 = nrm(ks[17], (nclass,))
    params["a_w1"] = conv3x3_to_taps(a_conv1).reshape(9 * c1, am).astype(jnp.bfloat16)
    params["a_bn_s"], params["a_bn_b"] = fold_bn(*a_bn)
    params["a_w2"] = a_conv2[:, :, 0, 0] * wb
    params["a_b2"] = (a_b2 * wb).reshape(1, nclass)
    return params


if __name__ == "__main__":
    N, Cimg, H, W = 2, 3, 16, 16
    c1, c2, nclass = 16, 32, 1

    key = jax.random.PRNGKey(0)
    kx, kp = jax.random.split(key)
    x = jax.random.normal(kx, (N, Cimg, H, W), jnp.float32)    # NCHW like PyTorch
    params = make_params(kp, c1, c2, nclass, cimg=Cimg)

    _buffered_ok()  # warm the single-buffering capability probe outside jit

    # row_tile=8 exercises the tiled (n, H//tile) "parallel" grid even at 16x16.
    fwd = jax.jit(functools.partial(efficientnet_seg_forward, row_tile=8))
    y = jax.block_until_ready(fwd(x, params))
    assert y.shape == (N, nclass, H, W), y.shape
    assert bool(jnp.isfinite(y).all())
    print("KERNEL_OK")
</pallas_src>

<mosaic_0001>
module attributes {stable_mosaic.version = 11 : i64} {
  func.func @_conv1x1_mxu_relu_kernel(%arg0: i32, %arg1: memref<1x2x2x16xf32, #tpu.memory_space<vmem>>, %arg2: memref<16x32xbf16, #tpu.memory_space<vmem>>, %arg3: memref<1x32xf32, #tpu.memory_space<vmem>>, %arg4: memref<1x2x2x32xbf16, #tpu.memory_space<vmem>>) attributes {dimension_semantics = [#tpu.dimension_semantics<parallel>], iteration_bounds = array<i64: 2>, scalar_prefetch = 0 : i64, scratch_operands = 0 : i64, tpu.core_type = #tpu.core_type<tc>, window_params = [{transform_indices = @transform_0, window_bounds = array<i64: 1, 2, 2, 16>}, {pipeline_mode = #tpu.pipeline_mode<synchronous>, transform_indices = @transform_1, window_bounds = array<i64: 16, 32>}, {pipeline_mode = #tpu.pipeline_mode<synchronous>, transform_indices = @transform_2, window_bounds = array<i64: 1, 32>}, {transform_indices = @transform_3, window_bounds = array<i64: 1, 2, 2, 32>}]} {
    %c0 = arith.constant 0 : index
    %c0_0 = arith.constant 0 : index
    %c0_1 = arith.constant 0 : index
    %c0_2 = arith.constant 0 : index
    %0 = vector.load %arg1[%c0, %c0_0, %c0_1, %c0_2] : memref<1x2x2x16xf32, #tpu.memory_space<vmem>>, vector<1x2x2x16xf32>
    %1 = vector.shape_cast %0 : vector<1x2x2x16xf32> to vector<2x2x16xf32>
    %2 = vector.shape_cast %1 : vector<2x2x16xf32> to vector<4x16xf32>
    %3 = arith.truncf %2 : vector<4x16xf32> to vector<4x16xbf16>
    %c0_3 = arith.constant 0 : index
    %c0_4 = arith.constant 0 : index
    %4 = vector.load %arg2[%c0_3, %c0_4] : memref<16x32xbf16, #tpu.memory_space<vmem>>, vector<16x32xbf16>
    %cst = arith.constant dense<0.000000e+00> : vector<4x32xf32>
    %5 = tpu.matmul %3, %4, %cst {dimension_numbers = #tpu.dot_dimension_numbers<[1], [0], [0], [1], [0, 0, 1, 1], [], []>} : vector<4x16xbf16>, vector<16x32xbf16>, vector<4x32xf32> -> vector<4x32xf32>
    %c0_5 = arith.constant 0 : index
    %c0_6 = arith.constant 0 : index
    %6 = vector.load %arg3[%c0_5, %c0_6] : memref<1x32xf32, #tpu.memory_space<vmem>>, vector<1x32xf32>
    %7 = vector.broadcast %6 : vector<1x32xf32> to vector<4x32xf32>
    %8 = arith.addf %5, %7 : vector<4x32xf32>
    %cst_7 = arith.constant 0.000000e+00 : f32
    %9 = vector.broadcast %cst_7 : f32 to vector<4x32xf32>
    %10 = arith.maximumf %8, %9 : vector<4x32xf32>
    %11 = vector.shape_cast %10 : vector<4x32xf32> to vector<2x2x32xf32>
    %12 = arith.truncf %11 : vector<2x2x32xf32> to vector<2x2x32xbf16>
    %c0_8 = arith.constant 0 : index
    %c0_9 = arith.constant 0 : index
    %c0_10 = arith.constant 0 : index
    %c0_11 = arith.constant 0 : index
    %13 = vector.load %arg4[%c0_8, %c0_9, %c0_10, %c0_11] : memref<1x2x2x32xbf16, #tpu.memory_space<vmem>>, vector<1x2x2x32xbf16>
    %14 = vector.shape_cast %13 : vector<1x2x2x32xbf16> to vector<2x2x32xbf16>
    %15 = vector.shape_cast %12 : vector<2x2x32xbf16> to vector<1x2x2x32xbf16>
    tpu.vector_store %arg4[%c0_8, %c0_9, %c0_10, %c0_11], %15 {strides = array<i32>} : memref<1x2x2x32xbf16, #tpu.memory_space<vmem>>, vector<1x2x2x32xbf16>,
    return
  }
  func.func @transform_0(%arg0: i32) -> (i32, i32, i32, i32) {
    %c0_i32 = arith.constant 0 : i32
    %c0_i32_0 = arith.constant 0 : i32
    %c0_i32_1 = arith.constant 0 : i32
    %c0_i32_2 = arith.constant 0 : i32
    return %arg0, %c0_i32, %c0_i32_0, %c0_i32_1 : i32, i32, i32, i32
  }
  func.func @transform_1(%arg0: i32) -> (i32, i32) {
    %c0_i32 = arith.constant 0 : i32
    %c0_i32_0 = arith.constant 0 : i32
    %c0_i32_1 = arith.constant 0 : i32
    return %c0_i32, %c0_i32_0 : i32, i32
  }
  func.func @transform_2(%arg0: i32) -> (i32, i32) {
    %c0_i32 = arith.constant 0 : i32
    %c0_i32_0 = arith.constant 0 : i32
    %c0_i32_1 = arith.constant 0 : i32
    return %c0_i32, %c0_i32_0 : i32, i32
  }
  func.func @transform_3(%arg0: i32) -> (i32, i32, i32, i32) {
    %c0_i32 = arith.constant 0 : i32
    %c0_i32_0 = arith.constant 0 : i32
    %c0_i32_1 = arith.constant 0 : i32
    %c0_i32_2 = arith.constant 0 : i32
    return %arg0, %c0_i32, %c0_i32_0, %c0_i32_1 : i32, i32, i32, i32
  }
}

module attributes {stable_mosaic.version = 11 : i64} {
  func.func @_conv1x1_vpu_relu_kernel(%arg0: i32, %arg1: memref<1x4x4x3xf32, #tpu.memory_space<vmem>>, %arg2: memref<3x16xf32, #tpu.memory_space<vmem>>, %arg3: memref<1x16xf32, #tpu.memory_space<vmem>>, %arg4: memref<1x4x4x16xbf16, #tpu.memory_space<vmem>>) attributes {dimension_semantics = [#tpu.dimension_semantics<parallel>], iteration_bounds = array<i64: 2>, scalar_prefetch = 0 : i64, scratch_operands = 0 : i64, tpu.core_type = #tpu.core_type<tc>, window_params = [{transform_indices = @transform_0, window_bounds = array<i64: 1, 4, 4, 3>}, {pipeline_mode = #tpu.pipeline_mode<synchronous>, transform_indices = @transform_1, window_bounds = array<i64: 3, 16>}, {pipeline_mode = #tpu.pipeline_mode<synchronous>, transform_indices = @transform_2, window_bounds = array<i64: 1, 16>}, {transform_indices = @transform_3, window_bounds = array<i64: 1, 4, 4, 16>}]} {
    %c0 = arith.constant 0 : index
    %c0_0 = arith.constant 0 : index
    %c0_1 = arith.constant 0 : index
    %c0_2 = arith.constant 0 : index
    %0 = vector.load %arg1[%c0, %c0_0, %c0_1, %c0_2] : memref<1x4x4x3xf32, #tpu.memory_space<vmem>>, vector<1x4x4x3xf32>
    %1 = vector.shape_cast %0 : vector<1x4x4x3xf32> to vector<4x4x3xf32>
    %2 = vector.shape_cast %1 : vector<4x4x3xf32> to vector<16x3xf32>
    %3 = vector.extract_strided_slice %2 {offsets = [0, 0], sizes = [16, 1], strides = [1, 1]} : vector<16x3xf32> to vector<16x1xf32>
    %c0_3 = arith.constant 0 : index
    %c0_4 = arith.constant 0 : index
    %4 = vector.load %arg2[%c0_3, %c0_4] : memref<3x16xf32, #tpu.memory_space<vmem>>, vector<1x16xf32>
    %5 = vector.broadcast %3 : vector<16x1xf32> to vector<16x16xf32>
    %6 = vector.broadcast %4 : vector<1x16xf32> to vector<16x16xf32>
    %7 = arith.mulf %5, %6 : vector<16x16xf32>
    %8 = vector.extract_strided_slice %2 {offsets = [0, 1], sizes = [16, 1], strides = [1, 1]} : vector<16x3xf32> to vector<16x1xf32>
    %c1 = arith.constant 1 : index
    %c0_5 = arith.constant 0 : index
    %9 = vector.load %arg2[%c1, %c0_5] : memref<3x16xf32, #tpu.memory_space<vmem>>, vector<1x16xf32>
    %10 = vector.broadcast %8 : vector<16x1xf32> to vector<16x16xf32>
    %11 = vector.broadcast %9 : vector<1x16xf32> to vector<16x16xf32>
    %12 = arith.mulf %10, %11 : vector<16x16xf32>
    %13 = arith.addf %7, %12 : vector<16x16xf32>
    %14 = vector.extract_strided_slice %2 {offsets = [0, 2], sizes = [16, 1], strides = [1, 1]} : vector<16x3xf32> to vector<16x1xf32>
    %c2 = arith.constant 2 : index
    %c0_6 = arith.constant 0 : index
    %15 = vector.load %arg2[%c2, %c0_6] : memref<3x16xf32, #tpu.memory_space<vmem>>, vector<1x16xf32>
    %16 = vector.broadcast %14 : vector<16x1xf32> to vector<16x16xf32>
    %17 = vector.broadcast %15 : vector<1x16xf32> to vector<16x16xf32>
    %18 = arith.mulf %16, %17 : vector<16x16xf32>
    %19 = arith.addf %13, %18 : vector<16x16xf32>
    %c0_7 = arith.constant 0 : index
    %c0_8 = arith.constant 0 : index
    %20 = vector.load %arg3[%c0_7, %c0_8] : memref<1x16xf32, #tpu.memory_space<vmem>>, vector<1x16xf32>
    %21 = vector.broadcast %20 : vector<1x16xf32> to vector<16x16xf32>
    %22 = arith.addf %19, %21 : vector<16x16xf32>
    %cst = arith.constant 0.000000e+00 : f32
    %23 = vector.broadcast %cst : f32 to vector<16x16xf32>
    %24 = arith.maximumf %22, %23 : vector<16x16xf32>
    %25 = vector.shape_cast %24 : vector<16x16xf32> to vector<4x4x16xf32>
    %26 = arith.truncf %25 : vector<4x4x16xf32> to vector<4x4x16xbf16>
    %c0_9 = arith.constant 0 : index
    %c0_10 = arith.constant 0 : index
    %c0_11 = arith.constant 0 : index
    %c0_12 = arith.constant 0 : index
    %27 = vector.load %arg4[%c0_9, %c0_10, %c0_11, %c0_12] : memref<1x4x4x16xbf16, #tpu.memory_space<vmem>>, vector<1x4x4x16xbf16>
    %28 = vector.shape_cast %27 : vector<1x4x4x16xbf16> to vector<4x4x16xbf16>
    %29 = vector.shape_cast %26 : vector<4x4x16xbf16> to vector<1x4x4x16xbf16>
    tpu.vector_store %arg4[%c0_9, %c0_10, %c0_11, %c0_12], %29 {strides = array<i32>} : memref<1x4x4x16xbf16, #tpu.memory_space<vmem>>, vector<1x4x4x16xbf16>,
    return
  }
  func.func @transform_0(%arg0: i32) -> (i32, i32, i32, i32) {
    %c0_i32 = arith.constant 0 : i32
    %c0_i32_0 = arith.constant 0 : i32
    %c0_i32_1 = arith.constant 0 : i32
    %c0_i32_2 = arith.constant 0 : i32
    return %arg0, %c0_i32, %c0_i32_0, %c0_i32_1 : i32, i32, i32, i32
  }
  func.func @transform_1(%arg0: i32) -> (i32, i32) {
    %c0_i32 = arith.constant 0 : i32
    %c0_i32_0 = arith.constant 0 : i32
    %c0_i32_1 = arith.constant 0 : i32
    return %c0_i32, %c0_i32_0 : i32, i32
  }
  func.func @transform_2(%arg0: i32) -> (i32, i32) {
    %c0_i32 = arith.constant 0 : i32
    %c0_i32_0 = arith.constant 0 : i32
    %c0_i32_1 = arith.constant 0 : i32
    return %c0_i32, %c0_i32_0 : i32, i32
  }
  func.func @transform_3(%arg0: i32) -> (i32, i32, i32, i32) {
    %c0_i32 = arith.constant 0 : i32
    %c0_i32_0 = arith.constant 0 : i32
    %c0_i32_1 = arith.constant 0 : i32
    %c0_i32_2 = arith.constant 0 : i32
    return %arg0, %c0_i32, %c0_i32_0, %c0_i32_1 : i32, i32, i32, i32
  }
}

module attributes {stable_mosaic.version = 11 : i64} {
  func.func @_upsample_add_kernel(%arg0: i32, %arg1: i32, %arg2: memref<1x2x2xbf16, #tpu.memory_space<vmem>>, %arg3: memref<1x4x4xbf16, #tpu.memory_space<vmem>>, %arg4: memref<8x2xbf16, #tpu.memory_space<vmem>>, %arg5: memref<2x16xbf16, #tpu.memory_space<vmem>>, %arg6: memref<8x4xbf16, #tpu.memory_space<vmem>>, %arg7: memref<4x16xbf16, #tpu.memory_space<vmem>>, %arg8: memref<1x8x16xf32, #tpu.memory_space<vmem>>) attributes {dimension_semantics = [#tpu.dimension_semantics<parallel>, #tpu.dimension_semantics<parallel>], iteration_bounds = array<i64: 2, 2>, scalar_prefetch = 0 : i64, scratch_operands = 0 : i64, tpu.core_type = #tpu.core_type<tc>, window_params = [{transform_indices = @transform_0, window_bounds = array<i64: 1, 2, 2>}, {transform_indices = @transform_1, window_bounds = array<i64: 1, 4, 4>}, {transform_indices = @transform_2, window_bounds = array<i64: 8, 2>}, {pipeline_mode = #tpu.pipeline_mode<synchronous>, transform_indices = @transform_3, window_bounds = array<i64: 2, 16>}, {transform_indices = @transform_4, window_bounds = array<i64: 8, 4>}, {pipeline_mode = #tpu.pipeline_mode<synchronous>, transform_indices = @transform_5, window_bounds = array<i64: 4, 16>}, {transform_indices = @transform_6, window_bounds = array<i64: 1, 8, 16>}]} {
    %c0 = arith.constant 0 : index
    %c0_0 = arith.constant 0 : index
    %0 = vector.load %arg4[%c0, %c0_0] : memref<8x2xbf16, #tpu.memory_space<vmem>>, vector<8x2xbf16>
    %c0_1 = arith.constant 0 : index
    %c0_2 = arith.constant 0 : index
    %c0_3 = arith.constant 0 : index
    %1 = vector.load %arg2[%c0_1, %c0_2, %c0_3] : memref<1x2x2xbf16, #tpu.memory_space<vmem>>, vector<1x2x2xbf16>
    %2 = vector.shape_cast %1 : vector<1x2x2xbf16> to vector<2x2xbf16>
    %cst = arith.constant dense<0.000000e+00> : vector<8x2xf32>
    %3 = tpu.matmul %0, %2, %cst {dimension_numbers = #tpu.dot_dimension_numbers<[1], [0], [0], [1], [0, 0, 1, 1], [], []>} : vector<8x2xbf16>, vector<2x2xbf16>, vector<8x2xf32> -> vector<8x2xf32>
    %4 = arith.truncf %3 : vector<8x2xf32> to vector<8x2xbf16>
    %c0_4 = arith.constant 0 : index
    %c0_5 = arith.constant 0 : index
    %5 = vector.load %arg5[%c0_4, %c0_5] : memref<2x16xbf16, #tpu.memory_space<vmem>>, vector<2x16xbf16>
    %cst_6 = arith.constant dense<0.000000e+00> : vector<8x16xf32>
    %6 = tpu.matmul %4, %5, %cst_6 {dimension_numbers = #tpu.dot_dimension_numbers<[1], [0], [0], [1], [0, 0, 1, 1], [], []>} : vector<8x2xbf16>, vector<2x16xbf16>, vector<8x16xf32> -> vector<8x16xf32>
    %c0_7 = arith.constant 0 : index
    %c0_8 = arith.constant 0 : index
    %7 = vector.load %arg6[%c0_7, %c0_8] : memref<8x4xbf16, #tpu.memory_space<vmem>>, vector<8x4xbf16>
    %c0_9 = arith.constant 0 : index
    %c0_10 = arith.constant 0 : index
    %c0_11 = arith.constant 0 : index
    %8 = vector.load %arg3[%c0_9, %c0_10, %c0_11] : memref<1x4x4xbf16, #tpu.memory_space<vmem>>, vector<1x4x4xbf16>
    %9 = vector.shape_cast %8 : vector<1x4x4xbf16> to vector<4x4xbf16>
    %cst_12 = arith.constant dense<0.000000e+00> : vector<8x4xf32>
    %10 = tpu.matmul %7, %9, %cst_12 {dimension_numbers = #tpu.dot_dimension_numbers<[1], [0], [0], [1], [0, 0, 1, 1], [], []>} : vector<8x4xbf16>, vector<4x4xbf16>, vector<8x4xf32> -> vector<8x4xf32>
    %11 = arith.truncf %10 : vector<8x4xf32> to vector<8x4xbf16>
    %c0_13 = arith.constant 0 : index
    %c0_14 = arith.constant 0 : index
    %12 = vector.load %arg7[%c0_13, %c0_14] : memref<4x16xbf16, #tpu.memory_space<vmem>>, vector<4x16xbf16>
    %cst_15 = arith.constant dense<0.000000e+00> : vector<8x16xf32>
    %13 = tpu.matmul %11, %12, %cst_15 {dimension_numbers = #tpu.dot_dimension_numbers<[1], [0], [0], [1], [0, 0, 1, 1], [], []>} : vector<8x4xbf16>, vector<4x16xbf16>, vector<8x16xf32> -> vector<8x16xf32>
    %14 = arith.addf %6, %13 : vector<8x16xf32>
    %c0_16 = arith.constant 0 : index
    %c0_17 = arith.constant 0 : index
    %c0_18 = arith.constant 0 : index
    %15 = vector.load %arg8[%c0_16, %c0_17, %c0_18] : memref<1x8x16xf32, #tpu.memory_space<vmem>>, vector<1x8x16xf32>
    %16 = vector.shape_cast %15 : vector<1x8x16xf32> to vector<8x16xf32>
    %17 = vector.shape_cast %14 : vector<8x16xf32> to vector<1x8x16xf32>
    tpu.vector_store %arg8[%c0_16, %c0_17, %c0_18], %17 {strides = array<i32>} : memref<1x8x16xf32, #tpu.memory_space<vmem>>, vector<1x8x16xf32>,
    return
  }
  func.func @transform_0(%arg0: i32, %arg1: i32) -> (i32, i32, i32) {
    %c0_i32 = arith.constant 0 : i32
    %c0_i32_0 = arith.constant 0 : i32
    %c0_i32_1 = arith.constant 0 : i32
    return %arg0, %c0_i32, %c0_i32_0 : i32, i32, i32
  }
  func.func @transform_1(%arg0: i32, %arg1: i32) -> (i32, i32, i32) {
    %c0_i32 = arith.constant 0 : i32
    %c0_i32_0 = arith.constant 0 : i32
    %c0_i32_1 = arith.constant 0 : i32
    return %arg0, %c0_i32, %c0_i32_0 : i32, i32, i32
  }
  func.func @transform_2(%arg0: i32, %arg1: i32) -> (i32, i32) {
    %c0_i32 = arith.constant 0 : i32
    %c0_i32_0 = arith.constant 0 : i32
    return %arg1, %c0_i32 : i32, i32
  }
  func.func @transform_3(%arg0: i32, %arg1: i32) -> (i32, i32) {
    %c0_i32 = arith.constant 0 : i32
    %c0_i32_0 = arith.constant 0 : i32
    %c0_i32_1 = arith.constant 0 : i32
    return %c0_i32, %c0_i32_0 : i32, i32
  }
  func.func @transform_4(%arg0: i32, %arg1: i32) -> (i32, i32) {
    %c0_i32 = arith.constant 0 : i32
    %c0_i32_0 = arith.constant 0 : i32
    return %arg1, %c0_i32 : i32, i32
  }
  func.func @transform_5(%arg0: i32, %arg1: i32) -> (i32, i32) {
    %c0_i32 = arith.constant 0 : i32
    %c0_i32_0 = arith.constant 0 : i32
    %c0_i32_1 = arith.constant 0 : i32
    return %c0_i32, %c0_i32_0 : i32, i32
  }
  func.func @transform_6(%arg0: i32, %arg1: i32) -> (i32, i32, i32) {
    %c0_i32 = arith.constant 0 : i32
    %c0_i32_0 = arith.constant 0 : i32
    return %arg0, %arg1, %c0_i32 : i32, i32, i32
  }
}

module attributes {stable_mosaic.version = 11 : i64} {
  func.func @_fcn_heads_kernel(%arg0: i32, %arg1: memref<1x2x2x32xbf16, #tpu.memory_space<vmem>>, %arg2: memref<1x4x4x16xbf16, #tpu.memory_space<vmem>>, %arg3: memref<288x8xbf16, #tpu.memory_space<vmem>>, %arg4: memref<1x8xf32, #tpu.memory_space<vmem>>, %arg5: memref<1x8xf32, #tpu.memory_space<vmem>>, %arg6: memref<1x8xf32, #tpu.memory_space<vmem>>, %arg7: memref<1x1xf32, #tpu.memory_space<vmem>>, %arg8: memref<144x4xbf16, #tpu.memory_space<vmem>>, %arg9: memref<1x4xf32, #tpu.memory_space<vmem>>, %arg10: memref<1x4xf32, #tpu.memory_space<vmem>>, %arg11: memref<1x4xf32, #tpu.memory_space<vmem>>, %arg12: memref<1x1xf32, #tpu.memory_space<vmem>>, %arg13: memref<1x2x2xbf16, #tpu.memory_space<vmem>>, %arg14: memref<1x4x4xbf16, #tpu.memory_space<vmem>>, %arg15: memref<4x4x32xf32, #tpu.memory_space<vmem>>, %arg16: memref<4x288xbf16, #tpu.memory_space<vmem>>, %arg17: memref<6x6x16xf32, #tpu.memory_space<vmem>>, %arg18: memref<16x144xbf16, #tpu.memory_space<vmem>>) attributes {dimension_semantics = [#tpu.dimension_semantics<parallel>], iteration_bounds = array<i64: 2>, scalar_prefetch = 0 : i64, scratch_operands = 4 : i64, tpu.core_type = #tpu.core_type<tc>, window_params = [{transform_indices = @transform_0, window_bounds = array<i64: 1, 2, 2, 32>}, {transform_indices = @transform_1, window_bounds = array<i64: 1, 4, 4, 16>}, {pipeline_mode = #tpu.pipeline_mode<synchronous>, transform_indices = @transform_2, window_bounds = array<i64: 288, 8>}, {pipeline_mode = #tpu.pipeline_mode<synchronous>, transform_indices = @transform_3, window_bounds = array<i64: 1, 8>}, {pipeline_mode = #tpu.pipeline_mode<synchronous>, transform_indices = @transform_4, window_bounds = array<i64: 1, 8>}, {pipeline_mode = #tpu.pipeline_mode<synchronous>, transform_indices = @transform_5, window_bounds = array<i64: 1, 8>}, {pipeline_mode = #tpu.pipeline_mode<synchronous>, transform_indices = @transform_6, window_bounds = array<i64: 1, 1>}, {pipeline_mode = #tpu.pipeline_mode<synchronous>, transform_indices = @transform_7, window_bounds = array<i64: 144, 4>}, {pipeline_mode = #tpu.pipeline_mode<synchronous>, transform_indices = @transform_8, window_bounds = array<i64: 1, 4>}, {pipeline_mode = #tpu.pipeline_mode<synchronous>, transform_indices = @transform_9, window_bounds = array<i64: 1, 4>}, {pipeline_mode = #tpu.pipeline_mode<synchronous>, transform_indices = @transform_10, window_bounds = array<i64: 1, 4>}, {pipeline_mode = #tpu.pipeline_mode<synchronous>, transform_indices = @transform_11, window_bounds = array<i64: 1, 1>}, {transform_indices = @transform_12, window_bounds = array<i64: 1, 2, 2>}, {transform_indices = @transform_13, window_bounds = array<i64: 1, 4, 4>}]} {
    %cst = arith.constant 0.000000e+00 : f32
    %0 = vector.broadcast %cst : f32 to vector<1x4x32xf32>
    %c0 = arith.constant 0 : index
    %c0_0 = arith.constant 0 : index
    %c0_1 = arith.constant 0 : index
    %1 = vector.load %arg15[%c0, %c0_0, %c0_1] : memref<4x4x32xf32, #tpu.memory_space<vmem>>, vector<1x4x32xf32>
    tpu.vector_store %arg15[%c0, %c0_0, %c0_1], %0 {strides = array<i32>} : memref<4x4x32xf32, #tpu.memory_space<vmem>>, vector<1x4x32xf32>,
    %cst_2 = arith.constant 0.000000e+00 : f32
    %2 = vector.broadcast %cst_2 : f32 to vector<1x4x32xf32>
    %c3 = arith.constant 3 : index
    %c0_3 = arith.constant 0 : index
    %c0_4 = arith.constant 0 : index
    %3 = vector.load %arg15[%c3, %c0_3, %c0_4] : memref<4x4x32xf32, #tpu.memory_space<vmem>>, vector<1x4x32xf32>
    tpu.vector_store %arg15[%c3, %c0_3, %c0_4], %2 {strides = array<i32>} : memref<4x4x32xf32, #tpu.memory_space<vmem>>, vector<1x4x32xf32>,
    %cst_5 = arith.constant 0.000000e+00 : f32
    %4 = vector.broadcast %cst_5 : f32 to vector<4x1x32xf32>
    %c0_6 = arith.constant 0 : index
    %c0_7 = arith.constant 0 : index
    %c0_8 = arith.constant 0 : index
    %5 = vector.load %arg15[%c0_6, %c0_7, %c0_8] : memref<4x4x32xf32, #tpu.memory_space<vmem>>, vector<4x1x32xf32>
    tpu.vector_store %arg15[%c0_6, %c0_7, %c0_8], %4 {strides = array<i32>} : memref<4x4x32xf32, #tpu.memory_space<vmem>>, vector<4x1x32xf32>,
    %cst_9 = arith.constant 0.000000e+00 : f32
    %6 = vector.broadcast %cst_9 : f32 to vector<4x1x32xf32>
    %c0_10 = arith.constant 0 : index
    %c3_11 = arith.constant 3 : index
    %c0_12 = arith.constant 0 : index
    %7 = vector.load %arg15[%c0_10, %c3_11, %c0_12] : memref<4x4x32xf32, #tpu.memory_space<vmem>>, vector<4x1x32xf32>
    tpu.vector_store %arg15[%c0_10, %c3_11, %c0_12], %6 {strides = array<i32>} : memref<4x4x32xf32, #tpu.memory_space<vmem>>, vector<4x1x32xf32>,
    %c0_13 = arith.constant 0 : index
    %c0_14 = arith.constant 0 : index
    %c0_15 = arith.constant 0 : index
    %c0_16 = arith.constant 0 : index
    %8 = vector.load %arg1[%c0_13, %c0_14, %c0_15, %c0_16] : memref<1x2x2x32xbf16, #tpu.memory_space<vmem>>, vector<1x2x2x32xbf16>
    %9 = vector.shape_cast %8 : vector<1x2x2x32xbf16> to vector<2x2x32xbf16>
    %10 = arith.extf %9 : vector<2x2x32xbf16> to vector<2x2x32xf32>
    %c1 = arith.constant 1 : index
    %c1_17 = arith.constant 1 : index
    %c0_18 = arith.constant 0 : index
    %11 = vector.load %arg15[%c1, %c1_17, %c0_18] : memref<4x4x32xf32, #tpu.memory_space<vmem>>, vector<2x2x32xf32>
    tpu.vector_store %arg15[%c1, %c1_17, %c0_18], %10 {strides = array<i32>} : memref<4x4x32xf32, #tpu.memory_space<vmem>>, vector<2x2x32xf32>,
    %c0_19 = arith.constant 0 : index
    %c0_20 = arith.constant 0 : index
    %c0_21 = arith.constant 0 : index
    %12 = vector.load %arg15[%c0_19, %c0_20, %c0_21] : memref<4x4x32xf32, #tpu.memory_space<vmem>>, vector<4x4x32xf32>
    %13 = vector.extract_strided_slice %12 {offsets = [0, 0, 0], sizes = [2, 2, 32], strides = [1, 1, 1]} : vector<4x4x32xf32> to vector<2x2x32xf32>
    %14 = vector.shape_cast %13 : vector<2x2x32xf32> to vector<4x32xf32>
    %15 = arith.truncf %14 : vector<4x32xf32> to vector<4x32xbf16>
    %c0_22 = arith.constant 0 : index
    %c0_23 = arith.constant 0 : index
    %16 = vector.load %arg16[%c0_22, %c0_23] : memref<4x288xbf16, #tpu.memory_space<vmem>>, vector<4x32xbf16>
    tpu.vector_store %arg16[%c0_22, %c0_23], %15 {strides = array<i32>} : memref<4x288xbf16, #tpu.memory_space<vmem>>, vector<4x32xbf16>,
    %17 = vector.extract_strided_slice %12 {offsets = [0, 1, 0], sizes = [2, 2, 32], strides = [1, 1, 1]} : vector<4x4x32xf32> to vector<2x2x32xf32>
    %18 = vector.shape_cast %17 : vector<2x2x32xf32> to vector<4x32xf32>
    %19 = arith.truncf %18 : vector<4x32xf32> to vector<4x32xbf16>
    %c0_24 = arith.constant 0 : index
    %c32 = arith.constant 32 : index
    %20 = vector.load %arg16[%c0_24, %c32] : memref<4x288xbf16, #tpu.memory_space<vmem>>, vector<4x32xbf16>
    tpu.vector_store %arg16[%c0_24, %c32], %19 {strides = array<i32>} : memref<4x288xbf16, #tpu.memory_space<vmem>>, vector<4x32xbf16>,
    %21 = vector.extract_strided_slice %12 {offsets = [0, 2, 0], sizes = [2, 2, 32], strides = [1, 1, 1]} : vector<4x4x32xf32> to vector<2x2x32xf32>
    %22 = vector.shape_cast %21 : vector<2x2x32xf32> to vector<4x32xf32>
    %23 = arith.truncf %22 : vector<4x32xf32> to vector<4x32xbf16>
    %c0_25 = arith.constant 0 : index
    %c64 = arith.constant 64 : index
    %24 = vector.load %arg16[%c0_25, %c64] : memref<4x288xbf16, #tpu.memory_space<vmem>>, vector<4x32xbf16>
    tpu.vector_store %arg16[%c0_25, %c64], %23 {strides = array<i32>} : memref<4x288xbf16, #tpu.memory_space<vmem>>, vector<4x32xbf16>,
    %25 = vector.extract_strided_slice %12 {offsets = [1, 0, 0], sizes = [2, 2, 32], strides = [1, 1, 1]} : vector<4x4x32xf32> to vector<2x2x32xf32>
    %26 = vector.shape_cast %25 : vector<2x2x32xf32> to vector<4x32xf32>
    %27 = arith.truncf %26 : vector<4x32xf32> to vector<4x32xbf16>
    %c0_26 = arith.constant 0 : index
    %c96 = arith.constant 96 : index
    %28 = vector.load %arg16[%c0_26, %c96] : memref<4x288xbf16, #tpu.memory_space<vmem>>, vector<4x32xbf16>
    tpu.vector_store %arg16[%c0_26, %c96], %27 {strides = array<i32>} : memref<4x288xbf16, #tpu.memory_space<vmem>>, vector<4x32xbf16>,
    %29 = vector.extract_strided_slice %12 {offsets = [1, 1, 0], sizes = [2, 2, 32], strides = [1, 1, 1]} : vector<4x4x32xf32> to vector<2x2x32xf32>
    %30 = vector.shape_cast %29 : vector<2x2x32xf32> to vector<4x32xf32>
    %31 = arith.truncf %30 : vector<4x32xf32> to vector<4x32xbf16>
    %c0_27 = arith.constant 0 : index
    %c128 = arith.constant 128 : index
    %32 = vector.load %arg16[%c0_27, %c128] : memref<4x288xbf16, #tpu.memory_space<vmem>>, vector<4x32xbf16>
    tpu.vector_store %arg16[%c0_27, %c128], %31 {strides = array<i32>} : memref<4x288xbf16, #tpu.memory_space<vmem>>, vector<4x32xbf16>,
    %33 = vector.extract_strided_slice %12 {offsets = [1, 2, 0], sizes = [2, 2, 32], strides = [1, 1, 1]} : vector<4x4x32xf32> to vector<2x2x32xf32>
    %34 = vector.shape_cast %33 : vector<2x2x32xf32> to vector<4x32xf32>
    %35 = arith.truncf %34 : vector<4x32xf32> to vector<4x32xbf16>
    %c0_28 = arith.constant 0 : index
    %c160 = arith.constant 160 : index
    %36 = vector.load %arg16[%c0_28, %c160] : memref<4x288xbf16, #tpu.memory_space<vmem>>, vector<4x32xbf16>
    tpu.vector_store %arg16[%c0_28, %c160], %35 {strides = array<i32>} : memref<4x288xbf16, #tpu.memory_space<vmem>>, vector<4x32xbf16>,
    %37 = vector.extract_strided_slice %12 {offsets = [2, 0, 0], sizes = [2, 2, 32], strides = [1, 1, 1]} : vector<4x4x32xf32> to vector<2x2x32xf32>
    %38 = vector.shape_cast %37 : vector<2x2x32xf32> to vector<4x32xf32>
    %39 = arith.truncf %38 : vector<4x32xf32> to vector<4x32xbf16>
    %c0_29 = arith.constant 0 : index
    %c192 = arith.constant 192 : index
    %40 = vector.load %arg16[%c0_29, %c192] : memref<4x288xbf16, #tpu.memory_space<vmem>>, vector<4x32xbf16>
    tpu.vector_store %arg16[%c0_29, %c192], %39 {strides = array<i32>} : memref<4x288xbf16, #tpu.memory_space<vmem>>, vector<4x32xbf16>,
    %41 = vector.extract_strided_slice %12 {offsets = [2, 1, 0], sizes = [2, 2, 32], strides = [1, 1, 1]} : vector<4x4x32xf32> to vector<2x2x32xf32>
    %42 = vector.shape_cast %41 : vector<2x2x32xf32> to vector<4x32xf32>
    %43 = arith.truncf %42 : vector<4x32xf32> to vector<4x32xbf16>
    %c0_30 = arith.constant 0 : index
    %c224 = arith.constant 224 : index
    %44 = vector.load %arg16[%c0_30, %c224] : memref<4x288xbf16, #tpu.memory_space<vmem>>, vector<4x32xbf16>
    tpu.vector_store %arg16[%c0_30, %c224], %43 {strides = array<i32>} : memref<4x288xbf16, #tpu.memory_space<vmem>>, vector<4x32xbf16>,
    %45 = vector.extract_strided_slice %12 {offsets = [2, 2, 0], sizes = [2, 2, 32], strides = [1, 1, 1]} : vector<4x4x32xf32> to vector<2x2x32xf32>
    %46 = vector.shape_cast %45 : vector<2x2x32xf32> to vector<4x32xf32>
    %47 = arith.truncf %46 : vector<4x32xf32> to vector<4x32xbf16>
    %c0_31 = arith.constant 0 : index
    %c256 = arith.constant 256 : index
    %48 = vector.load %arg16[%c0_31, %c256] : memref<4x288xbf16, #tpu.memory_space<vmem>>, vector<4x32xbf16>
    tpu.vector_store %arg16[%c0_31, %c256], %47 {strides = array<i32>} : memref<4x288xbf16, #tpu.memory_space<vmem>>, vector<4x32xbf16>,
    %c0_32 = arith.constant 0 : index
    %c0_33 = arith.constant 0 : index
    %49 = vector.load %arg16[%c0_32, %c0_33] : memref<4x288xbf16, #tpu.memory_space<vmem>>, vector<4x288xbf16>
    %c0_34 = arith.constant 0 : index
    %c0_35 = arith.constant 0 : index
    %50 = vector.load %arg3[%c0_34, %c0_35] : memref<288x8xbf16, #tpu.memory_space<vmem>>, vector<288x8xbf16>
    %cst_36 = arith.constant dense<0.000000e+00> : vector<4x8xf32>
    %51 = tpu.matmul %49, %50, %cst_36 {dimension_numbers = #tpu.dot_dimension_numbers<[1], [0], [0], [1], [0, 0, 1, 1], [], []>} : vector<4x288xbf16>, vector<288x8xbf16>, vector<4x8xf32> -> vector<4x8xf32>
    %c0_37 = arith.constant 0 : index
    %c0_38 = arith.constant 0 : index
    %52 = vector.load %arg4[%c0_37, %c0_38] : memref<1x8xf32, #tpu.memory_space<vmem>>, vector<1x8xf32>
    %53 = vector.broadcast %52 : vector<1x8xf32> to vector<4x8xf32>
    %54 = arith.mulf %51, %53 : vector<4x8xf32>
    %c0_39 = arith.constant 0 : index
    %c0_40 = arith.constant 0 : index
    %55 = vector.load %arg5[%c0_39, %c0_40] : memref<1x8xf32, #tpu.memory_space<vmem>>, vector<1x8xf32>
    %56 = vector.broadcast %55 : vector<1x8xf32> to vector<4x8xf32>
    %57 = arith.addf %54, %56 : vector<4x8xf32>
    %cst_41 = arith.constant 0.000000e+00 : f32
    %58 = vector.broadcast %cst_41 : f32 to vector<4x8xf32>
    %59 = arith.maximumf %57, %58 : vector<4x8xf32>
    %c0_42 = arith.constant 0 : index
    %c0_43 = arith.constant 0 : index
    %60 = vector.load %arg6[%c0_42, %c0_43] : memref<1x8xf32, #tpu.memory_space<vmem>>, vector<1x8xf32>
    %61 = vector.broadcast %60 : vector<1x8xf32> to vector<4x8xf32>
    %62 = arith.mulf %59, %61 : vector<4x8xf32>
    %cst_44 = arith.constant dense<0.000000e+00> : vector<4xf32>
    %63 = vector.multi_reduction <add>, %62, %cst_44 [1] : vector<4x8xf32> to vector<4xf32>
    %64 = vector.shape_cast %63 : vector<4xf32> to vector<4x1xf32>
    %c0_45 = arith.constant 0 : index
    %c0_46 = arith.constant 0 : index
    %65 = vector.load %arg7[%c0_45, %c0_46] : memref<1x1xf32, #tpu.memory_space<vmem>>, vector<1x1xf32>
    %66 = vector.broadcast %65 : vector<1x1xf32> to vector<4x1xf32>
    %67 = arith.addf %64, %66 : vector<4x1xf32>
    %68 = vector.shape_cast %67 : vector<4x1xf32> to vector<2x2x1xf32>
    %69 = vector.shape_cast %68 : vector<2x2x1xf32> to vector<2x2xf32>
    %70 = arith.truncf %69 : vector<2x2xf32> to vector<2x2xbf16>
    %c0_47 = arith.constant 0 : index
    %c0_48 = arith.constant 0 : index
    %c0_49 = arith.constant 0 : index
    %71 = vector.load %arg13[%c0_47, %c0_48, %c0_49] : memref<1x2x2xbf16, #tpu.memory_space<vmem>>, vector<1x2x2xbf16>
    %72 = vector.shape_cast %71 : vector<1x2x2xbf16> to vector<2x2xbf16>
    %73 = vector.shape_cast %70 : vector<2x2xbf16> to vector<1x2x2xbf16>
    tpu.vector_store %arg13[%c0_47, %c0_48, %c0_49], %73 {strides = array<i32>} : memref<1x2x2xbf16, #tpu.memory_space<vmem>>, vector<1x2x2xbf16>,
    %cst_50 = arith.constant 0.000000e+00 : f32
    %74 = vector.broadcast %cst_50 : f32 to vector<1x6x16xf32>
    %c0_51 = arith.constant 0 : index
    %c0_52 = arith.constant 0 : index
    %c0_53 = arith.constant 0 : index
    %75 = vector.load %arg17[%c0_51, %c0_52, %c0_53] : memref<6x6x16xf32, #tpu.memory_space<vmem>>, vector<1x6x16xf32>
    tpu.vector_store %arg17[%c0_51, %c0_52, %c0_53], %74 {strides = array<i32>} : memref<6x6x16xf32, #tpu.memory_space<vmem>>, vector<1x6x16xf32>,
    %cst_54 = arith.constant 0.000000e+00 : f32
    %76 = vector.broadcast %cst_54 : f32 to vector<1x6x16xf32>
    %c5 = arith.constant 5 : index
    %c0_55 = arith.constant 0 : index
    %c0_56 = arith.constant 0 : index
    %77 = vector.load %arg17[%c5, %c0_55, %c0_56] : memref<6x6x16xf32, #tpu.memory_space<vmem>>, vector<1x6x16xf32>
    tpu.vector_store %arg17[%c5, %c0_55, %c0_56], %76 {strides = array<i32>} : memref<6x6x16xf32, #tpu.memory_space<vmem>>, vector<1x6x16xf32>,
    %cst_57 = arith.constant 0.000000e+00 : f32
    %78 = vector.broadcast %cst_57 : f32 to vector<6x1x16xf32>
    %c0_58 = arith.constant 0 : index
    %c0_59 = arith.constant 0 : index
    %c0_60 = arith.constant 0 : index
    %79 = vector.load %arg17[%c0_58, %c0_59, %c0_60] : memref<6x6x16xf32, #tpu.memory_space<vmem>>, vector<6x1x16xf32>
    tpu.vector_store %arg17[%c0_58, %c0_59, %c0_60], %78 {strides = array<i32>} : memref<6x6x16xf32, #tpu.memory_space<vmem>>, vector<6x1x16xf32>,
    %cst_61 = arith.constant 0.000000e+00 : f32
    %80 = vector.broadcast %cst_61 : f32 to vector<6x1x16xf32>
    %c0_62 = arith.constant 0 : index
    %c5_63 = arith.constant 5 : index
    %c0_64 = arith.constant 0 : index
    %81 = vector.load %arg17[%c0_62, %c5_63, %c0_64] : memref<6x6x16xf32, #tpu.memory_space<vmem>>, vector<6x1x16xf32>
    tpu.vector_store %arg17[%c0_62, %c5_63, %c0_64], %80 {strides = array<i32>} : memref<6x6x16xf32, #tpu.memory_space<vmem>>, vector<6x1x16xf32>,
    %c0_65 = arith.constant 0 : index
    %c0_66 = arith.constant 0 : index
    %c0_67 = arith.constant 0 : index
    %c0_68 = arith.constant 0 : index
    %82 = vector.load %arg2[%c0_65, %c0_66, %c0_67, %c0_68] : memref<1x4x4x16xbf16, #tpu.memory_space<vmem>>, vector<1x4x4x16xbf16>
    %83 = vector.shape_cast %82 : vector<1x4x4x16xbf16> to vector<4x4x16xbf16>
    %84 = arith.extf %83 : vector<4x4x16xbf16> to vector<4x4x16xf32>
    %c1_69 = arith.constant 1 : index
    %c1_70 = arith.constant 1 : index
    %c0_71 = arith.constant 0 : index
    %85 = vector.load %arg17[%c1_69, %c1_70, %c0_71] : memref<6x6x16xf32, #tpu.memory_space<vmem>>, vector<4x4x16xf32>
    tpu.vector_store %arg17[%c1_69, %c1_70, %c0_71], %84 {strides = array<i32>} : memref<6x6x16xf32, #tpu.memory_space<vmem>>, vector<4x4x16xf32>,
    %c0_72 = arith.constant 0 : index
    %c0_73 = arith.constant 0 : index
    %c0_74 = arith.constant 0 : index
    %86 = vector.load %arg17[%c0_72, %c0_73, %c0_74] : memref<6x6x16xf32, #tpu.memory_space<vmem>>, vector<6x6x16xf32>
    %87 = vector.extract_strided_slice %86 {offsets = [0, 0, 0], sizes = [4, 4, 16], strides = [1, 1, 1]} : vector<6x6x16xf32> to vector<4x4x16xf32>
    %88 = vector.shape_cast %87 : vector<4x4x16xf32> to vector<16x16xf32>
    %89 = arith.truncf %88 : vector<16x16xf32> to vector<16x16xbf16>
    %c0_75 = arith.constant 0 : index
    %c0_76 = arith.constant 0 : index
    %90 = vector.load %arg18[%c0_75, %c0_76] : memref<16x144xbf16, #tpu.memory_space<vmem>>, vector<16x16xbf16>
    tpu.vector_store %arg18[%c0_75, %c0_76], %89 {strides = array<i32>} : memref<16x144xbf16, #tpu.memory_space<vmem>>, vector<16x16xbf16>,
    %91 = vector.extract_strided_slice %86 {offsets = [0, 1, 0], sizes = [4, 4, 16], strides = [1, 1, 1]} : vector<6x6x16xf32> to vector<4x4x16xf32>
    %92 = vector.shape_cast %91 : vector<4x4x16xf32> to vector<16x16xf32>
    %93 = arith.truncf %92 : vector<16x16xf32> to vector<16x16xbf16>
    %c0_77 = arith.constant 0 : index
    %c16 = arith.constant 16 : index
    %94 = vector.load %arg18[%c0_77, %c16] : memref<16x144xbf16, #tpu.memory_space<vmem>>, vector<16x16xbf16>
    tpu.vector_store %arg18[%c0_77, %c16], %93 {strides = array<i32>} : memref<16x144xbf16, #tpu.memory_space<vmem>>, vector<16x16xbf16>,
    %95 = vector.extract_strided_slice %86 {offsets = [0, 2, 0], sizes = [4, 4, 16], strides = [1, 1, 1]} : vector<6x6x16xf32> to vector<4x4x16xf32>
    %96 = vector.shape_cast %95 : vector<4x4x16xf32> to vector<16x16xf32>
    %97 = arith.truncf %96 : vector<16x16xf32> to vector<16x16xbf16>
    %c0_78 = arith.constant 0 : index
    %c32_79 = arith.constant 32 : index
    %98 = vector.load %arg18[%c0_78, %c32_79] : memref<16x144xbf16, #tpu.memory_space<vmem>>, vector<16x16xbf16>
    tpu.vector_store %arg18[%c0_78, %c32_79], %97 {strides = array<i32>} : memref<16x144xbf16, #tpu.memory_space<vmem>>, vector<16x16xbf16>,
    %99 = vector.extract_strided_slice %86 {offsets = [1, 0, 0], sizes = [4, 4, 16], strides = [1, 1, 1]} : vector<6x6x16xf32> to vector<4x4x16xf32>
    %100 = vector.shape_cast %99 : vector<4x4x16xf32> to vector<16x16xf32>
    %101 = arith.truncf %100 : vector<16x16xf32> to vector<16x16xbf16>
    %c0_80 = arith.constant 0 : index
    %c48 = arith.constant 48 : index
    %102 = vector.load %arg18[%c0_80, %c48] : memref<16x144xbf16, #tpu.memory_space<vmem>>, vector<16x16xbf16>
    tpu.vector_store %arg18[%c0_80, %c48], %101 {strides = array<i32>} : memref<16x144xbf16, #tpu.memory_space<vmem>>, vector<16x16xbf16>,
    %103 = vector.extract_strided_slice %86 {offsets = [1, 1, 0], sizes = [4, 4, 16], strides = [1, 1, 1]} : vector<6x6x16xf32> to vector<4x4x16xf32>
    %104 = vector.shape_cast %103 : vector<4x4x16xf32> to vector<16x16xf32>
    %105 = arith.truncf %104 : vector<16x16xf32> to vector<16x16xbf16>
    %c0_81 = arith.constant 0 : index
    %c64_82 = arith.constant 64 : index
    %106 = vector.load %arg18[%c0_81, %c64_82] : memref<16x144xbf16, #tpu.memory_space<vmem>>, vector<16x16xbf16>
    tpu.vector_store %arg18[%c0_81, %c64_82], %105 {strides = array<i32>} : memref<16x144xbf16, #tpu.memory_space<vmem>>, vector<16x16xbf16>,
    %107 = vector.extract_strided_slice %86 {offsets = [1, 2, 0], sizes = [4, 4, 16], strides = [1, 1, 1]} : vector<6x6x16xf32> to vector<4x4x16xf32>
    %108 = vector.shape_cast %107 : vector<4x4x16xf32> to vector<16x16xf32>
    %109 = arith.truncf %108 : vector<16x16xf32> to vector<16x16xbf16>
    %c0_83 = arith.constant 0 : index
    %c80 = arith.constant 80 : index
    %110 = vector.load %arg18[%c0_83, %c80] : memref<16x144xbf16, #tpu.memory_space<vmem>>, vector<16x16xbf16>
    tpu.vector_store %arg18[%c0_83, %c80], %109 {strides = array<i32>} : memref<16x144xbf16, #tpu.memory_space<vmem>>, vector<16x16xbf16>,
    %111 = vector.extract_strided_slice %86 {offsets = [2, 0, 0], sizes = [4, 4, 16], strides = [1, 1, 1]} : vector<6x6x16xf32> to vector<4x4x16xf32>
    %112 = vector.shape_cast %111 : vector<4x4x16xf32> to vector<16x16xf32>
    %113 = arith.truncf %112 : vector<16x16xf32> to vector<16x16xbf16>
    %c0_84 = arith.constant 0 : index
    %c96_85 = arith.constant 96 : index
    %114 = vector.load %arg18[%c0_84, %c96_85] : memref<16x144xbf16, #tpu.memory_space<vmem>>, vector<16x16xbf16>
    tpu.vector_store %arg18[%c0_84, %c96_85], %113 {strides = array<i32>} : memref<16x144xbf16, #tpu.memory_space<vmem>>, vector<16x16xbf16>,
    %115 = vector.extract_strided_slice %86 {offsets = [2, 1, 0], sizes = [4, 4, 16], strides = [1, 1, 1]} : vector<6x6x16xf32> to vector<4x4x16xf32>
    %116 = vector.shape_cast %115 : vector<4x4x16xf32> to vector<16x16xf32>
    %117 = arith.truncf %116 : vector<16x16xf32> to vector<16x16xbf16>
    %c0_86 = arith.constant 0 : index
    %c112 = arith.constant 112 : index
    %118 = vector.load %arg18[%c0_86, %c112] : memref<16x144xbf16, #tpu.memory_space<vmem>>, vector<16x16xbf16>
    tpu.vector_store %arg18[%c0_86, %c112], %117 {strides = array<i32>} : memref<16x144xbf16, #tpu.memory_space<vmem>>, vector<16x16xbf16>,
    %119 = vector.extract_strided_slice %86 {offsets = [2, 2, 0], sizes = [4, 4, 16], strides = [1, 1, 1]} : vector<6x6x16xf32> to vector<4x4x16xf32>
    %120 = vector.shape_cast %119 : vector<4x4x16xf32> to vector<16x16xf32>
    %121 = arith.truncf %120 : vector<16x16xf32> to vector<16x16xbf16>
    %c0_87 = arith.constant 0 : index
    %c128_88 = arith.constant 128 : index
    %122 = vector.load %arg18[%c0_87, %c128_88] : memref<16x144xbf16, #tpu.memory_space<vmem>>, vector<16x16xbf16>
    tpu.vector_store %arg18[%c0_87, %c128_88], %121 {strides = array<i32>} : memref<16x144xbf16, #tpu.memory_space<vmem>>, vector<16x16xbf16>,
    %c0_89 = arith.constant 0 : index
    %c0_90 = arith.constant 0 : index
    %123 = vector.load %arg18[%c0_89, %c0_90] : memref<16x144xbf16, #tpu.memory_space<vmem>>, vector<16x144xbf16>
    %c0_91 = arith.constant 0 : index
    %c0_92 = arith.constant 0 : index
    %124 = vector.load %arg8[%c0_91, %c0_92] : memref<144x4xbf16, #tpu.memory_space<vmem>>, vector<144x4xbf16>
    %cst_93 = arith.constant dense<0.000000e+00> : vector<16x4xf32>
    %125 = tpu.matmul %123, %124, %cst_93 {dimension_numbers = #tpu.dot_dimension_numbers<[1], [0], [0], [1], [0, 0, 1, 1], [], []>} : vector<16x144xbf16>, vector<144x4xbf16>, vector<16x4xf32> -> vector<16x4xf32>
    %c0_94 = arith.constant 0 : index
    %c0_95 = arith.constant 0 : index
    %126 = vector.load %arg9[%c0_94, %c0_95] : memref<1x4xf32, #tpu.memory_space<vmem>>, vector<1x4xf32>
    %127 = vector.broadcast %126 : vector<1x4xf32> to vector<16x4xf32>
    %128 = arith.mulf %125, %127 : vector<16x4xf32>
    %c0_96 = arith.constant 0 : index
    %c0_97 = arith.constant 0 : index
    %129 = vector.load %arg10[%c0_96, %c0_97] : memref<1x4xf32, #tpu.memory_space<vmem>>, vector<1x4xf32>
    %130 = vector.broadcast %129 : vector<1x4xf32> to vector<16x4xf32>
    %131 = arith.addf %128, %130 : vector<16x4xf32>
    %cst_98 = arith.constant 0.000000e+00 : f32
    %132 = vector.broadcast %cst_98 : f32 to vector<16x4xf32>
    %133 = arith.maximumf %131, %132 : vector<16x4xf32>
    %c0_99 = arith.constant 0 : index
    %c0_100 = arith.constant 0 : index
    %134 = vector.load %arg11[%c0_99, %c0_100] : memref<1x4xf32, #tpu.memory_space<vmem>>, vector<1x4xf32>
    %135 = vector.broadcast %134 : vector<1x4xf32> to vector<16x4xf32>
    %136 = arith.mulf %133, %135 : vector<16x4xf32>
    %cst_101 = arith.constant dense<0.000000e+00> : vector<16xf32>
    %137 = vector.multi_reduction <add>, %136, %cst_101 [1] : vector<16x4xf32> to vector<16xf32>
    %138 = vector.shape_cast %137 : vector<16xf32> to vector<16x1xf32>
    %c0_102 = arith.constant 0 : index
    %c0_103 = arith.constant 0 : index
    %139 = vector.load %arg12[%c0_102, %c0_103] : memref<1x1xf32, #tpu.memory_space<vmem>>, vector<1x1xf32>
    %140 = vector.broadcast %139 : vector<1x1xf32> to vector<16x1xf32>
    %141 = arith.addf %138, %140 : vector<16x1xf32>
    %142 = vector.shape_cast %141 : vector<16x1xf32> to vector<4x4x1xf32>
    %143 = vector.shape_cast %142 : vector<4x4x1xf32> to vector<4x4xf32>
    %144 = arith.truncf %143 : vector<4x4xf32> to vector<4x4xbf16>
    %c0_104 = arith.constant 0 : index
    %c0_105 = arith.constant 0 : index
    %c0_106 = arith.constant 0 : index
    %145 = vector.load %arg14[%c0_104, %c0_105, %c0_106] : memref<1x4x4xbf16, #tpu.memory_space<vmem>>, vector<1x4x4xbf16>
    %146 = vector.shape_cast %145 : vector<1x4x4xbf16> to vector<4x4xbf16>
    %147 = vector.shape_cast %144 : vector<4x4xbf16> to vector<1x4x4xbf16>
    tpu.vector_store %arg14[%c0_104, %c0_105, %c0_106], %147 {strides = array<i32>} : memref<1x4x4xbf16, #tpu.memory_space<vmem>>, vector<1x4x4xbf16>,
    return
  }
  func.func @transform_0(%arg0: i32) -> (i32, i32, i32, i32) {
    %c0_i32 = arith.constant 0 : i32
    %c0_i32_0 = arith.constant 0 : i32
    %c0_i32_1 = arith.constant 0 : i32
    %c0_i32_2 = arith.constant 0 : i32
    return %arg0, %c0_i32, %c0_i32_0, %c0_i32_1 : i32, i32, i32, i32
  }
  func.func @transform_1(%arg0: i32) -> (i32, i32, i32, i32) {
    %c0_i32 = arith.constant 0 : i32
    %c0_i32_0 = arith.constant 0 : i32
    %c0_i32_1 = arith.constant 0 : i32
    %c0_i32_2 = arith.constant 0 : i32
    return %arg0, %c0_i32, %c0_i32_0, %c0_i32_1 : i32, i32, i32, i32
  }
  func.func @transform_2(%arg0: i32) -> (i32, i32) {
    %c0_i32 = arith.constant 0 : i32
    %c0_i32_0 = arith.constant 0 : i32
    %c0_i32_1 = arith.constant 0 : i32
    return %c0_i32, %c0_i32_0 : i32, i32
  }
  func.func @transform_3(%arg0: i32) -> (i32, i32) {
    %c0_i32 = arith.constant 0 : i32
    %c0_i32_0 = arith.constant 0 : i32
    %c0_i32_1 = arith.constant 0 : i32
    return %c0_i32, %c0_i32_0 : i32, i32
  }
  func.func @transform_4(%arg0: i32) -> (i32, i32) {
    %c0_i32 = arith.constant 0 : i32
    %c0_i32_0 = arith.constant 0 : i32
    %c0_i32_1 = arith.constant 0 : i32
    return %c0_i32, %c0_i32_0 : i32, i32
  }
  func.func @transform_5(%arg0: i32) -> (i32, i32) {
    %c0_i32 = arith.constant 0 : i32
    %c0_i32_0 = arith.constant 0 : i32
    %c0_i32_1 = arith.constant 0 : i32
    return %c0_i32, %c0_i32_0 : i32, i32
  }
  func.func @transform_6(%arg0: i32) -> (i32, i32) {
    %c0_i32 = arith.constant 0 : i32
    %c0_i32_0 = arith.constant 0 : i32
    %c0_i32_1 = arith.constant 0 : i32
    return %c0_i32, %c0_i32_0 : i32, i32
  }
  func.func @transform_7(%arg0: i32) -> (i32, i32) {
    %c0_i32 = arith.constant 0 : i32
    %c0_i32_0 = arith.constant 0 : i32
    %c0_i32_1 = arith.constant 0 : i32
    return %c0_i32, %c0_i32_0 : i32, i32
  }
  func.func @transform_8(%arg0: i32) -> (i32, i32) {
    %c0_i32 = arith.constant 0 : i32
    %c0_i32_0 = arith.constant 0 : i32
    %c0_i32_1 = arith.constant 0 : i32
    return %c0_i32, %c0_i32_0 : i32, i32
  }
  func.func @transform_9(%arg0: i32) -> (i32, i32) {
    %c0_i32 = arith.constant 0 : i32
    %c0_i32_0 = arith.constant 0 : i32
    %c0_i32_1 = arith.constant 0 : i32
    return %c0_i32, %c0_i32_0 : i32, i32
  }
  func.func @transform_10(%arg0: i32) -> (i32, i32) {
    %c0_i32 = arith.constant 0 : i32
    %c0_i32_0 = arith.constant 0 : i32
    %c0_i32_1 = arith.constant 0 : i32
    return %c0_i32, %c0_i32_0 : i32, i32
  }
  func.func @transform_11(%arg0: i32) -> (i32, i32) {
    %c0_i32 = arith.constant 0 : i32
    %c0_i32_0 = arith.constant 0 : i32
    %c0_i32_1 = arith.constant 0 : i32
    return %c0_i32, %c0_i32_0 : i32, i32
  }
  func.func @transform_12(%arg0: i32) -> (i32, i32, i32) {
    %c0_i32 = arith.constant 0 : i32
    %c0_i32_0 = arith.constant 0 : i32
    %c0_i32_1 = arith.constant 0 : i32
    return %arg0, %c0_i32, %c0_i32_0 : i32, i32, i32
  }
  func.func @transform_13(%arg0: i32) -> (i32, i32, i32) {
    %c0_i32 = arith.constant 0 : i32
    %c0_i32_0 = arith.constant 0 : i32
    %c0_i32_1 = arith.constant 0 : i32
    return %arg0, %c0_i32, %c0_i32_0 : i32, i32, i32
  }
}

</mosaic_0001>

<llo_original>
// kernel: efficientnet_seg_forward.4
$region0: #{efficientnet_seg_forward.4}
  #allocation0 [shape = 'u32[]', space=smem, size = 0x4, offset = 0x4, fixed_abs, tag = 'smem constant byte address 0x4 - core index']
  #allocation1 [shape = 'u32[144,128]{1,0:T(1,128)}', space=vmem, size = 0x12000, scoped, tag = 'internal scratch']
  %s0 = inlined_call_operand.vmem [shape: f32[2,4,4,3], index: 0, kind: input, shape index: {}]
  %s1 = inlined_call_operand.vmem [shape: f32[3,16], index: 1, kind: input, shape index: {}]
  %s2 = inlined_call_operand.vmem [shape: f32[1,16], index: 2, kind: input, shape index: {}]
  %s3 = inlined_call_operand.vmem [shape: bf16[2,4,4,16], index: 3, kind: output, shape index: {}]
  %s4 = sld [smem:[#allocation0]]
  $region45: #{efficientnet_seg_forward.4} parent=0
    _
  %s6 = ssub.s32 1, %s4
  %s7 = scalar_select 0, %s6, %s4
  loop: start=0, step=1, limit=4
  $region2: #{efficientnet_seg_forward.4} parent=0 // loop_pre_header
    _
  $region3: #{efficientnet_seg_forward.4} parent=0 // loop_header
    %s9 = sphi 0, %s13
    %p10 = scmp.ge.s32.totalorder %s9, 4
    %s19 = sphi 0, %s21
    %s22 = sphi 0, %s19
    %s23 = sphi 0, %s22
    %s39 = sphi 0, %s23
    %s43 = sphi 0, %s43
    %s45 = sphi 0, %s43
    %s46 = sphi 0, %s45
    %s60 = sphi 0, %s46
    %s64 = sphi 0, %s64
    %s66 = sphi 0, %s64
    %s67 = sphi 0, %s66
    %s81 = sphi 0, %s67
    %s87 = sphi 0, %s89
    %s90 = sphi 0, %s87
    %s91 = sphi 0, %s90
    %s107 = sphi 0, %s91
  $region4: #{efficientnet_seg_forward.4} parent=0 // loop_header_branch
    %12 = sbr.rel (%p10) target = $region8
  $region5: #{efficientnet_seg_forward.4} parent=0 // loop_body
    %s14 = ssub.s32 %s9, 1
    %s15 = ssub.s32 %s9, 2
    %s16 = sadd.s32 %s9, 1
    %s17 = ssub.s32 %s9, %s16
    %p18 = scmp.eq.s32.totalorder %s17, 0
    %s20 = sadd.s32 %s19, 1
    %s21 = scalar_select %p18, %s19, %s20
    %p24 = pneg %p18
    %p25 = scmp.eq.s32.totalorder %s9, 1
    %p26 = por %p24, %p25
    %p27 = scmp.ne.s32.totalorder %s19, %s22
    %p28 = scmp.eq.s32.totalorder %s9, 0
    %p29 = por %p27, %p28
    %p30 = scmp.ne.s32.totalorder %s19, %s22
    %p31 = scmp.eq.s32.totalorder %s14, 1
    %p32 = por %p30, %p31
    %p33 = scmp.ne.s32.totalorder %s22, %s23
    %p34 = scmp.eq.s32.totalorder %s14, 0
    %p35 = por %p33, %p34
    %p36 = scmp.ne.s32.totalorder %s22, %s23
    %p37 = scmp.eq.s32.totalorder %s15, 1
    %p38 = por %p36, %p37
    %p40 = scmp.ne.s32.totalorder %s23, %s39
    %p41 = scmp.eq.s32.totalorder %s15, 0
    %p42 = por %p40, %p41
    %s44 = sadd.s32 %s43, 1
    %p47 = scmp.eq.s32.totalorder %s9, 1
    %p48 = scmp.ne.s32.totalorder %s43, %s45
    %p49 = scmp.eq.s32.totalorder %s9, 0
    %p50 = por %p48, %p49
    %p51 = scmp.ne.s32.totalorder %s43, %s45
    %p52 = scmp.eq.s32.totalorder %s14, 1
    %p53 = por %p51, %p52
    %p54 = scmp.ne.s32.totalorder %s45, %s46
    %p55 = scmp.eq.s32.totalorder %s14, 0
    %p56 = por %p54, %p55
    %p57 = scmp.ne.s32.totalorder %s45, %s46
    %p58 = scmp.eq.s32.totalorder %s15, 1
    %p59 = por %p57, %p58
    %p61 = scmp.ne.s32.totalorder %s46, %s60
    %p62 = scmp.eq.s32.totalorder %s15, 0
    %p63 = por %p61, %p62
    %s65 = sadd.s32 %s64, 1
    %p68 = scmp.eq.s32.totalorder %s9, 1
    %p69 = scmp.ne.s32.totalorder %s64, %s66
    %p70 = scmp.eq.s32.totalorder %s9, 0
    %p71 = por %p69, %p70
    %p72 = scmp.ne.s32.totalorder %s64, %s66
    %p73 = scmp.eq.s32.totalorder %s14, 1
    %p74 = por %p72, %p73
    %p75 = scmp.ne.s32.totalorder %s66, %s67
    %p76 = scmp.eq.s32.totalorder %s14, 0
    %p77 = por %p75, %p76
    %p78 = scmp.ne.s32.totalorder %s66, %s67
    %p79 = scmp.eq.s32.totalorder %s15, 1
    %p80 = por %p78, %p79
    %p82 = scmp.ne.s32.totalorder %s67, %s81
    %p83 = scmp.eq.s32.totalorder %s15, 0
    %p84 = por %p82, %p83
    %s85 = ssub.s32 %s9, %s16
    %p86 = scmp.eq.s32.totalorder %s85, 0
    %s88 = sadd.s32 %s87, 1
    %s89 = scalar_select %p86, %s87, %s88
    %p92 = pneg %p86
    %p93 = scmp.eq.s32.totalorder %s9, 1
    %p94 = por %p92, %p93
    %p95 = scmp.ne.s32.totalorder %s87, %s90
    %p96 = scmp.eq.s32.totalorder %s9, 0
    %p97 = por %p95, %p96
    %p98 = scmp.ne.s32.totalorder %s87, %s90
    %p99 = scmp.eq.s32.totalorder %s14, 1
    %p100 = por %p98, %p99
    %p101 = scmp.ne.s32.totalorder %s90, %s91
    %p102 = scmp.eq.s32.totalorder %s14, 0
    %p103 = por %p101, %p102
    %p104 = scmp.ne.s32.totalorder %s90, %s91
    %p105 = scmp.eq.s32.totalorder %s15, 1
    %p106 = por %p104, %p105
    %p108 = scmp.ne.s32.totalorder %s91, %s107
    %p109 = scmp.eq.s32.totalorder %s15, 0
    %p110 = por %p108, %p109
    %p111 = scmp.le.s32.totalorder 1, %s9
    %p112 = scmp.lt.s32.totalorder %s9, 3
    %p113 = pnand %p111, %p112
    %p114 = pneg %p113
    // Predicated region
    $region9: #{efficientnet_seg_forward.4} parent=5 // pred_check
      _
    $region10: #{efficientnet_seg_forward.4} parent=5 // pred_check_branch
      %116 = sbr.rel (%p113) target = $region12
    $region11: #{efficientnet_seg_forward.4} parent=5 // pred_region
      %s117 = ssub.s32 %s9, 1
      // Predicated region
      $region13: #{efficientnet_seg_forward.4} parent=11 // pred_check
        %p118 = pneg %p56
      $region14: #{efficientnet_seg_forward.4} parent=11 // pred_check_branch
        %120 = sbr.rel (%p118) target = $region16
      $region15: #{efficientnet_seg_forward.4} parent=11 // pred_region
        _
      $region16: #{efficientnet_seg_forward.4} parent=11 // pred_fallthru
        _
      // Predicated region
      $region17: #{efficientnet_seg_forward.4} parent=11 // pred_check
        %p121 = pneg %p77
      $region18: #{efficientnet_seg_forward.4} parent=11 // pred_check_branch
        %123 = sbr.rel (%p121) target = $region20
      $region19: #{efficientnet_seg_forward.4} parent=11 // pred_region
        _
      $region20: #{efficientnet_seg_forward.4} parent=11 // pred_fallthru
        _
    $region12: #{efficientnet_seg_forward.4} parent=5 // pred_fallthru
      _
    %p124 = scmp.lt.s32.totalorder %s9, 2
    // Predicated region
    $region21: #{efficientnet_seg_forward.4} parent=5 // pred_check
      %p125 = pneg %p124
    $region22: #{efficientnet_seg_forward.4} parent=5 // pred_check_branch
      %127 = sbr.rel (%p125) target = $region24
    $region23: #{efficientnet_seg_forward.4} parent=5 // pred_region
      // Predicated region
      $region25: #{efficientnet_seg_forward.4} parent=23 // pred_check
        %p128 = pneg %p29
      $region26: #{efficientnet_seg_forward.4} parent=23 // pred_check_branch
        %130 = sbr.rel (%p128) target = $region28
      $region27: #{efficientnet_seg_forward.4} parent=23 // pred_region
        %p131 = scmp.lt.s32.totalorder %s9, 1
        %s132 = scalar_select %p131, %s9, 1
        %s133 = smul.addr %s132, 4
        %s134 = smul.addr %s133, 4
        %s135 = scalar_lea.vmem %s0, %s134
      $region28: #{efficientnet_seg_forward.4} parent=23 // pred_fallthru
        _
    $region24: #{efficientnet_seg_forward.4} parent=5 // pred_fallthru
      _
    %p136 = scmp.le.s32.totalorder 1, %s9
    %p137 = scmp.lt.s32.totalorder %s9, 3
    %p138 = pnand %p136, %p137
    %p139 = pneg %p138
    // Predicated region
    $region29: #{efficientnet_seg_forward.4} parent=5 // pred_check
      _
    $region30: #{efficientnet_seg_forward.4} parent=5 // pred_check_branch
      %141 = sbr.rel (%p138) target = $region32
    $region31: #{efficientnet_seg_forward.4} parent=5 // pred_region
      %s142 = ssub.s32 %s9, 1
      %p143 = scmp.lt.s32.totalorder %s14, 1
      %s144 = scalar_select %p143, %s14, 1
      %s145 = smul.addr %s144, 4
      %s146 = smul.addr %s145, 4
      %s147 = scalar_lea.vmem %s0, %s146
      %p148 = pneg %p35
      %p149 = pneg %p32
      %p150 = pneg %p56
      %p151 = pneg %p53
      %p152 = pneg %p77
      %p153 = pneg %p74
      %p154 = pneg %p103
      %p155 = pneg %p100
      %p156 = scmp.lt.s32.totalorder %s14, 1
      %s157 = scalar_select %p156, %s14, 1
      %s158 = smul.addr %s157, 4
      %s159 = smul.addr %s158, 2
      %s160 = scalar_lea.vmem %s3, %s159
      %p161 = scmp.lt.s32.totalorder %s14, 1
      %s162 = scalar_select %p161, %s14, 1
      %s163 = smul.addr %s162, 4
      %s164 = smul.addr %s163, 4
      %s165 = scalar_lea.vmem %s0, %s164
      %p166 = scmp.lt.s32.totalorder %s14, 1
      %s167 = scalar_select %p166, %s14, 1
      %s168 = smul.addr %s167, 4
      %s169 = smul.addr %s168, 2
      %s170 = scalar_lea.vmem %s3, %s169
      %v171 = vld [vmem:[%s165] sm:$0xf]
      %v172 = vld [vmem:[%s165 + $0x4] sm:$0xf]
      %v173 = vld [vmem:[%s165 + $0x8] sm:$0xf]
      %v174 = vld [vmem:[%s165 + $0xc] sm:$0xf]
      %v175 = vld [vmem:[%s1] sm:$0x1]
      %177 = vset.pattern.permute.xlu0 0
      %178 = vperm.xlu0 %177, %v171
      %v179 = vpop.permute.xlu0 %178
      %v182 = vunpack.c.l.s4 839922192
      %v183 = vunpack.c.0.s8 %v182
      %v184 = vlaneseq
      %v185 = vshrl.u32 %v184, 7
      %v186 = vsub.s32 %v183, %v185
      %v187 = vrot.slane %v179, %v186
      %189 = vset.pattern.permute.xlu0 0
      %190 = vperm.xlu0 %189, %v172
      %v191 = vpop.permute.xlu0 %190
      %v194 = vunpack.c.l.s4 839922192
      %v195 = vunpack.c.0.s8 %v194
      %v196 = vlaneseq
      %v197 = vshrl.u32 %v196, 7
      %v198 = vsub.s32 %v195, %v197
      %v199 = vrot.slane %v191, %v198
      %201 = vset.pattern.permute.xlu0 0
      %202 = vperm.xlu0 %201, %v173
      %v203 = vpop.permute.xlu0 %202
      %v206 = vunpack.c.l.s4 839922192
      %v207 = vunpack.c.0.s8 %v206
      %v208 = vlaneseq
      %v209 = vshrl.u32 %v208, 7
      %v210 = vsub.s32 %v207, %v209
      %v211 = vrot.slane %v203, %v210
      %213 = vset.pattern.permute.xlu0 0
      %214 = vperm.xlu0 %213, %v174
      %v215 = vpop.permute.xlu0 %214
      %v218 = vunpack.c.l.s4 839922192
      %v219 = vunpack.c.0.s8 %v218
      %v220 = vlaneseq
      %v221 = vshrl.u32 %v220, 7
      %v222 = vsub.s32 %v219, %v221
      %v223 = vrot.slane %v215, %v222
      %v224 = vlaneseq
      %v225 = vshrl.u32 %v224, 7
      %v226 = vsub.s32 0, %v225
      %v227 = vrot.slane %v175, %v226
      %v229 = vcombine.high %v227, %v227
      %v231 = vmul.f32 %v187, %v227
      %v232 = vmul.f32 %v199, %v229
      %v233 = vmul.f32 %v211, %v227
      %v234 = vmul.f32 %v223, %v229
      %v235 = vld [vmem:[%s1 + $0x1] sm:$0x1]
      %236 = vset.pattern.permute.xlu0 1
      %237 = vperm.xlu0 %236, %v171
      %v238 = vpop.permute.xlu0 %237
      %v241 = vunpack.c.l.s4 839922192
      %v242 = vunpack.c.0.s8 %v241
      %v243 = vlaneseq
      %v244 = vshrl.u32 %v243, 7
      %v245 = vsub.s32 %v242, %v244
      %v246 = vrot.slane %v238, %v245
      %247 = vset.pattern.permute.xlu0 1
      %248 = vperm.xlu0 %247, %v172
      %v249 = vpop.permute.xlu0 %248
      %v252 = vunpack.c.l.s4 839922192
      %v253 = vunpack.c.0.s8 %v252
      %v254 = vlaneseq
      %v255 = vshrl.u32 %v254, 7
      %v256 = vsub.s32 %v253, %v255
      %v257 = vrot.slane %v249, %v256
      %258 = vset.pattern.permute.xlu0 1
      %259 = vperm.xlu0 %258, %v173
      %v260 = vpop.permute.xlu0 %259
      %v263 = vunpack.c.l.s4 839922192
      %v264 = vunpack.c.0.s8 %v263
      %v265 = vlaneseq
      %v266 = vshrl.u32 %v265, 7
      %v267 = vsub.s32 %v264, %v266
      %v268 = vrot.slane %v260, %v267
      %269 = vset.pattern.permute.xlu0 1
      %270 = vperm.xlu0 %269, %v174
      %v271 = vpop.permute.xlu0 %270
      %v274 = vunpack.c.l.s4 839922192
      %v275 = vunpack.c.0.s8 %v274
      %v276 = vlaneseq
      %v277 = vshrl.u32 %v276, 7
      %v278 = vsub.s32 %v275, %v277
      %v279 = vrot.slane %v271, %v278
      %v280 = vlaneseq
      %v281 = vshrl.u32 %v280, 7
      %v282 = vsub.s32 0, %v281
      %v283 = vrot.slane %v235, %v282
      %v285 = vcombine.high %v283, %v283
      %v287 = vmul.f32 %v246, %v283
      %v288 = vmul.f32 %v257, %v285
      %v289 = vmul.f32 %v268, %v283
      %v290 = vmul.f32 %v279, %v285
      %v291 = vadd.f32 %v231, %v287
      %v292 = vadd.f32 %v232, %v288
      %v293 = vadd.f32 %v233, %v289
      %v294 = vadd.f32 %v234, %v290
      %v295 = vld [vmem:[%s1 + $0x2] sm:$0x1]
      %296 = vset.pattern.permute.xlu0 2
      %297 = vperm.xlu0 %296, %v171
      %v298 = vpop.permute.xlu0 %297
      %v301 = vunpack.c.l.s4 839922192
      %v302 = vunpack.c.0.s8 %v301
      %v303 = vlaneseq
      %v304 = vshrl.u32 %v303, 7
      %v305 = vsub.s32 %v302, %v304
      %v306 = vrot.slane %v298, %v305
      %307 = vset.pattern.permute.xlu0 2
      %308 = vperm.xlu0 %307, %v172
      %v309 = vpop.permute.xlu0 %308
      %v312 = vunpack.c.l.s4 839922192
      %v313 = vunpack.c.0.s8 %v312
      %v314 = vlaneseq
      %v315 = vshrl.u32 %v314, 7
      %v316 = vsub.s32 %v313, %v315
      %v317 = vrot.slane %v309, %v316
      %318 = vset.pattern.permute.xlu0 2
      %319 = vperm.xlu0 %318, %v173
      %v320 = vpop.permute.xlu0 %319
      %v323 = vunpack.c.l.s4 839922192
      %v324 = vunpack.c.0.s8 %v323
      %v325 = vlaneseq
      %v326 = vshrl.u32 %v325, 7
      %v327 = vsub.s32 %v324, %v326
      %v328 = vrot.slane %v320, %v327
      %329 = vset.pattern.permute.xlu0 2
      %330 = vperm.xlu0 %329, %v174
      %v331 = vpop.permute.xlu0 %330
      %v334 = vunpack.c.l.s4 839922192
      %v335 = vunpack.c.0.s8 %v334
      %v336 = vlaneseq
      %v337 = vshrl.u32 %v336, 7
      %v338 = vsub.s32 %v335, %v337
      %v339 = vrot.slane %v331, %v338
      %v340 = vlaneseq
      %v341 = vshrl.u32 %v340, 7
      %v342 = vsub.s32 0, %v341
      %v343 = vrot.slane %v295, %v342
      %v345 = vcombine.high %v343, %v343
      %v347 = vmul.f32 %v306, %v343
      %v348 = vmul.f32 %v317, %v345
      %v349 = vmul.f32 %v328, %v343
      %v350 = vmul.f32 %v339, %v345
      %v351 = vadd.f32 %v291, %v347
      %v352 = vadd.f32 %v292, %v348
      %v353 = vadd.f32 %v293, %v349
      %v354 = vadd.f32 %v294, %v350
      %v355 = vld [vmem:[%s2] sm:$0x1]
      %v357 = vlaneseq
      %v358 = vshrl.u32 %v357, 7
      %v359 = vsub.s32 0, %v358
      %v360 = vrot.slane %v355, %v359
      %v362 = vcombine.high %v360, %v360
      %v364 = vadd.f32 %v351, %v360
      %v365 = vadd.f32 %v352, %v362
      %v366 = vadd.f32 %v353, %v360
      %v367 = vadd.f32 %v354, %v362
      %v368 = vmax.f32 %v364, 0.0
      %v369 = vmax.f32 %v365, 0.0
      %v370 = vmax.f32 %v366, 0.0
      %v371 = vmax.f32 %v367, 0.0
      %v372 = vpack.c.bf16 %v368, %v368
      %v373 = vpack.c.bf16 %v369, %v369
      %v374 = vpack.c.bf16 %v370, %v370
      %v375 = vpack.c.bf16 %v371, %v371
      %vm376 = vcmask 123904
      %377 = vst.msk [vmem:[%s170] sm:$0x3] %vm376, %v372
      %378 = vst.msk [vmem:[%s170 + $0x2] sm:$0x3] %vm376, %v373
      %379 = vst.msk [vmem:[%s170 + $0x4] sm:$0x3] %vm376, %v374
      %380 = vst.msk [vmem:[%s170 + $0x6] sm:$0x3] %vm376, %v375
      %p381 = scmp.lt.s32.totalorder %s14, 1
      %s382 = scalar_select %p381, %s14, 1
      %s383 = smul.addr %s382, 4
      %s384 = smul.addr %s383, 2
      %s385 = scalar_lea.vmem %s3, %s384
      // Predicated region
      $region33: #{efficientnet_seg_forward.4} parent=31 // pred_check
        %p386 = pneg %p100
      $region34: #{efficientnet_seg_forward.4} parent=31 // pred_check_branch
        %388 = sbr.rel (%p386) target = $region36
      $region35: #{efficientnet_seg_forward.4} parent=31 // pred_region
        _
      $region36: #{efficientnet_seg_forward.4} parent=31 // pred_fallthru
        _
    $region32: #{efficientnet_seg_forward.4} parent=5 // pred_fallthru
      _
    %p389 = scmp.le.s32.totalorder 2, %s9
    // Predicated region
    $region37: #{efficientnet_seg_forward.4} parent=5 // pred_check
      %p390 = pneg %p389
    $region38: #{efficientnet_seg_forward.4} parent=5 // pred_check_branch
      %392 = sbr.rel (%p390) target = $region40
    $region39: #{efficientnet_seg_forward.4} parent=5 // pred_region
      %s393 = ssub.s32 %s9, 2
      // Predicated region
      $region41: #{efficientnet_seg_forward.4} parent=39 // pred_check
        %p394 = pneg %p106
      $region42: #{efficientnet_seg_forward.4} parent=39 // pred_check_branch
        %396 = sbr.rel (%p394) target = $region44
      $region43: #{efficientnet_seg_forward.4} parent=39 // pred_region
        %p397 = scmp.lt.s32.totalorder %s15, 1
        %s398 = scalar_select %p397, %s15, 1
        %s399 = smul.addr %s398, 4
        %s400 = smul.addr %s399, 2
        %s401 = scalar_lea.vmem %s3, %s400
      $region44: #{efficientnet_seg_forward.4} parent=39 // pred_fallthru
        _
    $region40: #{efficientnet_seg_forward.4} parent=5 // pred_fallthru
      _
  $region6: #{efficientnet_seg_forward.4} parent=0 // loop_footer
    %s13 = sadd.s32 1, %s9
  $region7: #{efficientnet_seg_forward.4} parent=0 // loop_footer_branch
    %8 = sbr.rel target = $region3
  $region8: #{efficientnet_seg_forward.4} parent=0 // loop_exit
    _

// kernel: efficientnet_seg_forward.5
$region0: #{efficientnet_seg_forward.5}
  #allocation0 [shape = 'u32[]', space=smem, size = 0x4, offset = 0x4, fixed_abs, tag = 'smem constant byte address 0x4 - core index']
  #allocation1 [shape = 'u32[144,128]{1,0:T(1,128)}', space=vmem, size = 0x12000, scoped, tag = 'internal scratch']
  %s0 = inlined_call_operand.vmem [shape: f32[2,2,2,16], index: 0, kind: input, shape index: {}]
  %s1 = inlined_call_operand.vmem [shape: bf16[16,32], index: 1, kind: input, shape index: {}]
  %s2 = inlined_call_operand.vmem [shape: f32[1,32], index: 2, kind: input, shape index: {}]
  %s3 = inlined_call_operand.vmem [shape: bf16[2,2,2,32], index: 3, kind: output, shape index: {}]
  %s4 = sld [smem:[#allocation0]]
  $region45: #{efficientnet_seg_forward.5} parent=0
    _
  %s6 = ssub.s32 1, %s4
  %s7 = scalar_select 0, %s6, %s4
  loop: start=0, step=1, limit=4
  $region2: #{efficientnet_seg_forward.5} parent=0 // loop_pre_header
    _
  $region3: #{efficientnet_seg_forward.5} parent=0 // loop_header
    %s9 = sphi 0, %s13
    %p10 = scmp.ge.s32.totalorder %s9, 4
    %s19 = sphi 0, %s21
    %s22 = sphi 0, %s19
    %s23 = sphi 0, %s22
    %s39 = sphi 0, %s23
    %s43 = sphi 0, %s43
    %s45 = sphi 0, %s43
    %s46 = sphi 0, %s45
    %s60 = sphi 0, %s46
    %s64 = sphi 0, %s64
    %s66 = sphi 0, %s64
    %s67 = sphi 0, %s66
    %s81 = sphi 0, %s67
    %s87 = sphi 0, %s89
    %s90 = sphi 0, %s87
    %s91 = sphi 0, %s90
    %s107 = sphi 0, %s91
  $region4: #{efficientnet_seg_forward.5} parent=0 // loop_header_branch
    %12 = sbr.rel (%p10) target = $region8
  $region5: #{efficientnet_seg_forward.5} parent=0 // loop_body
    %s14 = ssub.s32 %s9, 1
    %s15 = ssub.s32 %s9, 2
    %s16 = sadd.s32 %s9, 1
    %s17 = ssub.s32 %s9, %s16
    %p18 = scmp.eq.s32.totalorder %s17, 0
    %s20 = sadd.s32 %s19, 1
    %s21 = scalar_select %p18, %s19, %s20
    %p24 = pneg %p18
    %p25 = scmp.eq.s32.totalorder %s9, 1
    %p26 = por %p24, %p25
    %p27 = scmp.ne.s32.totalorder %s19, %s22
    %p28 = scmp.eq.s32.totalorder %s9, 0
    %p29 = por %p27, %p28
    %p30 = scmp.ne.s32.totalorder %s19, %s22
    %p31 = scmp.eq.s32.totalorder %s14, 1
    %p32 = por %p30, %p31
    %p33 = scmp.ne.s32.totalorder %s22, %s23
    %p34 = scmp.eq.s32.totalorder %s14, 0
    %p35 = por %p33, %p34
    %p36 = scmp.ne.s32.totalorder %s22, %s23
    %p37 = scmp.eq.s32.totalorder %s15, 1
    %p38 = por %p36, %p37
    %p40 = scmp.ne.s32.totalorder %s23, %s39
    %p41 = scmp.eq.s32.totalorder %s15, 0
    %p42 = por %p40, %p41
    %s44 = sadd.s32 %s43, 1
    %p47 = scmp.eq.s32.totalorder %s9, 1
    %p48 = scmp.ne.s32.totalorder %s43, %s45
    %p49 = scmp.eq.s32.totalorder %s9, 0
    %p50 = por %p48, %p49
    %p51 = scmp.ne.s32.totalorder %s43, %s45
    %p52 = scmp.eq.s32.totalorder %s14, 1
    %p53 = por %p51, %p52
    %p54 = scmp.ne.s32.totalorder %s45, %s46
    %p55 = scmp.eq.s32.totalorder %s14, 0
    %p56 = por %p54, %p55
    %p57 = scmp.ne.s32.totalorder %s45, %s46
    %p58 = scmp.eq.s32.totalorder %s15, 1
    %p59 = por %p57, %p58
    %p61 = scmp.ne.s32.totalorder %s46, %s60
    %p62 = scmp.eq.s32.totalorder %s15, 0
    %p63 = por %p61, %p62
    %s65 = sadd.s32 %s64, 1
    %p68 = scmp.eq.s32.totalorder %s9, 1
    %p69 = scmp.ne.s32.totalorder %s64, %s66
    %p70 = scmp.eq.s32.totalorder %s9, 0
    %p71 = por %p69, %p70
    %p72 = scmp.ne.s32.totalorder %s64, %s66
    %p73 = scmp.eq.s32.totalorder %s14, 1
    %p74 = por %p72, %p73
    %p75 = scmp.ne.s32.totalorder %s66, %s67
    %p76 = scmp.eq.s32.totalorder %s14, 0
    %p77 = por %p75, %p76
    %p78 = scmp.ne.s32.totalorder %s66, %s67
    %p79 = scmp.eq.s32.totalorder %s15, 1
    %p80 = por %p78, %p79
    %p82 = scmp.ne.s32.totalorder %s67, %s81
    %p83 = scmp.eq.s32.totalorder %s15, 0
    %p84 = por %p82, %p83
    %s85 = ssub.s32 %s9, %s16
    %p86 = scmp.eq.s32.totalorder %s85, 0
    %s88 = sadd.s32 %s87, 1
    %s89 = scalar_select %p86, %s87, %s88
    %p92 = pneg %p86
    %p93 = scmp.eq.s32.totalorder %s9, 1
    %p94 = por %p92, %p93
    %p95 = scmp.ne.s32.totalorder %s87, %s90
    %p96 = scmp.eq.s32.totalorder %s9, 0
    %p97 = por %p95, %p96
    %p98 = scmp.ne.s32.totalorder %s87, %s90
    %p99 = scmp.eq.s32.totalorder %s14, 1
    %p100 = por %p98, %p99
    %p101 = scmp.ne.s32.totalorder %s90, %s91
    %p102 = scmp.eq.s32.totalorder %s14, 0
    %p103 = por %p101, %p102
    %p104 = scmp.ne.s32.totalorder %s90, %s91
    %p105 = scmp.eq.s32.totalorder %s15, 1
    %p106 = por %p104, %p105
    %p108 = scmp.ne.s32.totalorder %s91, %s107
    %p109 = scmp.eq.s32.totalorder %s15, 0
    %p110 = por %p108, %p109
    %p111 = scmp.le.s32.totalorder 1, %s9
    %p112 = scmp.lt.s32.totalorder %s9, 3
    %p113 = pnand %p111, %p112
    %p114 = pneg %p113
    // Predicated region
    $region9: #{efficientnet_seg_forward.5} parent=5 // pred_check
      _
    $region10: #{efficientnet_seg_forward.5} parent=5 // pred_check_branch
      %116 = sbr.rel (%p113) target = $region12
    $region11: #{efficientnet_seg_forward.5} parent=5 // pred_region
      %s117 = ssub.s32 %s9, 1
      // Predicated region
      $region13: #{efficientnet_seg_forward.5} parent=11 // pred_check
        %p118 = pneg %p56
      $region14: #{efficientnet_seg_forward.5} parent=11 // pred_check_branch
        %120 = sbr.rel (%p118) target = $region16
      $region15: #{efficientnet_seg_forward.5} parent=11 // pred_region
        _
      $region16: #{efficientnet_seg_forward.5} parent=11 // pred_fallthru
        _
      // Predicated region
      $region17: #{efficientnet_seg_forward.5} parent=11 // pred_check
        %p121 = pneg %p77
      $region18: #{efficientnet_seg_forward.5} parent=11 // pred_check_branch
        %123 = sbr.rel (%p121) target = $region20
      $region19: #{efficientnet_seg_forward.5} parent=11 // pred_region
        _
      $region20: #{efficientnet_seg_forward.5} parent=11 // pred_fallthru
        _
    $region12: #{efficientnet_seg_forward.5} parent=5 // pred_fallthru
      _
    %p124 = scmp.lt.s32.totalorder %s9, 2
    // Predicated region
    $region21: #{efficientnet_seg_forward.5} parent=5 // pred_check
      %p125 = pneg %p124
    $region22: #{efficientnet_seg_forward.5} parent=5 // pred_check_branch
      %127 = sbr.rel (%p125) target = $region24
    $region23: #{efficientnet_seg_forward.5} parent=5 // pred_region
      // Predicated region
      $region25: #{efficientnet_seg_forward.5} parent=23 // pred_check
        %p128 = pneg %p29
      $region26: #{efficientnet_seg_forward.5} parent=23 // pred_check_branch
        %130 = sbr.rel (%p128) target = $region28
      $region27: #{efficientnet_seg_forward.5} parent=23 // pred_region
        %p131 = scmp.lt.s32.totalorder %s9, 1
        %s132 = scalar_select %p131, %s9, 1
        %s133 = smul.addr %s132, 2
        %s134 = smul.addr %s133, 2
        %s135 = scalar_lea.vmem %s0, %s134
      $region28: #{efficientnet_seg_forward.5} parent=23 // pred_fallthru
        _
    $region24: #{efficientnet_seg_forward.5} parent=5 // pred_fallthru
      _
    %p136 = scmp.le.s32.totalorder 1, %s9
    %p137 = scmp.lt.s32.totalorder %s9, 3
    %p138 = pnand %p136, %p137
    %p139 = pneg %p138
    // Predicated region
    $region29: #{efficientnet_seg_forward.5} parent=5 // pred_check
      _
    $region30: #{efficientnet_seg_forward.5} parent=5 // pred_check_branch
      %141 = sbr.rel (%p138) target = $region32
    $region31: #{efficientnet_seg_forward.5} parent=5 // pred_region
      %s142 = ssub.s32 %s9, 1
      %p143 = scmp.lt.s32.totalorder %s14, 1
      %s144 = scalar_select %p143, %s14, 1
      %s145 = smul.addr %s144, 2
      %s146 = smul.addr %s145, 2
      %s147 = scalar_lea.vmem %s0, %s146
      %p148 = pneg %p35
      %p149 = pneg %p32
      %p150 = pneg %p56
      %p151 = pneg %p53
      %p152 = pneg %p77
      %p153 = pneg %p74
      %p154 = pneg %p103
      %p155 = pneg %p100
      %p156 = scmp.lt.s32.totalorder %s14, 1
      %s157 = scalar_select %p156, %s14, 1
      %s158 = smul.addr %s157, 2
      %s159 = scalar_lea.vmem %s3, %s158
      %p160 = scmp.lt.s32.totalorder %s14, 1
      %s161 = scalar_select %p160, %s14, 1
      %s162 = smul.addr %s161, 2
      %s163 = smul.addr %s162, 2
      %s164 = scalar_lea.vmem %s0, %s163
      %p165 = scmp.lt.s32.totalorder %s14, 1
      %s166 = scalar_select %p165, %s14, 1
      %s167 = smul.addr %s166, 2
      %s168 = scalar_lea.vmem %s3, %s167
      %v170 = vld [vmem:[%s164] sm:$0x3]
      %v171 = vld [vmem:[%s164 + $0x2] sm:$0x3]
      %v174 = vcombine.low %v170, %v171
      %v176 = vunpack.c.l.s4 1983009808
      %v177 = vunpack.c.0.s8 %v176
      %v178 = vlaneseq
      %v179 = vshrl.u32 %v178, 7
      %v180 = vsub.s32 %v177, %v179
      %v181 = vrot.slane %v174, %v180
      %v183 = vpack.c.bf16 %v181, %v181
      %v184 = vld [vmem:[%s1] sm:$0xf]
      %v185 = vld [vmem:[%s1 + $0x4] sm:$0xf]
      %v186 = vld [vmem:[%s2] sm:$0x1]
      %v188 = vlaneseq
      %v189 = vshrl.u32 %v188, 7
      %v190 = vsub.s32 0, %v189
      %v191 = vrot.slane %v186, %v190
      %v195 = vunpack.c.l.b16 %v184
      %v196 = vunpack.c.l.b16 %v185
      %v197 = vpack.c.b16 %v196, %v195
      %vm199 = vcmask 130048
      %v201 = vsel %vm199, %v183, 0
      %203 = vmatprep.subr.bf16.mxu0 0
      %204 = vmatpush1.bf16.msra.mxu0 0
      %205 = vmatprep.subr.bf16.mxu0 0
      %206 = vmatpush1.bf16.msra.mxu0 0
      %207 = vmatprep.subr.bf16.mxu0 0
      %208 = vmatpush1.bf16.msra.mxu0 0
      %209 = vmatprep.subr.bf16.mxu0 0
      %210 = vmatpush1.bf16.msra.mxu0 0
      %211 = vmatprep.subr.bf16.mxu0 0
      %212 = vmatpush1.bf16.msra.mxu0 0
      %213 = vmatprep.subr.bf16.mxu0 0
      %214 = vmatpush1.bf16.msra.mxu0 0
      %215 = vmatprep.subr.bf16.mxu0 0
      %216 = vmatpush1.bf16.msra.mxu0 0
      %217 = vmatprep.subr.bf16.mxu0 0
      %218 = vmatpush1.bf16.msra.mxu0 %v197
      %219 = vmatprep.subr.bf16.mxu0 0
      %220 = vmatpush2.bf16.msra.mxu0 0
      %221 = vmatprep.subr.bf16.mxu0 0
      %222 = vmatpush2.bf16.msra.mxu0 0
      %223 = vmatprep.subr.bf16.mxu0 0
      %224 = vmatpush2.bf16.msra.mxu0 0
      %225 = vmatprep.subr.bf16.mxu0 0
      %226 = vmatpush2.bf16.msra.mxu0 0
      %227 = vmatprep.subr.bf16.mxu0 0
      %228 = vmatpush2.bf16.msra.mxu0 0
      %229 = vmatprep.subr.bf16.mxu0 0
      %230 = vmatpush2.bf16.msra.mxu0 0
      %231 = vmatprep.subr.bf16.mxu0 0
      %232 = vmatpush2.bf16.msra.mxu0 0
      %233 = vmatprep.subr.bf16.mxu0 0
      %234 = vmatpush2.bf16.msra.mxu0 0
      %235 = vmatprep.mubr.bf16.mxu0 0
      %236 = vmatmul.mubr.bf16.gmra.mxu0 %v201
      %v237 = vpop.f32.mrf.mxu0
      %v238 = vadd.f32 %v191, %v237
      %v239 = vpop.f32.mrf.mxu0
      %v240 = vpop.f32.mrf.mxu0
      %v241 = vpop.f32.mrf.mxu0
      %242 = vdwg.mxu0
      %v243 = vmax.f32 %v238, 0.0
      %v246 = vunpack.c.l.s4 1983009808
      %v247 = vunpack.c.0.s8 %v246
      %v248 = vlaneseq
      %v249 = vshrl.u32 %v248, 7
      %v250 = vsub.s32 %v247, %v249
      %v251 = vrot.slane %v243, %v250
      %v252 = vcombine.high %v251, %v251
      %v255 = vpack.c.bf16 %v251, %v251
      %v256 = vpack.c.bf16 %v252, %v252
      %vm257 = vcmask 253952
      %258 = vst.msk [vmem:[%s168] sm:$0x1] %vm257, %v255
      %259 = vst.msk [vmem:[%s168 + $0x1] sm:$0x1] %vm257, %v256
      %p260 = scmp.lt.s32.totalorder %s14, 1
      %s261 = scalar_select %p260, %s14, 1
      %s262 = smul.addr %s261, 2
      %s263 = scalar_lea.vmem %s3, %s262
      // Predicated region
      $region33: #{efficientnet_seg_forward.5} parent=31 // pred_check
        %p264 = pneg %p100
      $region34: #{efficientnet_seg_forward.5} parent=31 // pred_check_branch
        %266 = sbr.rel (%p264) target = $region36
      $region35: #{efficientnet_seg_forward.5} parent=31 // pred_region
        _
      $region36: #{efficientnet_seg_forward.5} parent=31 // pred_fallthru
        _
    $region32: #{efficientnet_seg_forward.5} parent=5 // pred_fallthru
      _
    %p267 = scmp.le.s32.totalorder 2, %s9
    // Predicated region
    $region37: #{efficientnet_seg_forward.5} parent=5 // pred_check
      %p268 = pneg %p267
    $region38: #{efficientnet_seg_forward.5} parent=5 // pred_check_branch
      %270 = sbr.rel (%p268) target = $region40
    $region39: #{efficientnet_seg_forward.5} parent=5 // pred_region
      %s271 = ssub.s32 %s9, 2
      // Predicated region
      $region41: #{efficientnet_seg_forward.5} parent=39 // pred_check
        %p272 = pneg %p106
      $region42: #{efficientnet_seg_forward.5} parent=39 // pred_check_branch
        %274 = sbr.rel (%p272) target = $region44
      $region43: #{efficientnet_seg_forward.5} parent=39 // pred_region
        %p275 = scmp.lt.s32.totalorder %s15, 1
        %s276 = scalar_select %p275, %s15, 1
        %s277 = smul.addr %s276, 2
        %s278 = scalar_lea.vmem %s3, %s277
      $region44: #{efficientnet_seg_forward.5} parent=39 // pred_fallthru
        _
    $region40: #{efficientnet_seg_forward.5} parent=5 // pred_fallthru
      _
  $region6: #{efficientnet_seg_forward.5} parent=0 // loop_footer
    %s13 = sadd.s32 1, %s9
  $region7: #{efficientnet_seg_forward.5} parent=0 // loop_footer_branch
    %8 = sbr.rel target = $region3
  $region8: #{efficientnet_seg_forward.5} parent=0 // loop_exit
    _

// kernel: efficientnet_seg_forward.7
$region0: #{efficientnet_seg_forward.7}
  #allocation0 [shape = 'u32[]', space=smem, size = 0x4, offset = 0x4, fixed_abs, tag = 'smem constant byte address 0x4 - core index']
  #allocation1 [shape = 'u32[144,128]{1,0:T(1,128)}', space=vmem, size = 0x12000, scoped, tag = 'internal scratch']
  %s0 = inlined_call_operand.vmem [shape: bf16[2,2,2], index: 0, kind: input, shape index: {}]
  %s1 = inlined_call_operand.vmem [shape: bf16[2,4,4], index: 1, kind: input, shape index: {}]
  %s2 = inlined_call_operand.vmem [shape: bf16[16,2], index: 2, kind: input, shape index: {}]
  %s3 = inlined_call_operand.vmem [shape: bf16[2,16], index: 3, kind: input, shape index: {}]
  %s4 = inlined_call_operand.vmem [shape: bf16[16,4], index: 4, kind: input, shape index: {}]
  %s5 = inlined_call_operand.vmem [shape: bf16[4,16], index: 5, kind: input, shape index: {}]
  %s6 = inlined_call_operand.hbm [shape: f32[2,16,16], index: 6, kind: output, shape index: {}]
  %s7 = sld [smem:[#allocation0]]
  $region57: #{efficientnet_seg_forward.7} parent=0
    _
  %s9 = ssub.s32 1, %s7
  %s10 = scalar_select 0, %s9, %s7
  $region1: #{efficientnet_seg_forward.7} parent=0
    #allocation2 [shape = 'u8[8192]{0}', space=vmem, size = 0x2000, scoped, tag = 'output window, operand 0']
    #allocation3 [shape = 's32[2]{0}', space=sflag, size = 0x8, scoped, tag = 'scoped memory for efficientnet_seg_forward.7']
    %11 = vsyncpa [#allocation3], 0
    %s12 = scalar_lea.sflag [#allocation3], 1
    %13 = vsyncpa %s12, 0
    loop: start=0, step=1, limit=6
    $region2: #{efficientnet_seg_forward.7} parent=1 // loop_pre_header
      _
    $region3: #{efficientnet_seg_forward.7} parent=1 // loop_header
      %s15 = sphi 0, %s19
      %p16 = scmp.ge.s32.totalorder %s15, 6
      %s22 = sphi 0, %s34
      %s23 = sphi 0, %s30
      %s24 = sphi 0, %s22
      %s25 = sphi 0, %s23
      %s26 = sphi 0, %s24
      %s27 = sphi 0, %s25
      %s37 = sphi 0, %s39
      %s40 = sphi 0, %s37
      %s41 = sphi 0, %s40
      %s57 = sphi 0, %s41
      %s63 = sphi 0, %s65
      %s66 = sphi 0, %s63
      %s67 = sphi 0, %s66
      %s83 = sphi 0, %s67
      %s89 = sphi 0, %s91
      %s92 = sphi 0, %s89
      %s93 = sphi 0, %s92
      %s109 = sphi 0, %s93
      %s113 = sphi 0, %s113
      %s115 = sphi 0, %s113
      %s116 = sphi 0, %s115
      %s130 = sphi 0, %s116
      %s136 = sphi 0, %s138
      %s139 = sphi 0, %s136
      %s140 = sphi 0, %s139
      %s156 = sphi 0, %s140
      %s160 = sphi 0, %s160
      %s162 = sphi 0, %s160
      %s163 = sphi 0, %s162
      %s177 = sphi 0, %s163
      %s185 = sphi 0, %s187
      %s188 = sphi 0, %s185
      %s189 = sphi 0, %s188
      %s205 = sphi 0, %s189
    $region4: #{efficientnet_seg_forward.7} parent=1 // loop_header_branch
      %18 = sbr.rel (%p16) target = $region8
    $region5: #{efficientnet_seg_forward.7} parent=1 // loop_body
      %s20 = ssub.s32 %s15, 1
      %s21 = ssub.s32 %s15, 2
      %s28 = sadd.s32 1, %s23
      %p29 = scmp.ge.s32.totalorder %s28, 2
      %s30 = scalar_select %p29, 0, %s28
      %s31 = sadd.s32 1, %s22
      %s32 = scalar_select %p29, %s31, %s22
      %p33 = scmp.ge.s32.totalorder %s32, 2
      %s34 = scalar_select %p33, 0, %s32
      %s35 = ssub.s32 %s22, %s34
      %p36 = scmp.eq.s32.totalorder %s35, 0
      %s38 = sadd.s32 %s37, 1
      %s39 = scalar_select %p36, %s37, %s38
      %p42 = pneg %p36
      %p43 = scmp.eq.s32.totalorder %s15, 3
      %p44 = por %p42, %p43
      %p45 = scmp.ne.s32.totalorder %s37, %s40
      %p46 = scmp.eq.s32.totalorder %s15, 0
      %p47 = por %p45, %p46
      %p48 = scmp.ne.s32.totalorder %s37, %s40
      %p49 = scmp.eq.s32.totalorder %s20, 3
      %p50 = por %p48, %p49
      %p51 = scmp.ne.s32.totalorder %s40, %s41
      %p52 = scmp.eq.s32.totalorder %s20, 0
      %p53 = por %p51, %p52
      %p54 = scmp.ne.s32.totalorder %s40, %s41
      %p55 = scmp.eq.s32.totalorder %s21, 3
      %p56 = por %p54, %p55
      %p58 = scmp.ne.s32.totalorder %s41, %s57
      %p59 = scmp.eq.s32.totalorder %s21, 0
      %p60 = por %p58, %p59
      %s61 = ssub.s32 %s22, %s34
      %p62 = scmp.eq.s32.totalorder %s61, 0
      %s64 = sadd.s32 %s63, 1
      %s65 = scalar_select %p62, %s63, %s64
      %p68 = pneg %p62
      %p69 = scmp.eq.s32.totalorder %s15, 3
      %p70 = por %p68, %p69
      %p71 = scmp.ne.s32.totalorder %s63, %s66
      %p72 = scmp.eq.s32.totalorder %s15, 0
      %p73 = por %p71, %p72
      %p74 = scmp.ne.s32.totalorder %s63, %s66
      %p75 = scmp.eq.s32.totalorder %s20, 3
      %p76 = por %p74, %p75
      %p77 = scmp.ne.s32.totalorder %s66, %s67
      %p78 = scmp.eq.s32.totalorder %s20, 0
      %p79 = por %p77, %p78
      %p80 = scmp.ne.s32.totalorder %s66, %s67
      %p81 = scmp.eq.s32.totalorder %s21, 3
      %p82 = por %p80, %p81
      %p84 = scmp.ne.s32.totalorder %s67, %s83
      %p85 = scmp.eq.s32.totalorder %s21, 0
      %p86 = por %p84, %p85
      %s87 = ssub.s32 %s23, %s30
      %p88 = scmp.eq.s32.totalorder %s87, 0
      %s90 = sadd.s32 %s89, 1
      %s91 = scalar_select %p88, %s89, %s90
      %p94 = pneg %p88
      %p95 = scmp.eq.s32.totalorder %s15, 3
      %p96 = por %p94, %p95
      %p97 = scmp.ne.s32.totalorder %s89, %s92
      %p98 = scmp.eq.s32.totalorder %s15, 0
      %p99 = por %p97, %p98
      %p100 = scmp.ne.s32.totalorder %s89, %s92
      %p101 = scmp.eq.s32.totalorder %s20, 3
      %p102 = por %p100, %p101
      %p103 = scmp.ne.s32.totalorder %s92, %s93
      %p104 = scmp.eq.s32.totalorder %s20, 0
      %p105 = por %p103, %p104
      %p106 = scmp.ne.s32.totalorder %s92, %s93
      %p107 = scmp.eq.s32.totalorder %s21, 3
      %p108 = por %p106, %p107
      %p110 = scmp.ne.s32.totalorder %s93, %s109
      %p111 = scmp.eq.s32.totalorder %s21, 0
      %p112 = por %p110, %p111
      %s114 = sadd.s32 %s113, 1
      %p117 = scmp.eq.s32.totalorder %s15, 3
      %p118 = scmp.ne.s32.totalorder %s113, %s115
      %p119 = scmp.eq.s32.totalorder %s15, 0
      %p120 = por %p118, %p119
      %p121 = scmp.ne.s32.totalorder %s113, %s115
      %p122 = scmp.eq.s32.totalorder %s20, 3
      %p123 = por %p121, %p122
      %p124 = scmp.ne.s32.totalorder %s115, %s116
      %p125 = scmp.eq.s32.totalorder %s20, 0
      %p126 = por %p124, %p125
      %p127 = scmp.ne.s32.totalorder %s115, %s116
      %p128 = scmp.eq.s32.totalorder %s21, 3
      %p129 = por %p127, %p128
      %p131 = scmp.ne.s32.totalorder %s116, %s130
      %p132 = scmp.eq.s32.totalorder %s21, 0
      %p133 = por %p131, %p132
      %s134 = ssub.s32 %s23, %s30
      %p135 = scmp.eq.s32.totalorder %s134, 0
      %s137 = sadd.s32 %s136, 1
      %s138 = scalar_select %p135, %s136, %s137
      %p141 = pneg %p135
      %p142 = scmp.eq.s32.totalorder %s15, 3
      %p143 = por %p141, %p142
      %p144 = scmp.ne.s32.totalorder %s136, %s139
      %p145 = scmp.eq.s32.totalorder %s15, 0
      %p146 = por %p144, %p145
      %p147 = scmp.ne.s32.totalorder %s136, %s139
      %p148 = scmp.eq.s32.totalorder %s20, 3
      %p149 = por %p147, %p148
      %p150 = scmp.ne.s32.totalorder %s139, %s140
      %p151 = scmp.eq.s32.totalorder %s20, 0
      %p152 = por %p150, %p151
      %p153 = scmp.ne.s32.totalorder %s139, %s140
      %p154 = scmp.eq.s32.totalorder %s21, 3
      %p155 = por %p153, %p154
      %p157 = scmp.ne.s32.totalorder %s140, %s156
      %p158 = scmp.eq.s32.totalorder %s21, 0
      %p159 = por %p157, %p158
      %s161 = sadd.s32 %s160, 1
      %p164 = scmp.eq.s32.totalorder %s15, 3
      %p165 = scmp.ne.s32.totalorder %s160, %s162
      %p166 = scmp.eq.s32.totalorder %s15, 0
      %p167 = por %p165, %p166
      %p168 = scmp.ne.s32.totalorder %s160, %s162
      %p169 = scmp.eq.s32.totalorder %s20, 3
      %p170 = por %p168, %p169
      %p171 = scmp.ne.s32.totalorder %s162, %s163
      %p172 = scmp.eq.s32.totalorder %s20, 0
      %p173 = por %p171, %p172
      %p174 = scmp.ne.s32.totalorder %s162, %s163
      %p175 = scmp.eq.s32.totalorder %s21, 3
      %p176 = por %p174, %p175
      %p178 = scmp.ne.s32.totalorder %s163, %s177
      %p179 = scmp.eq.s32.totalorder %s21, 0
      %p180 = por %p178, %p179
      %s181 = ssub.s32 %s22, %s34
      %s182 = ssub.s32 %s23, %s30
      %s183 = sor.u32 %s181, %s182
      %p184 = scmp.eq.s32.totalorder %s183, 0
      %s186 = sadd.s32 %s185, 1
      %s187 = scalar_select %p184, %s185, %s186
      %p190 = pneg %p184
      %p191 = scmp.eq.s32.totalorder %s15, 3
      %p192 = por %p190, %p191
      %p193 = scmp.ne.s32.totalorder %s185, %s188
      %p194 = scmp.eq.s32.totalorder %s15, 0
      %p195 = por %p193, %p194
      %p196 = scmp.ne.s32.totalorder %s185, %s188
      %p197 = scmp.eq.s32.totalorder %s20, 3
      %p198 = por %p196, %p197
      %p199 = scmp.ne.s32.totalorder %s188, %s189
      %p200 = scmp.eq.s32.totalorder %s20, 0
      %p201 = por %p199, %p200
      %p202 = scmp.ne.s32.totalorder %s188, %s189
      %p203 = scmp.eq.s32.totalorder %s21, 3
      %p204 = por %p202, %p203
      %p206 = scmp.ne.s32.totalorder %s189, %s205
      %p207 = scmp.eq.s32.totalorder %s21, 0
      %p208 = por %p206, %p207
      %p209 = scmp.le.s32.totalorder 1, %s15
      %p210 = scmp.lt.s32.totalorder %s15, 5
      %p211 = pnand %p209, %p210
      %p212 = pneg %p211
      // Predicated region
      $region9: #{efficientnet_seg_forward.7} parent=5 // pred_check
        _
      $region10: #{efficientnet_seg_forward.7} parent=5 // pred_check_branch
        %214 = sbr.rel (%p211) target = $region12
      $region11: #{efficientnet_seg_forward.7} parent=5 // pred_region
        %s215 = ssub.s32 %s15, 1
        // Predicated region
        $region13: #{efficientnet_seg_forward.7} parent=11 // pred_check
          %p216 = pneg %p126
        $region14: #{efficientnet_seg_forward.7} parent=11 // pred_check_branch
          %218 = sbr.rel (%p216) target = $region16
        $region15: #{efficientnet_seg_forward.7} parent=11 // pred_region
          _
        $region16: #{efficientnet_seg_forward.7} parent=11 // pred_fallthru
          _
        // Predicated region
        $region17: #{efficientnet_seg_forward.7} parent=11 // pred_check
          %p219 = pneg %p173
        $region18: #{efficientnet_seg_forward.7} parent=11 // pred_check_branch
          %221 = sbr.rel (%p219) target = $region20
        $region19: #{efficientnet_seg_forward.7} parent=11 // pred_region
          _
        $region20: #{efficientnet_seg_forward.7} parent=11 // pred_fallthru
          _
      $region12: #{efficientnet_seg_forward.7} parent=5 // pred_fallthru
        _
      %p222 = scmp.lt.s32.totalorder %s15, 4
      // Predicated region
      $region21: #{efficientnet_seg_forward.7} parent=5 // pred_check
        %p223 = pneg %p222
      $region22: #{efficientnet_seg_forward.7} parent=5 // pred_check_branch
        %225 = sbr.rel (%p223) target = $region24
      $region23: #{efficientnet_seg_forward.7} parent=5 // pred_region
        // Predicated region
        $region25: #{efficientnet_seg_forward.7} parent=23 // pred_check
          %p226 = pneg %p47
        $region26: #{efficientnet_seg_forward.7} parent=23 // pred_check_branch
          %228 = sbr.rel (%p226) target = $region28
        $region27: #{efficientnet_seg_forward.7} parent=23 // pred_region
          %p229 = scmp.lt.s32.totalorder %s22, 1
          %s230 = scalar_select %p229, %s22, 1
          %s231 = scalar_lea.vmem %s0, %s230
        $region28: #{efficientnet_seg_forward.7} parent=23 // pred_fallthru
          _
        // Predicated region
        $region29: #{efficientnet_seg_forward.7} parent=23 // pred_check
          %p232 = pneg %p73
        $region30: #{efficientnet_seg_forward.7} parent=23 // pred_check_branch
          %234 = sbr.rel (%p232) target = $region32
        $region31: #{efficientnet_seg_forward.7} parent=23 // pred_region
          %p235 = scmp.lt.s32.totalorder %s22, 1
          %s236 = scalar_select %p235, %s22, 1
          %s237 = smul.addr %s236, 2
          %s238 = scalar_lea.vmem %s1, %s237
        $region32: #{efficientnet_seg_forward.7} parent=23 // pred_fallthru
          _
        // Predicated region
        $region33: #{efficientnet_seg_forward.7} parent=23 // pred_check
          %p239 = pneg %p99
        $region34: #{efficientnet_seg_forward.7} parent=23 // pred_check_branch
          %241 = sbr.rel (%p239) target = $region36
        $region35: #{efficientnet_seg_forward.7} parent=23 // pred_region
          %p242 = scmp.lt.s32.totalorder %s23, 1
          %s243 = scalar_select %p242, %s23, 1
          %s244 = smul.addr %s243, 4
          %s245 = scalar_lea.vmem %s2, %s244
        $region36: #{efficientnet_seg_forward.7} parent=23 // pred_fallthru
          _
        // Predicated region
        $region37: #{efficientnet_seg_forward.7} parent=23 // pred_check
          %p246 = pneg %p146
        $region38: #{efficientnet_seg_forward.7} parent=23 // pred_check_branch
          %248 = sbr.rel (%p246) target = $region40
        $region39: #{efficientnet_seg_forward.7} parent=23 // pred_region
          %p249 = scmp.lt.s32.totalorder %s23, 1
          %s250 = scalar_select %p249, %s23, 1
          %s251 = smul.addr %s250, 4
          %s252 = scalar_lea.vmem %s4, %s251
        $region40: #{efficientnet_seg_forward.7} parent=23 // pred_fallthru
          _
      $region24: #{efficientnet_seg_forward.7} parent=5 // pred_fallthru
        _
      %p253 = scmp.le.s32.totalorder 1, %s15
      %p254 = scmp.lt.s32.totalorder %s15, 5
      %p255 = pnand %p253, %p254
      %p256 = pneg %p255
      // Predicated region
      $region41: #{efficientnet_seg_forward.7} parent=5 // pred_check
        _
      $region42: #{efficientnet_seg_forward.7} parent=5 // pred_check_branch
        %258 = sbr.rel (%p255) target = $region44
      $region43: #{efficientnet_seg_forward.7} parent=5 // pred_region
        %s259 = ssub.s32 %s15, 1
        %p260 = scmp.lt.s32.totalorder %s24, 1
        %s261 = scalar_select %p260, %s24, 1
        %s262 = scalar_lea.vmem %s0, %s261
        %p263 = pneg %p53
        %p264 = pneg %p50
        %p265 = scmp.lt.s32.totalorder %s24, 1
        %s266 = scalar_select %p265, %s24, 1
        %s267 = smul.addr %s266, 2
        %s268 = scalar_lea.vmem %s1, %s267
        %p269 = pneg %p79
        %p270 = pneg %p76
        %p271 = scmp.lt.s32.totalorder %s25, 1
        %s272 = scalar_select %p271, %s25, 1
        %s273 = smul.addr %s272, 4
        %s274 = scalar_lea.vmem %s2, %s273
        %p275 = pneg %p105
        %p276 = pneg %p102
        %p277 = pneg %p126
        %p278 = pneg %p123
        %p279 = scmp.lt.s32.totalorder %s25, 1
        %s280 = scalar_select %p279, %s25, 1
        %s281 = smul.addr %s280, 4
        %s282 = scalar_lea.vmem %s4, %s281
        %p283 = pneg %p152
        %p284 = pneg %p149
        %p285 = pneg %p173
        %p286 = pneg %p170
        %p287 = pneg %p201
        %p288 = pneg %p198
        %s289 = sand.u32 %s188, 1
        %s290 = scalar_lea.sflag [#allocation3], %s289
        %s291 = sand.u32 %s188, 1
        %s292 = smul.addr %s291, 8
        %s293 = scalar_lea.vmem [#allocation2], %s292
        %p294 = scmp.lt.s32.totalorder %s24, 1
        %s295 = scalar_select %p294, %s24, 1
        %s296 = scalar_lea.vmem %s0, %s295
        %p297 = scmp.lt.s32.totalorder %s24, 1
        %s298 = scalar_select %p297, %s24, 1
        %s299 = smul.addr %s298, 2
        %s300 = scalar_lea.vmem %s1, %s299
        %p301 = scmp.lt.s32.totalorder %s25, 1
        %s302 = scalar_select %p301, %s25, 1
        %s303 = smul.addr %s302, 4
        %s304 = scalar_lea.vmem %s2, %s303
        %p305 = scmp.lt.s32.totalorder %s25, 1
        %s306 = scalar_select %p305, %s25, 1
        %s307 = smul.addr %s306, 4
        %s308 = scalar_lea.vmem %s4, %s307
        %v310 = vld [vmem:[%s304] sm:$0xf]
        %v311 = vld [vmem:[%s296] sm:$0x1]
        %vm312 = vcmask 15360
        %v314 = vsel %vm312, %v310, 0
        %vm316 = vcmask 1040384
        %v318 = vsel %vm316, %v311, 0
        %320 = vmatprep.subr.bf16.mxu0 0
        %321 = vmatpush1.bf16.msra.mxu0 0
        %322 = vmatprep.subr.bf16.mxu0 0
        %323 = vmatpush1.bf16.msra.mxu0 0
        %324 = vmatprep.subr.bf16.mxu0 0
        %325 = vmatpush1.bf16.msra.mxu0 0
        %326 = vmatprep.subr.bf16.mxu0 0
        %327 = vmatpush1.bf16.msra.mxu0 0
        %328 = vmatprep.subr.bf16.mxu0 0
        %329 = vmatpush1.bf16.msra.mxu0 0
        %330 = vmatprep.subr.bf16.mxu0 0
        %331 = vmatpush1.bf16.msra.mxu0 0
        %332 = vmatprep.subr.bf16.mxu0 0
        %333 = vmatpush1.bf16.msra.mxu0 0
        %334 = vmatprep.subr.bf16.mxu0 0
        %335 = vmatpush1.bf16.msra.mxu0 %v318
        %336 = vmatprep.subr.bf16.mxu0 0
        %337 = vmatpush2.bf16.msra.mxu0 0
        %338 = vmatprep.subr.bf16.mxu0 0
        %339 = vmatpush2.bf16.msra.mxu0 0
        %340 = vmatprep.subr.bf16.mxu0 0
        %341 = vmatpush2.bf16.msra.mxu0 0
        %342 = vmatprep.subr.bf16.mxu0 0
        %343 = vmatpush2.bf16.msra.mxu0 0
        %344 = vmatprep.subr.bf16.mxu0 0
        %345 = vmatpush2.bf16.msra.mxu0 0
        %346 = vmatprep.subr.bf16.mxu0 0
        %347 = vmatpush2.bf16.msra.mxu0 0
        %348 = vmatprep.subr.bf16.mxu0 0
        %349 = vmatpush2.bf16.msra.mxu0 0
        %350 = vmatprep.subr.bf16.mxu0 0
        %351 = vmatpush2.bf16.msra.mxu0 0
        %352 = vmatprep.mubr.bf16.mxu0 0
        %353 = vmatmul.mubr.bf16.gmra.mxu0 %v314
        %v354 = vpop.f32.mrf.mxu0
        %v355 = vadd.f32 0.0, %v354
        %v356 = vpop.f32.mrf.mxu0
        %v357 = vpop.f32.mrf.mxu0
        %v358 = vpop.f32.mrf.mxu0
        %359 = vdwg.mxu0
        %v360 = vpack.c.bf16 %v355, %v355
        %v361 = vld [vmem:[%s3] sm:$0x1]
        %v362 = vld [vmem:[%s308] sm:$0xf]
        %v363 = vld [vmem:[%s300] sm:$0x3]
        %vm364 = vcmask 31744
        %v366 = vsel %vm364, %v362, 0
        %vm368 = vcmask 1041408
        %v370 = vsel %vm368, %v363, 0
        %372 = vmatprep.subr.bf16.mxu0 0
        %373 = vmatpush1.bf16.msra.mxu0 0
        %374 = vmatprep.subr.bf16.mxu0 0
        %375 = vmatpush1.bf16.msra.mxu0 0
        %376 = vmatprep.subr.bf16.mxu0 0
        %377 = vmatpush1.bf16.msra.mxu0 0
        %378 = vmatprep.subr.bf16.mxu0 0
        %379 = vmatpush1.bf16.msra.mxu0 0
        %380 = vmatprep.subr.bf16.mxu0 0
        %381 = vmatpush1.bf16.msra.mxu0 0
        %382 = vmatprep.subr.bf16.mxu0 0
        %383 = vmatpush1.bf16.msra.mxu0 0
        %384 = vmatprep.subr.bf16.mxu0 0
        %385 = vmatpush1.bf16.msra.mxu0 0
        %386 = vmatprep.subr.bf16.mxu0 0
        %387 = vmatpush1.bf16.msra.mxu0 %v370
        %388 = vmatprep.subr.bf16.mxu0 0
        %389 = vmatpush2.bf16.msra.mxu0 0
        %390 = vmatprep.subr.bf16.mxu0 0
        %391 = vmatpush2.bf16.msra.mxu0 0
        %392 = vmatprep.subr.bf16.mxu0 0
        %393 = vmatpush2.bf16.msra.mxu0 0
        %394 = vmatprep.subr.bf16.mxu0 0
        %395 = vmatpush2.bf16.msra.mxu0 0
        %396 = vmatprep.subr.bf16.mxu0 0
        %397 = vmatpush2.bf16.msra.mxu0 0
        %398 = vmatprep.subr.bf16.mxu0 0
        %399 = vmatpush2.bf16.msra.mxu0 0
        %400 = vmatprep.subr.bf16.mxu0 0
        %401 = vmatpush2.bf16.msra.mxu0 0
        %402 = vmatprep.subr.bf16.mxu0 0
        %403 = vmatpush2.bf16.msra.mxu0 0
        %404 = vmatprep.mubr.bf16.mxu0 0
        %405 = vmatmul.mubr.bf16.gmra.mxu0 %v366
        %v406 = vpop.f32.mrf.mxu0
        %v407 = vadd.f32 0.0, %v406
        %v408 = vpop.f32.mrf.mxu0
        %v409 = vpop.f32.mrf.mxu0
        %v410 = vpop.f32.mrf.mxu0
        %411 = vdwg.mxu0
        %v412 = vpack.c.bf16 %v407, %v407
        %v413 = vld [vmem:[%s5] sm:$0x3]
        %v415 = vsel %vm364, %v412, 0
        %v418 = vsel %vm368, %v413, 0
        %420 = vmatprep.subr.bf16.mxu0 0
        %421 = vmatpush1.bf16.msra.mxu0 0
        %422 = vmatprep.subr.bf16.mxu0 0
        %423 = vmatpush1.bf16.msra.mxu0 0
        %424 = vmatprep.subr.bf16.mxu0 0
        %425 = vmatpush1.bf16.msra.mxu0 0
        %426 = vmatprep.subr.bf16.mxu0 0
        %427 = vmatpush1.bf16.msra.mxu0 0
        %428 = vmatprep.subr.bf16.mxu0 0
        %429 = vmatpush1.bf16.msra.mxu0 0
        %430 = vmatprep.subr.bf16.mxu0 0
        %431 = vmatpush1.bf16.msra.mxu0 0
        %432 = vmatprep.subr.bf16.mxu0 0
        %433 = vmatpush1.bf16.msra.mxu0 0
        %434 = vmatprep.subr.bf16.mxu0 0
        %435 = vmatpush1.bf16.msra.mxu0 %v418
        %436 = vmatprep.subr.bf16.mxu0 0
        %437 = vmatpush2.bf16.msra.mxu0 0
        %438 = vmatprep.subr.bf16.mxu0 0
        %439 = vmatpush2.bf16.msra.mxu0 0
        %440 = vmatprep.subr.bf16.mxu0 0
        %441 = vmatpush2.bf16.msra.mxu0 0
        %442 = vmatprep.subr.bf16.mxu0 0
        %443 = vmatpush2.bf16.msra.mxu0 0
        %444 = vmatprep.subr.bf16.mxu0 0
        %445 = vmatpush2.bf16.msra.mxu0 0
        %446 = vmatprep.subr.bf16.mxu0 0
        %447 = vmatpush2.bf16.msra.mxu0 0
        %448 = vmatprep.subr.bf16.mxu0 0
        %449 = vmatpush2.bf16.msra.mxu0 0
        %450 = vmatprep.subr.bf16.mxu0 0
        %451 = vmatpush2.bf16.msra.mxu0 0
        %452 = vmatprep.mubr.bf16.mxu0 0
        %453 = vmatmul.mubr.bf16.gmra.mxu0 %v415
        %v454 = vpop.f32.mrf.mxu0
        %v455 = vadd.f32 0.0, %v454
        %v456 = vpop.f32.mrf.mxu0
        %v457 = vpop.f32.mrf.mxu0
        %v458 = vpop.f32.mrf.mxu0
        %459 = vdwg.mxu0
        %v461 = vsel %vm312, %v360, 0
        %v464 = vsel %vm316, %v361, 0
        %466 = vmatprep.subr.bf16.mxu0 0
        %467 = vmatpush1.bf16.msra.mxu0 0
        %468 = vmatprep.subr.bf16.mxu0 0
        %469 = vmatpush1.bf16.msra.mxu0 0
        %470 = vmatprep.subr.bf16.mxu0 0
        %471 = vmatpush1.bf16.msra.mxu0 0
        %472 = vmatprep.subr.bf16.mxu0 0
        %473 = vmatpush1.bf16.msra.mxu0 0
        %474 = vmatprep.subr.bf16.mxu0 0
        %475 = vmatpush1.bf16.msra.mxu0 0
        %476 = vmatprep.subr.bf16.mxu0 0
        %477 = vmatpush1.bf16.msra.mxu0 0
        %478 = vmatprep.subr.bf16.mxu0 0
        %479 = vmatpush1.bf16.msra.mxu0 0
        %480 = vmatprep.subr.bf16.mxu0 0
        %481 = vmatpush1.bf16.msra.mxu0 %v464
        %482 = vmatprep.subr.bf16.mxu0 0
        %483 = vmatpush2.bf16.msra.mxu0 0
        %484 = vmatprep.subr.bf16.mxu0 0
        %485 = vmatpush2.bf16.msra.mxu0 0
        %486 = vmatprep.subr.bf16.mxu0 0
        %487 = vmatpush2.bf16.msra.mxu0 0
        %488 = vmatprep.subr.bf16.mxu0 0
        %489 = vmatpush2.bf16.msra.mxu0 0
        %490 = vmatprep.subr.bf16.mxu0 0
        %491 = vmatpush2.bf16.msra.mxu0 0
        %492 = vmatprep.subr.bf16.mxu0 0
        %493 = vmatpush2.bf16.msra.mxu0 0
        %494 = vmatprep.subr.bf16.mxu0 0
        %495 = vmatpush2.bf16.msra.mxu0 0
        %496 = vmatprep.subr.bf16.mxu0 0
        %497 = vmatpush2.bf16.msra.mxu0 0
        %498 = vmatprep.mubr.bf16.mxu0 0
        %499 = vmatmul.mubr.bf16.gmra.mxu0 %v461
        %v500 = vpop.f32.mrf.mxu0
        %v501 = vadd.f32 %v455, %v500
        %v502 = vpop.f32.mrf.mxu0
        %v503 = vpop.f32.mrf.mxu0
        %v504 = vpop.f32.mrf.mxu0
        %505 = vdwg.mxu0
        %vm506 = vcmask 130048
        %507 = vst.msk [vmem:[%s293] sm:$0xff] %vm506, %v501
        %s508 = sand.u32 %s188, 1
        %s509 = scalar_lea.sflag [#allocation3], %s508
        %s510 = sand.u32 %s188, 1
        %s511 = smul.addr %s510, 8
        %s512 = scalar_lea.vmem [#allocation2], %s511
        // Predicated region
        $region45: #{efficientnet_seg_forward.7} parent=43 // pred_check
          %p513 = pneg %p198
        $region46: #{efficientnet_seg_forward.7} parent=43 // pred_check_branch
          %515 = sbr.rel (%p513) target = $region48
        $region47: #{efficientnet_seg_forward.7} parent=43 // pred_region
          %s517 = ssub.s32 128, 128
          %518 = vsyncadd %s509, %s517
          %s519 = smul.addr %s24, 2
          %s520 = sadd.s32 %s25, %s519
          %s521 = smul.addr %s520, 128
          %s522 = scalar_lea.hbm %s6, %s521
          %s524 = sshll.u32 %s512, 4
          %s525 = int_to_ptr.vmem [resolvable:$true] %s524
          %527 = dma.vmem_to_hbm [thread:$0]  %s525, 128, %s522, %s509
        $region48: #{efficientnet_seg_forward.7} parent=43 // pred_fallthru
          _
      $region44: #{efficientnet_seg_forward.7} parent=5 // pred_fallthru
        _
      %p528 = scmp.le.s32.totalorder 2, %s15
      // Predicated region
      $region49: #{efficientnet_seg_forward.7} parent=5 // pred_check
        %p529 = pneg %p528
      $region50: #{efficientnet_seg_forward.7} parent=5 // pred_check_branch
        %531 = sbr.rel (%p529) target = $region52
      $region51: #{efficientnet_seg_forward.7} parent=5 // pred_region
        %s532 = ssub.s32 %s15, 2
        // Predicated region
        $region53: #{efficientnet_seg_forward.7} parent=51 // pred_check
          %p533 = pneg %p204
        $region54: #{efficientnet_seg_forward.7} parent=51 // pred_check_branch
          %535 = sbr.rel (%p533) target = $region56
        $region55: #{efficientnet_seg_forward.7} parent=51 // pred_region
          %s536 = sand.u32 %s189, 1
          %s537 = scalar_lea.sflag [#allocation3], %s536
          %s538 = sand.u32 %s189, 1
          %s539 = smul.addr %s538, 8
          %s540 = scalar_lea.vmem [#allocation2], %s539
          %541 = dma.done %s537, 128
        $region56: #{efficientnet_seg_forward.7} parent=51 // pred_fallthru
          _
      $region52: #{efficientnet_seg_forward.7} parent=5 // pred_fallthru
        _
    $region6: #{efficientnet_seg_forward.7} parent=1 // loop_footer
      %s19 = sadd.s32 1, %s15
    $region7: #{efficientnet_seg_forward.7} parent=1 // loop_footer_branch
      %14 = sbr.rel target = $region3
    $region8: #{efficientnet_seg_forward.7} parent=1 // loop_exit
      _
    %542 = vsyncpa [#allocation3], 1
    %s543 = scalar_lea.sflag [#allocation3], 1
    %544 = vsyncpa %s543, 1

// kernel: efficientnet_seg_forward.6
$region0: #{efficientnet_seg_forward.6}
  #allocation0 [shape = 'u32[]', space=smem, size = 0x4, offset = 0x4, fixed_abs, tag = 'smem constant byte address 0x4 - core index']
  #allocation1 [shape = 'u32[144,128]{1,0:T(1,128)}', space=vmem, size = 0x12000, scoped, tag = 'internal scratch']
  #allocation2 [shape = 'f32[4,4,32]{2,1,0:T(4,128)}', space=vmem, size = 0x2000, scoped, tag = 'scratch operand']
  #allocation3 [shape = 'bf16[4,288]{1,0:T(4,128)(2,1)}', space=vmem, size = 0xc00, scoped, tag = 'scratch operand']
  #allocation4 [shape = 'f32[6,6,16]{2,1,0:T(8,128)}', space=vmem, size = 0x6000, scoped, tag = 'scratch operand']
  #allocation5 [shape = 'bf16[16,144]{1,0:T(8,128)(2,1)}', space=vmem, size = 0x2000, scoped, tag = 'scratch operand']
  #allocation6 [shape = 'f32[1,1]{1,0:T(1,128)S(1)}', space=vmem, size = 0x200, scoped, tag = 'scoped memory for efficientnet_seg_forward.6']
  #allocation7 [shape = 'f32[1,1]{1,0:T(1,128)S(1)}', space=vmem, size = 0x200, scoped, tag = 'scoped memory for efficientnet_seg_forward.6']
  %s0 = inlined_call_operand.vmem [shape: bf16[2,2,2,32], index: 0, kind: input, shape index: {}]
  %s1 = inlined_call_operand.vmem [shape: bf16[2,4,4,16], index: 1, kind: input, shape index: {}]
  %s2 = inlined_call_operand.vmem [shape: bf16[288,8], index: 2, kind: input, shape index: {}]
  %s3 = inlined_call_operand.vmem [shape: f32[1,8], index: 3, kind: input, shape index: {}]
  %s4 = inlined_call_operand.vmem [shape: f32[1,8], index: 4, kind: input, shape index: {}]
  %s5 = inlined_call_operand.vmem [shape: f32[1,8], index: 5, kind: input, shape index: {}]
  %s6 = inlined_call_operand.<no memory space> [shape: f32[1,1], index: 6, kind: input, shape index: {}]
  %s7 = inlined_call_operand.vmem [shape: bf16[144,4], index: 7, kind: input, shape index: {}]
  %s8 = inlined_call_operand.vmem [shape: f32[1,4], index: 8, kind: input, shape index: {}]
  %s9 = inlined_call_operand.vmem [shape: f32[1,4], index: 9, kind: input, shape index: {}]
  %s10 = inlined_call_operand.vmem [shape: f32[1,4], index: 10, kind: input, shape index: {}]
  %s11 = inlined_call_operand.<no memory space> [shape: f32[1,1], index: 11, kind: input, shape index: {}]
  %s12 = inlined_call_operand.vmem [shape: bf16[2,2,2], index: 12, kind: output, shape index: {0}]
  %s13 = inlined_call_operand.vmem [shape: bf16[2,4,4], index: 13, kind: output, shape index: {1}]
  %14 = xla_tuple %s12, %s13
  %s15 = sld [smem:[#allocation0]]
  $region89: #{efficientnet_seg_forward.6} parent=0
    _
  %s17 = ssub.s32 1, %s15
  %s18 = scalar_select 0, %s17, %s15
  %v19 = vstv %s6
  %20 = vst [vmem:[#allocation6] sm:$0x1] %v19
  %v21 = vstv %s11
  %22 = vst [vmem:[#allocation7] sm:$0x1] %v21
  loop: start=0, step=1, limit=4
  $region2: #{efficientnet_seg_forward.6} parent=0 // loop_pre_header
    _
  $region3: #{efficientnet_seg_forward.6} parent=0 // loop_header
    %s24 = sphi 0, %s28
    %p25 = scmp.ge.s32.totalorder %s24, 4
    %s34 = sphi 0, %s36
    %s37 = sphi 0, %s34
    %s38 = sphi 0, %s37
    %s54 = sphi 0, %s38
    %s60 = sphi 0, %s62
    %s63 = sphi 0, %s60
    %s64 = sphi 0, %s63
    %s80 = sphi 0, %s64
    %s84 = sphi 0, %s84
    %s86 = sphi 0, %s84
    %s87 = sphi 0, %s86
    %s101 = sphi 0, %s87
    %s105 = sphi 0, %s105
    %s107 = sphi 0, %s105
    %s108 = sphi 0, %s107
    %s122 = sphi 0, %s108
    %s126 = sphi 0, %s126
    %s128 = sphi 0, %s126
    %s129 = sphi 0, %s128
    %s143 = sphi 0, %s129
    %s147 = sphi 0, %s147
    %s149 = sphi 0, %s147
    %s150 = sphi 0, %s149
    %s164 = sphi 0, %s150
    %s168 = sphi 0, %s168
    %s170 = sphi 0, %s168
    %s171 = sphi 0, %s170
    %s185 = sphi 0, %s171
    %s189 = sphi 0, %s189
    %s191 = sphi 0, %s189
    %s192 = sphi 0, %s191
    %s206 = sphi 0, %s192
    %s210 = sphi 0, %s210
    %s212 = sphi 0, %s210
    %s213 = sphi 0, %s212
    %s227 = sphi 0, %s213
    %s231 = sphi 0, %s231
    %s233 = sphi 0, %s231
    %s234 = sphi 0, %s233
    %s248 = sphi 0, %s234
    %s252 = sphi 0, %s252
    %s254 = sphi 0, %s252
    %s255 = sphi 0, %s254
    %s269 = sphi 0, %s255
    %s273 = sphi 0, %s273
    %s275 = sphi 0, %s273
    %s276 = sphi 0, %s275
    %s290 = sphi 0, %s276
    %s296 = sphi 0, %s298
    %s299 = sphi 0, %s296
    %s300 = sphi 0, %s299
    %s316 = sphi 0, %s300
    %s322 = sphi 0, %s324
    %s325 = sphi 0, %s322
    %s326 = sphi 0, %s325
    %s342 = sphi 0, %s326
  $region4: #{efficientnet_seg_forward.6} parent=0 // loop_header_branch
    %27 = sbr.rel (%p25) target = $region8
  $region5: #{efficientnet_seg_forward.6} parent=0 // loop_body
    %s29 = ssub.s32 %s24, 1
    %s30 = ssub.s32 %s24, 2
    %s31 = sadd.s32 %s24, 1
    %s32 = ssub.s32 %s24, %s31
    %p33 = scmp.eq.s32.totalorder %s32, 0
    %s35 = sadd.s32 %s34, 1
    %s36 = scalar_select %p33, %s34, %s35
    %p39 = pneg %p33
    %p40 = scmp.eq.s32.totalorder %s24, 1
    %p41 = por %p39, %p40
    %p42 = scmp.ne.s32.totalorder %s34, %s37
    %p43 = scmp.eq.s32.totalorder %s24, 0
    %p44 = por %p42, %p43
    %p45 = scmp.ne.s32.totalorder %s34, %s37
    %p46 = scmp.eq.s32.totalorder %s29, 1
    %p47 = por %p45, %p46
    %p48 = scmp.ne.s32.totalorder %s37, %s38
    %p49 = scmp.eq.s32.totalorder %s29, 0
    %p50 = por %p48, %p49
    %p51 = scmp.ne.s32.totalorder %s37, %s38
    %p52 = scmp.eq.s32.totalorder %s30, 1
    %p53 = por %p51, %p52
    %p55 = scmp.ne.s32.totalorder %s38, %s54
    %p56 = scmp.eq.s32.totalorder %s30, 0
    %p57 = por %p55, %p56
    %s58 = ssub.s32 %s24, %s31
    %p59 = scmp.eq.s32.totalorder %s58, 0
    %s61 = sadd.s32 %s60, 1
    %s62 = scalar_select %p59, %s60, %s61
    %p65 = pneg %p59
    %p66 = scmp.eq.s32.totalorder %s24, 1
    %p67 = por %p65, %p66
    %p68 = scmp.ne.s32.totalorder %s60, %s63
    %p69 = scmp.eq.s32.totalorder %s24, 0
    %p70 = por %p68, %p69
    %p71 = scmp.ne.s32.totalorder %s60, %s63
    %p72 = scmp.eq.s32.totalorder %s29, 1
    %p73 = por %p71, %p72
    %p74 = scmp.ne.s32.totalorder %s63, %s64
    %p75 = scmp.eq.s32.totalorder %s29, 0
    %p76 = por %p74, %p75
    %p77 = scmp.ne.s32.totalorder %s63, %s64
    %p78 = scmp.eq.s32.totalorder %s30, 1
    %p79 = por %p77, %p78
    %p81 = scmp.ne.s32.totalorder %s64, %s80
    %p82 = scmp.eq.s32.totalorder %s30, 0
    %p83 = por %p81, %p82
    %s85 = sadd.s32 %s84, 1
    %p88 = scmp.eq.s32.totalorder %s24, 1
    %p89 = scmp.ne.s32.totalorder %s84, %s86
    %p90 = scmp.eq.s32.totalorder %s24, 0
    %p91 = por %p89, %p90
    %p92 = scmp.ne.s32.totalorder %s84, %s86
    %p93 = scmp.eq.s32.totalorder %s29, 1
    %p94 = por %p92, %p93
    %p95 = scmp.ne.s32.totalorder %s86, %s87
    %p96 = scmp.eq.s32.totalorder %s29, 0
    %p97 = por %p95, %p96
    %p98 = scmp.ne.s32.totalorder %s86, %s87
    %p99 = scmp.eq.s32.totalorder %s30, 1
    %p100 = por %p98, %p99
    %p102 = scmp.ne.s32.totalorder %s87, %s101
    %p103 = scmp.eq.s32.totalorder %s30, 0
    %p104 = por %p102, %p103
    %s106 = sadd.s32 %s105, 1
    %p109 = scmp.eq.s32.totalorder %s24, 1
    %p110 = scmp.ne.s32.totalorder %s105, %s107
    %p111 = scmp.eq.s32.totalorder %s24, 0
    %p112 = por %p110, %p111
    %p113 = scmp.ne.s32.totalorder %s105, %s107
    %p114 = scmp.eq.s32.totalorder %s29, 1
    %p115 = por %p113, %p114
    %p116 = scmp.ne.s32.totalorder %s107, %s108
    %p117 = scmp.eq.s32.totalorder %s29, 0
    %p118 = por %p116, %p117
    %p119 = scmp.ne.s32.totalorder %s107, %s108
    %p120 = scmp.eq.s32.totalorder %s30, 1
    %p121 = por %p119, %p120
    %p123 = scmp.ne.s32.totalorder %s108, %s122
    %p124 = scmp.eq.s32.totalorder %s30, 0
    %p125 = por %p123, %p124
    %s127 = sadd.s32 %s126, 1
    %p130 = scmp.eq.s32.totalorder %s24, 1
    %p131 = scmp.ne.s32.totalorder %s126, %s128
    %p132 = scmp.eq.s32.totalorder %s24, 0
    %p133 = por %p131, %p132
    %p134 = scmp.ne.s32.totalorder %s126, %s128
    %p135 = scmp.eq.s32.totalorder %s29, 1
    %p136 = por %p134, %p135
    %p137 = scmp.ne.s32.totalorder %s128, %s129
    %p138 = scmp.eq.s32.totalorder %s29, 0
    %p139 = por %p137, %p138
    %p140 = scmp.ne.s32.totalorder %s128, %s129
    %p141 = scmp.eq.s32.totalorder %s30, 1
    %p142 = por %p140, %p141
    %p144 = scmp.ne.s32.totalorder %s129, %s143
    %p145 = scmp.eq.s32.totalorder %s30, 0
    %p146 = por %p144, %p145
    %s148 = sadd.s32 %s147, 1
    %p151 = scmp.eq.s32.totalorder %s24, 1
    %p152 = scmp.ne.s32.totalorder %s147, %s149
    %p153 = scmp.eq.s32.totalorder %s24, 0
    %p154 = por %p152, %p153
    %p155 = scmp.ne.s32.totalorder %s147, %s149
    %p156 = scmp.eq.s32.totalorder %s29, 1
    %p157 = por %p155, %p156
    %p158 = scmp.ne.s32.totalorder %s149, %s150
    %p159 = scmp.eq.s32.totalorder %s29, 0
    %p160 = por %p158, %p159
    %p161 = scmp.ne.s32.totalorder %s149, %s150
    %p162 = scmp.eq.s32.totalorder %s30, 1
    %p163 = por %p161, %p162
    %p165 = scmp.ne.s32.totalorder %s150, %s164
    %p166 = scmp.eq.s32.totalorder %s30, 0
    %p167 = por %p165, %p166
    %s169 = sadd.s32 %s168, 1
    %p172 = scmp.eq.s32.totalorder %s24, 1
    %p173 = scmp.ne.s32.totalorder %s168, %s170
    %p174 = scmp.eq.s32.totalorder %s24, 0
    %p175 = por %p173, %p174
    %p176 = scmp.ne.s32.totalorder %s168, %s170
    %p177 = scmp.eq.s32.totalorder %s29, 1
    %p178 = por %p176, %p177
    %p179 = scmp.ne.s32.totalorder %s170, %s171
    %p180 = scmp.eq.s32.totalorder %s29, 0
    %p181 = por %p179, %p180
    %p182 = scmp.ne.s32.totalorder %s170, %s171
    %p183 = scmp.eq.s32.totalorder %s30, 1
    %p184 = por %p182, %p183
    %p186 = scmp.ne.s32.totalorder %s171, %s185
    %p187 = scmp.eq.s32.totalorder %s30, 0
    %p188 = por %p186, %p187
    %s190 = sadd.s32 %s189, 1
    %p193 = scmp.eq.s32.totalorder %s24, 1
    %p194 = scmp.ne.s32.totalorder %s189, %s191
    %p195 = scmp.eq.s32.totalorder %s24, 0
    %p196 = por %p194, %p195
    %p197 = scmp.ne.s32.totalorder %s189, %s191
    %p198 = scmp.eq.s32.totalorder %s29, 1
    %p199 = por %p197, %p198
    %p200 = scmp.ne.s32.totalorder %s191, %s192
    %p201 = scmp.eq.s32.totalorder %s29, 0
    %p202 = por %p200, %p201
    %p203 = scmp.ne.s32.totalorder %s191, %s192
    %p204 = scmp.eq.s32.totalorder %s30, 1
    %p205 = por %p203, %p204
    %p207 = scmp.ne.s32.totalorder %s192, %s206
    %p208 = scmp.eq.s32.totalorder %s30, 0
    %p209 = por %p207, %p208
    %s211 = sadd.s32 %s210, 1
    %p214 = scmp.eq.s32.totalorder %s24, 1
    %p215 = scmp.ne.s32.totalorder %s210, %s212
    %p216 = scmp.eq.s32.totalorder %s24, 0
    %p217 = por %p215, %p216
    %p218 = scmp.ne.s32.totalorder %s210, %s212
    %p219 = scmp.eq.s32.totalorder %s29, 1
    %p220 = por %p218, %p219
    %p221 = scmp.ne.s32.totalorder %s212, %s213
    %p222 = scmp.eq.s32.totalorder %s29, 0
    %p223 = por %p221, %p222
    %p224 = scmp.ne.s32.totalorder %s212, %s213
    %p225 = scmp.eq.s32.totalorder %s30, 1
    %p226 = por %p224, %p225
    %p228 = scmp.ne.s32.totalorder %s213, %s227
    %p229 = scmp.eq.s32.totalorder %s30, 0
    %p230 = por %p228, %p229
    %s232 = sadd.s32 %s231, 1
    %p235 = scmp.eq.s32.totalorder %s24, 1
    %p236 = scmp.ne.s32.totalorder %s231, %s233
    %p237 = scmp.eq.s32.totalorder %s24, 0
    %p238 = por %p236, %p237
    %p239 = scmp.ne.s32.totalorder %s231, %s233
    %p240 = scmp.eq.s32.totalorder %s29, 1
    %p241 = por %p239, %p240
    %p242 = scmp.ne.s32.totalorder %s233, %s234
    %p243 = scmp.eq.s32.totalorder %s29, 0
    %p244 = por %p242, %p243
    %p245 = scmp.ne.s32.totalorder %s233, %s234
    %p246 = scmp.eq.s32.totalorder %s30, 1
    %p247 = por %p245, %p246
    %p249 = scmp.ne.s32.totalorder %s234, %s248
    %p250 = scmp.eq.s32.totalorder %s30, 0
    %p251 = por %p249, %p250
    %s253 = sadd.s32 %s252, 1
    %p256 = scmp.eq.s32.totalorder %s24, 1
    %p257 = scmp.ne.s32.totalorder %s252, %s254
    %p258 = scmp.eq.s32.totalorder %s24, 0
    %p259 = por %p257, %p258
    %p260 = scmp.ne.s32.totalorder %s252, %s254
    %p261 = scmp.eq.s32.totalorder %s29, 1
    %p262 = por %p260, %p261
    %p263 = scmp.ne.s32.totalorder %s254, %s255
    %p264 = scmp.eq.s32.totalorder %s29, 0
    %p265 = por %p263, %p264
    %p266 = scmp.ne.s32.totalorder %s254, %s255
    %p267 = scmp.eq.s32.totalorder %s30, 1
    %p268 = por %p266, %p267
    %p270 = scmp.ne.s32.totalorder %s255, %s269
    %p271 = scmp.eq.s32.totalorder %s30, 0
    %p272 = por %p270, %p271
    %s274 = sadd.s32 %s273, 1
    %p277 = scmp.eq.s32.totalorder %s24, 1
    %p278 = scmp.ne.s32.totalorder %s273, %s275
    %p279 = scmp.eq.s32.totalorder %s24, 0
    %p280 = por %p278, %p279
    %p281 = scmp.ne.s32.totalorder %s273, %s275
    %p282 = scmp.eq.s32.totalorder %s29, 1
    %p283 = por %p281, %p282
    %p284 = scmp.ne.s32.totalorder %s275, %s276
    %p285 = scmp.eq.s32.totalorder %s29, 0
    %p286 = por %p284, %p285
    %p287 = scmp.ne.s32.totalorder %s275, %s276
    %p288 = scmp.eq.s32.totalorder %s30, 1
    %p289 = por %p287, %p288
    %p291 = scmp.ne.s32.totalorder %s276, %s290
    %p292 = scmp.eq.s32.totalorder %s30, 0
    %p293 = por %p291, %p292
    %s294 = ssub.s32 %s24, %s31
    %p295 = scmp.eq.s32.totalorder %s294, 0
    %s297 = sadd.s32 %s296, 1
    %s298 = scalar_select %p295, %s296, %s297
    %p301 = pneg %p295
    %p302 = scmp.eq.s32.totalorder %s24, 1
    %p303 = por %p301, %p302
    %p304 = scmp.ne.s32.totalorder %s296, %s299
    %p305 = scmp.eq.s32.totalorder %s24, 0
    %p306 = por %p304, %p305
    %p307 = scmp.ne.s32.totalorder %s296, %s299
    %p308 = scmp.eq.s32.totalorder %s29, 1
    %p309 = por %p307, %p308
    %p310 = scmp.ne.s32.totalorder %s299, %s300
    %p311 = scmp.eq.s32.totalorder %s29, 0
    %p312 = por %p310, %p311
    %p313 = scmp.ne.s32.totalorder %s299, %s300
    %p314 = scmp.eq.s32.totalorder %s30, 1
    %p315 = por %p313, %p314
    %p317 = scmp.ne.s32.totalorder %s300, %s316
    %p318 = scmp.eq.s32.totalorder %s30, 0
    %p319 = por %p317, %p318
    %s320 = ssub.s32 %s24, %s31
    %p321 = scmp.eq.s32.totalorder %s320, 0
    %s323 = sadd.s32 %s322, 1
    %s324 = scalar_select %p321, %s322, %s323
    %p327 = pneg %p321
    %p328 = scmp.eq.s32.totalorder %s24, 1
    %p329 = por %p327, %p328
    %p330 = scmp.ne.s32.totalorder %s322, %s325
    %p331 = scmp.eq.s32.totalorder %s24, 0
    %p332 = por %p330, %p331
    %p333 = scmp.ne.s32.totalorder %s322, %s325
    %p334 = scmp.eq.s32.totalorder %s29, 1
    %p335 = por %p333, %p334
    %p336 = scmp.ne.s32.totalorder %s325, %s326
    %p337 = scmp.eq.s32.totalorder %s29, 0
    %p338 = por %p336, %p337
    %p339 = scmp.ne.s32.totalorder %s325, %s326
    %p340 = scmp.eq.s32.totalorder %s30, 1
    %p341 = por %p339, %p340
    %p343 = scmp.ne.s32.totalorder %s326, %s342
    %p344 = scmp.eq.s32.totalorder %s30, 0
    %p345 = por %p343, %p344
    %p346 = scmp.le.s32.totalorder 1, %s24
    %p347 = scmp.lt.s32.totalorder %s24, 3
    %p348 = pnand %p346, %p347
    %p349 = pneg %p348
    // Predicated region
    $region9: #{efficientnet_seg_forward.6} parent=5 // pred_check
      _
    $region10: #{efficientnet_seg_forward.6} parent=5 // pred_check_branch
      %351 = sbr.rel (%p348) target = $region12
    $region11: #{efficientnet_seg_forward.6} parent=5 // pred_region
      %s352 = ssub.s32 %s24, 1
      // Predicated region
      $region13: #{efficientnet_seg_forward.6} parent=11 // pred_check
        %p353 = pneg %p97
      $region14: #{efficientnet_seg_forward.6} parent=11 // pred_check_branch
        %355 = sbr.rel (%p353) target = $region16
      $region15: #{efficientnet_seg_forward.6} parent=11 // pred_region
        _
      $region16: #{efficientnet_seg_forward.6} parent=11 // pred_fallthru
        _
      // Predicated region
      $region17: #{efficientnet_seg_forward.6} parent=11 // pred_check
        %p356 = pneg %p118
      $region18: #{efficientnet_seg_forward.6} parent=11 // pred_check_branch
        %358 = sbr.rel (%p356) target = $region20
      $region19: #{efficientnet_seg_forward.6} parent=11 // pred_region
        _
      $region20: #{efficientnet_seg_forward.6} parent=11 // pred_fallthru
        _
      // Predicated region
      $region21: #{efficientnet_seg_forward.6} parent=11 // pred_check
        %p359 = pneg %p139
      $region22: #{efficientnet_seg_forward.6} parent=11 // pred_check_branch
        %361 = sbr.rel (%p359) target = $region24
      $region23: #{efficientnet_seg_forward.6} parent=11 // pred_region
        _
      $region24: #{efficientnet_seg_forward.6} parent=11 // pred_fallthru
        _
      // Predicated region
      $region25: #{efficientnet_seg_forward.6} parent=11 // pred_check
        %p362 = pneg %p160
      $region26: #{efficientnet_seg_forward.6} parent=11 // pred_check_branch
        %364 = sbr.rel (%p362) target = $region28
      $region27: #{efficientnet_seg_forward.6} parent=11 // pred_region
        _
      $region28: #{efficientnet_seg_forward.6} parent=11 // pred_fallthru
        _
      // Predicated region
      $region29: #{efficientnet_seg_forward.6} parent=11 // pred_check
        %p365 = pneg %p181
      $region30: #{efficientnet_seg_forward.6} parent=11 // pred_check_branch
        %367 = sbr.rel (%p365) target = $region32
      $region31: #{efficientnet_seg_forward.6} parent=11 // pred_region
        _
      $region32: #{efficientnet_seg_forward.6} parent=11 // pred_fallthru
        _
      // Predicated region
      $region33: #{efficientnet_seg_forward.6} parent=11 // pred_check
        %p368 = pneg %p202
      $region34: #{efficientnet_seg_forward.6} parent=11 // pred_check_branch
        %370 = sbr.rel (%p368) target = $region36
      $region35: #{efficientnet_seg_forward.6} parent=11 // pred_region
        _
      $region36: #{efficientnet_seg_forward.6} parent=11 // pred_fallthru
        _
      // Predicated region
      $region37: #{efficientnet_seg_forward.6} parent=11 // pred_check
        %p371 = pneg %p223
      $region38: #{efficientnet_seg_forward.6} parent=11 // pred_check_branch
        %373 = sbr.rel (%p371) target = $region40
      $region39: #{efficientnet_seg_forward.6} parent=11 // pred_region
        _
      $region40: #{efficientnet_seg_forward.6} parent=11 // pred_fallthru
        _
      // Predicated region
      $region41: #{efficientnet_seg_forward.6} parent=11 // pred_check
        %p374 = pneg %p244
      $region42: #{efficientnet_seg_forward.6} parent=11 // pred_check_branch
        %376 = sbr.rel (%p374) target = $region44
      $region43: #{efficientnet_seg_forward.6} parent=11 // pred_region
        _
      $region44: #{efficientnet_seg_forward.6} parent=11 // pred_fallthru
        _
      // Predicated region
      $region45: #{efficientnet_seg_forward.6} parent=11 // pred_check
        %p377 = pneg %p265
      $region46: #{efficientnet_seg_forward.6} parent=11 // pred_check_branch
        %379 = sbr.rel (%p377) target = $region48
      $region47: #{efficientnet_seg_forward.6} parent=11 // pred_region
        _
      $region48: #{efficientnet_seg_forward.6} parent=11 // pred_fallthru
        _
      // Predicated region
      $region49: #{efficientnet_seg_forward.6} parent=11 // pred_check
        %p380 = pneg %p286
      $region50: #{efficientnet_seg_forward.6} parent=11 // pred_check_branch
        %382 = sbr.rel (%p380) target = $region52
      $region51: #{efficientnet_seg_forward.6} parent=11 // pred_region
        _
      $region52: #{efficientnet_seg_forward.6} parent=11 // pred_fallthru
        _
    $region12: #{efficientnet_seg_forward.6} parent=5 // pred_fallthru
      _
    %p383 = scmp.lt.s32.totalorder %s24, 2
    // Predicated region
    $region53: #{efficientnet_seg_forward.6} parent=5 // pred_check
      %p384 = pneg %p383
    $region54: #{efficientnet_seg_forward.6} parent=5 // pred_check_branch
      %386 = sbr.rel (%p384) target = $region56
    $region55: #{efficientnet_seg_forward.6} parent=5 // pred_region
      // Predicated region
      $region57: #{efficientnet_seg_forward.6} parent=55 // pred_check
        %p387 = pneg %p44
      $region58: #{efficientnet_seg_forward.6} parent=55 // pred_check_branch
        %389 = sbr.rel (%p387) target = $region60
      $region59: #{efficientnet_seg_forward.6} parent=55 // pred_region
        %p390 = scmp.lt.s32.totalorder %s24, 1
        %s391 = scalar_select %p390, %s24, 1
        %s392 = smul.addr %s391, 2
        %s393 = scalar_lea.vmem %s0, %s392
      $region60: #{efficientnet_seg_forward.6} parent=55 // pred_fallthru
        _
      // Predicated region
      $region61: #{efficientnet_seg_forward.6} parent=55 // pred_check
        %p394 = pneg %p70
      $region62: #{efficientnet_seg_forward.6} parent=55 // pred_check_branch
        %396 = sbr.rel (%p394) target = $region64
      $region63: #{efficientnet_seg_forward.6} parent=55 // pred_region
        %p397 = scmp.lt.s32.totalorder %s24, 1
        %s398 = scalar_select %p397, %s24, 1
        %s399 = smul.addr %s398, 4
        %s400 = smul.addr %s399, 2
        %s401 = scalar_lea.vmem %s1, %s400
      $region64: #{efficientnet_seg_forward.6} parent=55 // pred_fallthru
        _
    $region56: #{efficientnet_seg_forward.6} parent=5 // pred_fallthru
      _
    %p402 = scmp.le.s32.totalorder 1, %s24
    %p403 = scmp.lt.s32.totalorder %s24, 3
    %p404 = pnand %p402, %p403
    %p405 = pneg %p404
    // Predicated region
    $region65: #{efficientnet_seg_forward.6} parent=5 // pred_check
      _
    $region66: #{efficientnet_seg_forward.6} parent=5 // pred_check_branch
      %407 = sbr.rel (%p404) target = $region68
    $region67: #{efficientnet_seg_forward.6} parent=5 // pred_region
      %s408 = ssub.s32 %s24, 1
      %p409 = scmp.lt.s32.totalorder %s29, 1
      %s410 = scalar_select %p409, %s29, 1
      %s411 = smul.addr %s410, 2
      %s412 = scalar_lea.vmem %s0, %s411
      %p413 = pneg %p50
      %p414 = pneg %p47
      %p415 = scmp.lt.s32.totalorder %s29, 1
      %s416 = scalar_select %p415, %s29, 1
      %s417 = smul.addr %s416, 4
      %s418 = smul.addr %s417, 2
      %s419 = scalar_lea.vmem %s1, %s418
      %p420 = pneg %p76
      %p421 = pneg %p73
      %p422 = pneg %p97
      %p423 = pneg %p94
      %p424 = pneg %p118
      %p425 = pneg %p115
      %p426 = pneg %p139
      %p427 = pneg %p136
      %p428 = pneg %p160
      %p429 = pneg %p157
      %p430 = pneg %p181
      %p431 = pneg %p178
      %p432 = pneg %p202
      %p433 = pneg %p199
      %p434 = pneg %p223
      %p435 = pneg %p220
      %p436 = pneg %p244
      %p437 = pneg %p241
      %p438 = pneg %p265
      %p439 = pneg %p262
      %p440 = pneg %p286
      %p441 = pneg %p283
      %p442 = pneg %p312
      %p443 = pneg %p309
      %p444 = scmp.lt.s32.totalorder %s29, 1
      %s445 = scalar_select %p444, %s29, 1
      %s446 = scalar_lea.vmem %s12, %s445
      %p447 = pneg %p338
      %p448 = pneg %p335
      %p449 = scmp.lt.s32.totalorder %s29, 1
      %s450 = scalar_select %p449, %s29, 1
      %s451 = smul.addr %s450, 2
      %s452 = scalar_lea.vmem %s13, %s451
      %p453 = scmp.lt.s32.totalorder %s29, 1
      %s454 = scalar_select %p453, %s29, 1
      %s455 = smul.addr %s454, 2
      %s456 = scalar_lea.vmem %s0, %s455
      %p457 = scmp.lt.s32.totalorder %s29, 1
      %s458 = scalar_select %p457, %s29, 1
      %s459 = smul.addr %s458, 4
      %s460 = smul.addr %s459, 2
      %s461 = scalar_lea.vmem %s1, %s460
      %p462 = scmp.lt.s32.totalorder %s29, 1
      %s463 = scalar_select %p462, %s29, 1
      %s464 = scalar_lea.vmem %s12, %s463
      %p465 = scmp.lt.s32.totalorder %s29, 1
      %s466 = scalar_select %p465, %s29, 1
      %s467 = smul.addr %s466, 2
      %s468 = scalar_lea.vmem %s13, %s467
      %vm470 = vcmask 257024
      %471 = vst.msk [vmem:[#allocation2] sm:$0xf] %vm470, 0.0
      %s472 = scalar_lea.vmem [#allocation2], 12
      %473 = vst.msk [vmem:[%s472] sm:$0xf] %vm470, 0.0
      %vm474 = vcmask 253952
      %475 = vst.msk [vmem:[#allocation2] sm:$0x1] %vm474, 0.0
      %476 = vst.msk [vmem:[#allocation2 + $0x4] sm:$0x1] %vm474, 0.0
      %477 = vst.msk [vmem:[#allocation2 + $0x8] sm:$0x1] %vm474, 0.0
      %478 = vst.msk [vmem:[#allocation2 + $0xc] sm:$0x1] %vm474, 0.0
      %479 = vst.msk [vmem:[#allocation2 + $0x3] sm:$0x1] %vm474, 0.0
      %480 = vst.msk [vmem:[#allocation2 + $0x7] sm:$0x1] %vm474, 0.0
      %481 = vst.msk [vmem:[#allocation2 + $0xb] sm:$0x1] %vm474, 0.0
      %482 = vst.msk [vmem:[#allocation2 + $0xf] sm:$0x1] %vm474, 0.0
      %v483 = vld [vmem:[%s456] sm:$0x1]
      %v484 = vld [vmem:[%s456 + $0x1] sm:$0x1]
      %v485 = vunpack.c.l.bf16 %v483
      %v486 = vunpack.c.l.bf16 %v484
      %s487 = scalar_lea.vmem [#allocation2], 4
      %vm488 = vcmask 254976
      %489 = vst.msk [vmem:[%s487 + $0x1] sm:$0x3] %vm488, %v485
      %490 = vst.msk [vmem:[%s487 + $0x5] sm:$0x3] %vm488, %v486
      %v491 = vld [vmem:[#allocation2] sm:$0xf]
      %v492 = vld [vmem:[#allocation2 + $0x4] sm:$0xf]
      %v493 = vld [vmem:[#allocation2 + $0x8] sm:$0xf]
      %v494 = vld [vmem:[#allocation2 + $0xc] sm:$0xf]
      %v497 = vcombine.low %v491, %v492
      %v499 = vunpack.c.l.s4 1983009808
      %v500 = vunpack.c.0.s8 %v499
      %v501 = vlaneseq
      %v502 = vshrl.u32 %v501, 7
      %v503 = vsub.s32 %v500, %v502
      %v504 = vrot.slane %v497, %v503
      %v506 = vpack.c.bf16 %v504, %v504
      %507 = vst.msk [vmem:[#allocation3] sm:$0x3] %vm488, %v506
      %v509 = vunpack.c.l.s4 1983009808
      %v510 = vunpack.c.0.s8 %v509
      %v511 = vlaneseq
      %v512 = vshrl.u32 %v511, 7
      %v513 = vsub.s32 %v510, %v512
      %v514 = vrot.slane %v491, %v513
      %v515 = vcombine.high %v514, %v514
      %v517 = vunpack.c.l.s4 1983009808
      %v518 = vunpack.c.0.s8 %v517
      %v519 = vlaneseq
      %v520 = vshrl.u32 %v519, 7
      %v521 = vsub.s32 %v518, %v520
      %v522 = vrot.slane %v492, %v521
      %v523 = vcombine.high %v522, %v522
      %vm524 = vcmask 1040384
      %vm525 = vcmask 1042434
      %vm526 = vmor %vm524, %vm525
      %vm527 = vcmask 1044484
      %vm528 = vmor %vm526, %vm527
      %vm529 = vcmask 1046534
      %vm530 = vmor %vm528, %vm529
      %v531 = vrot.slane %v514, 7
      %v532 = vrot.slane %v531, 2
      %v533 = vrot.slane %v515, 7
      %v534 = vsel %vm530, %v532, %v533
      %v535 = vrot.slane %v522, 7
      %v536 = vrot.slane %v535, 2
      %v537 = vrot.slane %v523, 7
      %v538 = vsel %vm530, %v536, %v537
      %v539 = vcombine.low %v534, %v538
      %v541 = vunpack.c.l.s4 1983009808
      %v542 = vunpack.c.0.s8 %v541
      %v543 = vlaneseq
      %v544 = vshrl.u32 %v543, 7
      %v545 = vsub.s32 %v542, %v544
      %v546 = vrot.slane %v539, %v545
      %v548 = vpack.c.bf16 %v546, %v546
      %v551 = vunpack.c.l.s4 1983009808
      %v552 = vunpack.c.0.s8 %v551
      %v553 = vlaneseq
      %v554 = vshrl.u32 %v553, 7
      %v555 = vsub.s32 %v552, %v554
      %v556 = vrot.slane %v548, %v555
      %557 = vrot.lane.b32.xlu0 %v556, 32
      %v558 = vpop.permute.xlu0 %557
      %vm560 = vcmask 517376
      %561 = vst.msk [vmem:[#allocation3] sm:$0x3] %vm560, %v558
      %v562 = vcombine.low %v515, %v523
      %v564 = vunpack.c.l.s4 1983009808
      %v565 = vunpack.c.0.s8 %v564
      %v566 = vlaneseq
      %v567 = vshrl.u32 %v566, 7
      %v568 = vsub.s32 %v565, %v567
      %v569 = vrot.slane %v562, %v568
      %v571 = vpack.c.bf16 %v569, %v569
      %v574 = vunpack.c.l.s4 1983009808
      %v575 = vunpack.c.0.s8 %v574
      %v576 = vlaneseq
      %v577 = vshrl.u32 %v576, 7
      %v578 = vsub.s32 %v575, %v577
      %v579 = vrot.slane %v571, %v578
      %580 = vrot.lane.b32.xlu0 %v579, 64
      %v581 = vpop.permute.xlu0 %580
      %vm583 = vcmask 779776
      %584 = vst.msk [vmem:[#allocation3] sm:$0x3] %vm583, %v581
      %v586 = vcombine.low %v492, %v493
      %v588 = vunpack.c.l.s4 1983009808
      %v589 = vunpack.c.0.s8 %v588
      %v590 = vlaneseq
      %v591 = vshrl.u32 %v590, 7
      %v592 = vsub.s32 %v589, %v591
      %v593 = vrot.slane %v586, %v592
      %v595 = vpack.c.bf16 %v593, %v593
      %v598 = vunpack.c.l.s4 1983009808
      %v599 = vunpack.c.0.s8 %v598
      %v600 = vlaneseq
      %v601 = vshrl.u32 %v600, 7
      %v602 = vsub.s32 %v599, %v601
      %v603 = vrot.slane %v595, %v602
      %604 = vrot.lane.b32.xlu0 %v603, 96
      %v605 = vpop.permute.xlu0 %604
      %vm607 = vcmask 1042176
      %608 = vst.msk [vmem:[#allocation3] sm:$0x3] %vm607, %v605
      %v610 = vunpack.c.l.s4 1983009808
      %v611 = vunpack.c.0.s8 %v610
      %v612 = vlaneseq
      %v613 = vshrl.u32 %v612, 7
      %v614 = vsub.s32 %v611, %v613
      %v615 = vrot.slane %v493, %v614
      %v616 = vcombine.high %v615, %v615
      %v617 = vrot.slane %v615, 7
      %v618 = vrot.slane %v617, 2
      %v619 = vrot.slane %v616, 7
      %v620 = vsel %vm530, %v618, %v619
      %v621 = vcombine.low %v538, %v620
      %v623 = vunpack.c.l.s4 1983009808
      %v624 = vunpack.c.0.s8 %v623
      %v625 = vlaneseq
      %v626 = vshrl.u32 %v625, 7
      %v627 = vsub.s32 %v624, %v626
      %v628 = vrot.slane %v621, %v627
      %v630 = vpack.c.bf16 %v628, %v628
      %631 = vst.msk [vmem:[#allocation3 + $0x2] sm:$0x3] %vm488, %v630
      %v632 = vcombine.low %v523, %v616
      %v634 = vunpack.c.l.s4 1983009808
      %v635 = vunpack.c.0.s8 %v634
      %v636 = vlaneseq
      %v637 = vshrl.u32 %v636, 7
      %v638 = vsub.s32 %v635, %v637
      %v639 = vrot.slane %v632, %v638
      %v641 = vpack.c.bf16 %v639, %v639
      %v644 = vunpack.c.l.s4 1983009808
      %v645 = vunpack.c.0.s8 %v644
      %v646 = vlaneseq
      %v647 = vshrl.u32 %v646, 7
      %v648 = vsub.s32 %v645, %v647
      %v649 = vrot.slane %v641, %v648
      %650 = vrot.lane.b32.xlu0 %v649, 32
      %v651 = vpop.permute.xlu0 %650
      %653 = vst.msk [vmem:[#allocation3 + $0x2] sm:$0x3] %vm560, %v651
      %v655 = vcombine.low %v493, %v494
      %v657 = vunpack.c.l.s4 1983009808
      %v658 = vunpack.c.0.s8 %v657
      %v659 = vlaneseq
      %v660 = vshrl.u32 %v659, 7
      %v661 = vsub.s32 %v658, %v660
      %v662 = vrot.slane %v655, %v661
      %v664 = vpack.c.bf16 %v662, %v662
      %v667 = vunpack.c.l.s4 1983009808
      %v668 = vunpack.c.0.s8 %v667
      %v669 = vlaneseq
      %v670 = vshrl.u32 %v669, 7
      %v671 = vsub.s32 %v668, %v670
      %v672 = vrot.slane %v664, %v671
      %673 = vrot.lane.b32.xlu0 %v672, 64
      %v674 = vpop.permute.xlu0 %673
      %676 = vst.msk [vmem:[#allocation3 + $0x2] sm:$0x3] %vm583, %v674
      %v678 = vunpack.c.l.s4 1983009808
      %v679 = vunpack.c.0.s8 %v678
      %v680 = vlaneseq
      %v681 = vshrl.u32 %v680, 7
      %v682 = vsub.s32 %v679, %v681
      %v683 = vrot.slane %v494, %v682
      %v684 = vcombine.high %v683, %v683
      %v685 = vrot.slane %v683, 7
      %v686 = vrot.slane %v685, 2
      %v687 = vrot.slane %v684, 7
      %v688 = vsel %vm530, %v686, %v687
      %v689 = vcombine.low %v620, %v688
      %v691 = vunpack.c.l.s4 1983009808
      %v692 = vunpack.c.0.s8 %v691
      %v693 = vlaneseq
      %v694 = vshrl.u32 %v693, 7
      %v695 = vsub.s32 %v692, %v694
      %v696 = vrot.slane %v689, %v695
      %v698 = vpack.c.bf16 %v696, %v696
      %v701 = vunpack.c.l.s4 1983009808
      %v702 = vunpack.c.0.s8 %v701
      %v703 = vlaneseq
      %v704 = vshrl.u32 %v703, 7
      %v705 = vsub.s32 %v702, %v704
      %v706 = vrot.slane %v698, %v705
      %707 = vrot.lane.b32.xlu0 %v706, 96
      %v708 = vpop.permute.xlu0 %707
      %710 = vst.msk [vmem:[#allocation3 + $0x2] sm:$0x3] %vm607, %v708
      %v711 = vcombine.low %v616, %v684
      %v713 = vunpack.c.l.s4 1983009808
      %v714 = vunpack.c.0.s8 %v713
      %v715 = vlaneseq
      %v716 = vshrl.u32 %v715, 7
      %v717 = vsub.s32 %v714, %v716
      %v718 = vrot.slane %v711, %v717
      %v720 = vpack.c.bf16 %v718, %v718
      %721 = vst.msk [vmem:[#allocation3 + $0x4] sm:$0x3] %vm488, %v720
      %v722 = vld [vmem:[#allocation3] sm:$0x3f]
      %v723 = vld [vmem:[%s2] sm:$0xf]
      %v724 = vld [vmem:[%s2 + $0x4] sm:$0xf]
      %v725 = vld [vmem:[%s2 + $0x8] sm:$0xf]
      %v726 = vld [vmem:[%s2 + $0xc] sm:$0xf]
      %v727 = vld [vmem:[%s2 + $0x10] sm:$0xf]
      %v728 = vld [vmem:[%s2 + $0x14] sm:$0xf]
      %v729 = vld [vmem:[%s2 + $0x18] sm:$0xf]
      %v730 = vld [vmem:[%s2 + $0x1c] sm:$0xf]
      %v731 = vld [vmem:[%s2 + $0x20] sm:$0xf]
      %v732 = vld [vmem:[%s2 + $0x24] sm:$0xf]
      %v733 = vld [vmem:[%s2 + $0x28] sm:$0xf]
      %v734 = vld [vmem:[%s2 + $0x2c] sm:$0xf]
      %v735 = vld [vmem:[%s2 + $0x30] sm:$0xf]
      %v736 = vld [vmem:[%s2 + $0x34] sm:$0xf]
      %v737 = vld [vmem:[%s2 + $0x38] sm:$0xf]
      %v738 = vld [vmem:[%s2 + $0x3c] sm:$0xf]
      %v739 = vld [vmem:[%s2 + $0x40] sm:$0xf]
      %v740 = vld [vmem:[%s2 + $0x44] sm:$0xf]
      %v741 = vld [vmem:[%s2 + $0x48] sm:$0xf]
      %v742 = vld [vmem:[%s2 + $0x4c] sm:$0xf]
      %v743 = vld [vmem:[%s2 + $0x50] sm:$0xf]
      %v744 = vld [vmem:[%s2 + $0x54] sm:$0xf]
      %v745 = vld [vmem:[%s2 + $0x58] sm:$0xf]
      %v746 = vld [vmem:[%s2 + $0x5c] sm:$0xf]
      %v747 = vld [vmem:[%s2 + $0x60] sm:$0xf]
      %v748 = vld [vmem:[%s2 + $0x64] sm:$0xf]
      %v749 = vld [vmem:[%s2 + $0x68] sm:$0xf]
      %v750 = vld [vmem:[%s2 + $0x6c] sm:$0xf]
      %v751 = vld [vmem:[%s2 + $0x70] sm:$0xf]
      %v752 = vld [vmem:[%s2 + $0x74] sm:$0xf]
      %v753 = vld [vmem:[%s2 + $0x78] sm:$0xf]
      %v754 = vld [vmem:[%s2 + $0x7c] sm:$0xf]
      %v755 = vld [vmem:[%s2 + $0x80] sm:$0xf]
      %v756 = vld [vmem:[%s2 + $0x84] sm:$0xf]
      %v757 = vld [vmem:[%s2 + $0x88] sm:$0xf]
      %v758 = vld [vmem:[%s2 + $0x8c] sm:$0xf]
      %v760 = vcombine.high %v722, %v722
      %v762 = vunpack.c.l.s4 1983009808
      %v763 = vunpack.c.0.s8 %v762
      %v764 = vlaneseq
      %v765 = vshrl.u32 %v764, 7
      %v766 = vsub.s32 %v763, %v765
      %v767 = vrot.slane %v722, %v766
      %v769 = vunpack.c.l.s4 1983009808
      %v770 = vunpack.c.0.s8 %v769
      %v771 = vlaneseq
      %v772 = vshrl.u32 %v771, 7
      %v773 = vsub.s32 %v770, %v772
      %v774 = vrot.slane %v760, %v773
      %v775 = vcombine.high %v767, %v767
      %v814 = vunpack.c.l.b16 %v723
      %v815 = vunpack.c.l.b16 %v724
      %v816 = vunpack.c.l.b16 %v725
      %v817 = vunpack.c.l.b16 %v726
      %v818 = vunpack.c.l.b16 %v727
      %v819 = vunpack.c.l.b16 %v728
      %v820 = vunpack.c.l.b16 %v729
      %v821 = vunpack.c.l.b16 %v730
      %v822 = vunpack.c.l.b16 %v731
      %v823 = vunpack.c.l.b16 %v732
      %v824 = vunpack.c.l.b16 %v733
      %v825 = vunpack.c.l.b16 %v734
      %v826 = vunpack.c.l.b16 %v735
      %v827 = vunpack.c.l.b16 %v736
      %v828 = vunpack.c.l.b16 %v737
      %v829 = vunpack.c.l.b16 %v738
      %v830 = vunpack.c.l.b16 %v739
      %v831 = vunpack.c.l.b16 %v740
      %v832 = vunpack.c.l.b16 %v741
      %v833 = vunpack.c.l.b16 %v742
      %v834 = vunpack.c.l.b16 %v743
      %v835 = vunpack.c.l.b16 %v744
      %v836 = vunpack.c.l.b16 %v745
      %v837 = vunpack.c.l.b16 %v746
      %v838 = vunpack.c.l.b16 %v747
      %v839 = vunpack.c.l.b16 %v748
      %v840 = vunpack.c.l.b16 %v749
      %v841 = vunpack.c.l.b16 %v750
      %v842 = vunpack.c.l.b16 %v751
      %v843 = vunpack.c.l.b16 %v752
      %v844 = vunpack.c.l.b16 %v753
      %v845 = vunpack.c.l.b16 %v754
      %v846 = vunpack.c.l.b16 %v755
      %v847 = vunpack.c.l.b16 %v756
      %v848 = vunpack.c.l.b16 %v757
      %v849 = vunpack.c.l.b16 %v758
      %v850 = vpack.c.b16 %v815, %v814
      %v851 = vpack.c.b16 %v817, %v816
      %v852 = vpack.c.b16 %v819, %v818
      %v853 = vpack.c.b16 %v821, %v820
      %v854 = vpack.c.b16 %v823, %v822
      %v855 = vpack.c.b16 %v825, %v824
      %v856 = vpack.c.b16 %v827, %v826
      %v857 = vpack.c.b16 %v829, %v828
      %v858 = vpack.c.b16 %v831, %v830
      %v859 = vpack.c.b16 %v833, %v832
      %v860 = vpack.c.b16 %v835, %v834
      %v861 = vpack.c.b16 %v837, %v836
      %v862 = vpack.c.b16 %v839, %v838
      %v863 = vpack.c.b16 %v841, %v840
      %v864 = vpack.c.b16 %v843, %v842
      %v865 = vpack.c.b16 %v845, %v844
      %v866 = vpack.c.b16 %v847, %v846
      %v867 = vpack.c.b16 %v849, %v848
      %vm886 = vcmask 261120
      %v888 = vsel %vm886, %v774, 0
      %890 = vmatprep.subr.bf16.mxu0 0
      %891 = vmatpush1.bf16.msra.mxu0 %v857
      %892 = vmatprep.subr.bf16.mxu0 0
      %893 = vmatpush1.bf16.msra.mxu0 %v856
      %894 = vmatprep.subr.bf16.mxu0 0
      %895 = vmatpush1.bf16.msra.mxu0 %v855
      %896 = vmatprep.subr.bf16.mxu0 0
      %897 = vmatpush1.bf16.msra.mxu0 %v854
      %898 = vmatprep.subr.bf16.mxu0 0
      %899 = vmatpush1.bf16.msra.mxu0 %v853
      %900 = vmatprep.subr.bf16.mxu0 0
      %901 = vmatpush1.bf16.msra.mxu0 %v852
      %902 = vmatprep.subr.bf16.mxu0 0
      %903 = vmatpush1.bf16.msra.mxu0 %v851
      %904 = vmatprep.subr.bf16.mxu0 0
      %905 = vmatpush1.bf16.msra.mxu0 %v850
      %906 = vmatprep.subr.bf16.mxu0 0
      %907 = vmatpush2.bf16.msra.mxu0 %v865
      %908 = vmatprep.subr.bf16.mxu0 0
      %909 = vmatpush2.bf16.msra.mxu0 %v864
      %910 = vmatprep.subr.bf16.mxu0 0
      %911 = vmatpush2.bf16.msra.mxu0 %v863
      %912 = vmatprep.subr.bf16.mxu0 0
      %913 = vmatpush2.bf16.msra.mxu0 %v862
      %914 = vmatprep.subr.bf16.mxu0 0
      %915 = vmatpush2.bf16.msra.mxu0 %v861
      %916 = vmatprep.subr.bf16.mxu0 0
      %917 = vmatpush2.bf16.msra.mxu0 %v860
      %918 = vmatprep.subr.bf16.mxu0 0
      %919 = vmatpush2.bf16.msra.mxu0 %v859
      %920 = vmatprep.subr.bf16.mxu0 0
      %921 = vmatpush2.bf16.msra.mxu0 %v858
      %922 = vmatprep.mubr.bf16.mxu0 %v775
      %923 = vmatmul.mubr.bf16.gmra.mxu0 %v767
      %v924 = vpop.f32.mrf.mxu0
      %v925 = vadd.f32 0.0, %v924
      %v926 = vpop.f32.mrf.mxu0
      %v927 = vpop.f32.mrf.mxu0
      %v928 = vpop.f32.mrf.mxu0
      %929 = vdwg.mxu0
      %930 = vmatprep.subr.bf16.mxu0 0
      %931 = vmatpush1.bf16.msra.mxu0 0
      %932 = vmatprep.subr.bf16.mxu0 0
      %933 = vmatpush1.bf16.msra.mxu0 0
      %934 = vmatprep.subr.bf16.mxu0 0
      %935 = vmatpush1.bf16.msra.mxu0 0
      %936 = vmatprep.subr.bf16.mxu0 0
      %937 = vmatpush1.bf16.msra.mxu0 0
      %938 = vmatprep.subr.bf16.mxu0 0
      %939 = vmatpush1.bf16.msra.mxu0 0
      %940 = vmatprep.subr.bf16.mxu0 0
      %941 = vmatpush1.bf16.msra.mxu0 0
      %942 = vmatprep.subr.bf16.mxu0 0
      %943 = vmatpush1.bf16.msra.mxu0 %v867
      %944 = vmatprep.subr.bf16.mxu0 0
      %945 = vmatpush1.bf16.msra.mxu0 %v866
      %946 = vmatprep.subr.bf16.mxu0 0
      %947 = vmatpush2.bf16.msra.mxu0 0
      %948 = vmatprep.subr.bf16.mxu0 0
      %949 = vmatpush2.bf16.msra.mxu0 0
      %950 = vmatprep.subr.bf16.mxu0 0
      %951 = vmatpush2.bf16.msra.mxu0 0
      %952 = vmatprep.subr.bf16.mxu0 0
      %953 = vmatpush2.bf16.msra.mxu0 0
      %954 = vmatprep.subr.bf16.mxu0 0
      %955 = vmatpush2.bf16.msra.mxu0 0
      %956 = vmatprep.subr.bf16.mxu0 0
      %957 = vmatpush2.bf16.msra.mxu0 0
      %958 = vmatprep.subr.bf16.mxu0 0
      %959 = vmatpush2.bf16.msra.mxu0 0
      %960 = vmatprep.subr.bf16.mxu0 0
      %961 = vmatpush2.bf16.msra.mxu0 0
      %962 = vmatprep.mubr.bf16.mxu0 0
      %963 = vmatmul.mubr.bf16.gmra.mxu0 %v888
      %v964 = vpop.f32.mrf.mxu0
      %v965 = vadd.f32 %v925, %v964
      %v966 = vpop.f32.mrf.mxu0
      %v967 = vpop.f32.mrf.mxu0
      %v968 = vpop.f32.mrf.mxu0
      %969 = vdwg.mxu0
      %v970 = vld [vmem:[%s3] sm:$0x1]
      %v972 = vlaneseq
      %v973 = vshrl.u32 %v972, 7
      %v974 = vsub.s32 0, %v973
      %v975 = vrot.slane %v970, %v974
      %v977 = vmul.f32 %v965, %v975
      %v978 = vld [vmem:[%s4] sm:$0x1]
      %v980 = vlaneseq
      %v981 = vshrl.u32 %v980, 7
      %v982 = vsub.s32 0, %v981
      %v983 = vrot.slane %v978, %v982
      %v985 = vadd.f32 %v977, %v983
      %v986 = vmax.f32 %v985, 0.0
      %v987 = vld [vmem:[%s5] sm:$0x1]
      %v989 = vlaneseq
      %v990 = vshrl.u32 %v989, 7
      %v991 = vsub.s32 0, %v990
      %v992 = vrot.slane %v987, %v991
      %v994 = vmul.f32 %v986, %v992
      %vm995 = vcmask 60416
      %v996 = vsel %vm995, %v994, 0.0
      %997 = vadd.xlane.f32.xlu0 %v996
      %v998 = vpop.xlane.xlu0 %997
      %v999 = vld [vmem:[#allocation6] sm:$0x1]
      %v1001 = vlaneseq
      %v1002 = vshrl.u32 %v1001, 7
      %v1003 = vsub.s32 0, %v1002
      %v1004 = vrot.slane %v999, %v1003
      %v1006 = vadd.f32 %v998, %v1004
      %v1009 = vunpack.c.l.s4 1983009808
      %v1010 = vunpack.c.0.s8 %v1009
      %v1011 = vlaneseq
      %v1012 = vshrl.u32 %v1011, 7
      %v1013 = vsub.s32 %v1010, %v1012
      %v1014 = vrot.slane %v1006, %v1013
      %v1015 = vcombine.high %v1014, %v1014
      %v1018 = vpack.c.bf16 %v1014, %v1014
      %v1019 = vpack.c.bf16 %v1015, %v1015
      %v1023 = vunpack.c.l.s4 1966171168
      %v1024 = vunpack.c.0.s8 %v1023
      %v1025 = vlaneseq
      %v1026 = vshrl.u32 %v1025, 7
      %v1027 = vsub.s32 %v1024, %v1026
      %v1028 = vrot.slane %v1018, %v1027
      %v1030 = vunpack.c.l.s4 1966171168
      %v1031 = vunpack.c.0.s8 %v1030
      %v1032 = vlaneseq
      %v1033 = vshrl.u32 %v1032, 7
      %v1034 = vsub.s32 %v1031, %v1033
      %v1035 = vrot.slane %v1028, %v1034
      %v1037 = vunpack.c.l.s4 1966171168
      %v1038 = vunpack.c.0.s8 %v1037
      %v1039 = vlaneseq
      %v1040 = vshrl.u32 %v1039, 7
      %v1041 = vsub.s32 %v1038, %v1040
      %v1042 = vrot.slane %v1019, %v1041
      %v1044 = vunpack.c.l.s4 1966171168
      %v1045 = vunpack.c.0.s8 %v1044
      %v1046 = vlaneseq
      %v1047 = vshrl.u32 %v1046, 7
      %v1048 = vsub.s32 %v1045, %v1047
      %v1049 = vrot.slane %v1042, %v1048
      %v1051 = vunpack.c.l.s4 1935823168
      %v1052 = vunpack.c.0.s8 %v1051
      %v1053 = vlaneseq
      %v1054 = vshrl.u32 %v1053, 7
      %v1055 = vsub.s32 %v1052, %v1054
      %v1056 = vrot.slane %v1035, %v1055
      %v1058 = vunpack.c.l.s4 1935823168
      %v1059 = vunpack.c.0.s8 %v1058
      %v1060 = vlaneseq
      %v1061 = vshrl.u32 %v1060, 7
      %v1062 = vsub.s32 %v1059, %v1061
      %v1063 = vrot.slane %v1056, %v1062
      %v1065 = vunpack.c.l.s4 1935823168
      %v1066 = vunpack.c.0.s8 %v1065
      %v1067 = vlaneseq
      %v1068 = vshrl.u32 %v1067, 7
      %v1069 = vsub.s32 %v1066, %v1068
      %v1070 = vrot.slane %v1049, %v1069
      %v1072 = vunpack.c.l.s4 1935823168
      %v1073 = vunpack.c.0.s8 %v1072
      %v1074 = vlaneseq
      %v1075 = vshrl.u32 %v1074, 7
      %v1076 = vsub.s32 %v1073, %v1075
      %v1077 = vrot.slane %v1070, %v1076
      %v1078 = vunpack.c.l.b16 %v1063
      %v1079 = vunpack.c.l.b16 %v1077
      %1080 = vset.pattern.permute.xlu0 0
      %1081 = vperm.xlu0 %1080, %v1078
      %v1082 = vpop.permute.xlu0 %1081
      %1083 = vset.pattern.permute.xlu0 0
      %1084 = vperm.xlu0 %1083, %v1079
      %v1085 = vpop.permute.xlu0 %1084
      %v1086 = vlaneseq
      %v1087 = vand.u32 %v1086, 127
      %v1088 = vlaneseq
      %v1089 = vshrl.u32 %v1088, 7
      %v1090 = vsub.s32 %v1087, %v1089
      %v1091 = vrot.slane %v1082, %v1090
      %v1092 = vlaneseq
      %v1093 = vshrl.u32 %v1092, 7
      %v1094 = vsub.s32 %v1087, %v1093
      %v1095 = vrot.slane %v1085, %v1094
      %vm1096 = vcmask 1041409
      %v1097 = vsel %vm1096, %v1095, %v1091
      %v1098 = vpack.c.b16 %v1097, %v1097
      %v1100 = vunpack.c.l.s4 1966171168
      %v1101 = vunpack.c.0.s8 %v1100
      %v1102 = vlaneseq
      %v1103 = vshrl.u32 %v1102, 7
      %v1104 = vsub.s32 %v1101, %v1103
      %v1105 = vrot.slane %v1098, %v1104
      %v1107 = vunpack.c.l.s4 1966171168
      %v1108 = vunpack.c.0.s8 %v1107
      %v1109 = vlaneseq
      %v1110 = vshrl.u32 %v1109, 7
      %v1111 = vsub.s32 %v1108, %v1110
      %v1112 = vrot.slane %v1105, %v1111
      %vm1114 = vcmask 8192
      %1115 = vst.msk [vmem:[%s464] sm:$0x1] %vm1114, %v1112
      %vm1116 = vcmask 128000
      %1117 = vst.msk [vmem:[#allocation4] sm:$0x3f] %vm1116, 0.0
      %s1118 = scalar_lea.vmem [#allocation4], 40
      %1119 = vst.msk [vmem:[%s1118] sm:$0x3f] %vm1116, 0.0
      %vm1120 = vcmask 122880
      %1121 = vst.msk [vmem:[#allocation4] sm:$0x1] %vm1120, 0.0
      %1122 = vst.msk [vmem:[#allocation4 + $0x8] sm:$0x1] %vm1120, 0.0
      %1123 = vst.msk [vmem:[#allocation4 + $0x10] sm:$0x1] %vm1120, 0.0
      %1124 = vst.msk [vmem:[#allocation4 + $0x18] sm:$0x1] %vm1120, 0.0
      %1125 = vst.msk [vmem:[#allocation4 + $0x20] sm:$0x1] %vm1120, 0.0
      %1126 = vst.msk [vmem:[#allocation4 + $0x28] sm:$0x1] %vm1120, 0.0
      %1127 = vst.msk [vmem:[#allocation4 + $0x5] sm:$0x1] %vm1120, 0.0
      %1128 = vst.msk [vmem:[#allocation4 + $0xd] sm:$0x1] %vm1120, 0.0
      %1129 = vst.msk [vmem:[#allocation4 + $0x15] sm:$0x1] %vm1120, 0.0
      %1130 = vst.msk [vmem:[#allocation4 + $0x1d] sm:$0x1] %vm1120, 0.0
      %1131 = vst.msk [vmem:[#allocation4 + $0x25] sm:$0x1] %vm1120, 0.0
      %1132 = vst.msk [vmem:[#allocation4 + $0x2d] sm:$0x1] %vm1120, 0.0
      %v1133 = vld [vmem:[%s461] sm:$0x3]
      %v1134 = vld [vmem:[%s461 + $0x2] sm:$0x3]
      %v1135 = vld [vmem:[%s461 + $0x4] sm:$0x3]
      %v1136 = vld [vmem:[%s461 + $0x6] sm:$0x3]
      %v1137 = vunpack.c.l.bf16 %v1133
      %v1138 = vunpack.c.l.bf16 %v1134
      %v1139 = vunpack.c.l.bf16 %v1135
      %v1140 = vunpack.c.l.bf16 %v1136
      %s1141 = scalar_lea.vmem [#allocation4], 8
      %vm1142 = vcmask 125952
      %1143 = vst.msk [vmem:[%s1141 + $0x1] sm:$0xf] %vm1142, %v1137
      %1144 = vst.msk [vmem:[%s1141 + $0x9] sm:$0xf] %vm1142, %v1138
      %1145 = vst.msk [vmem:[%s1141 + $0x11] sm:$0xf] %vm1142, %v1139
      %1146 = vst.msk [vmem:[%s1141 + $0x19] sm:$0xf] %vm1142, %v1140
      %v1147 = vld [vmem:[#allocation4] sm:$0x3f]
      %v1148 = vld [vmem:[#allocation4 + $0x8] sm:$0x3f]
      %v1149 = vld [vmem:[#allocation4 + $0x10] sm:$0x3f]
      %v1150 = vld [vmem:[#allocation4 + $0x18] sm:$0x3f]
      %v1151 = vld [vmem:[#allocation4 + $0x20] sm:$0x3f]
      %v1152 = vld [vmem:[#allocation4 + $0x28] sm:$0x3f]
      %v1157 = vcombine.low %v1147, %v1148
      %v1158 = vcombine.low %v1149, %v1150
      %v1161 = vpack.c.bf16 %v1158, %v1157
      %v1163 = vunpack.c.l.b16 %v1161
      %v1164 = vunpack.c.h.b16 %v1161
      %v1165 = vpack.c.b16 %v1163, %v1163
      %v1166 = vpack.c.b16 %v1164, %v1164
      %1169 = vst.msk [vmem:[#allocation5] sm:$0xf] %vm1142, %v1165
      %1170 = vst.msk [vmem:[#allocation5 + $0x8] sm:$0xf] %vm1142, %v1166
      %v1171 = vcombine.high %v1147, %v1147
      %v1172 = vcombine.high %v1148, %v1148
      %v1173 = vcombine.high %v1149, %v1149
      %v1174 = vcombine.high %v1150, %v1150
      %vm1175 = vcmask 1042432
      %vm1176 = vcmask 1046532
      %vm1177 = vmor %vm1175, %vm1176
      %v1178 = vrot.slane %v1147, 5
      %v1179 = vrot.slane %v1178, 4
      %v1180 = vrot.slane %v1171, 5
      %v1181 = vsel %vm1177, %v1179, %v1180
      %v1182 = vrot.slane %v1148, 5
      %v1183 = vrot.slane %v1182, 4
      %v1184 = vrot.slane %v1172, 5
      %v1185 = vsel %vm1177, %v1183, %v1184
      %v1186 = vrot.slane %v1149, 5
      %v1187 = vrot.slane %v1186, 4
      %v1188 = vrot.slane %v1173, 5
      %v1189 = vsel %vm1177, %v1187, %v1188
      %v1190 = vrot.slane %v1150, 5
      %v1191 = vrot.slane %v1190, 4
      %v1192 = vrot.slane %v1174, 5
      %v1193 = vsel %vm1177, %v1191, %v1192
      %v1194 = vcombine.low %v1181, %v1185
      %v1195 = vcombine.low %v1189, %v1193
      %v1198 = vpack.c.bf16 %v1195, %v1194
      %v1200 = vunpack.c.l.b16 %v1198
      %v1201 = vunpack.c.h.b16 %v1198
      %v1202 = vpack.c.b16 %v1200, %v1200
      %v1203 = vpack.c.b16 %v1201, %v1201
      %1204 = vrot.lane.b32.xlu0 %v1202, 16
      %v1205 = vpop.permute.xlu0 %1204
      %1206 = vrot.lane.b32.xlu0 %v1203, 16
      %v1207 = vpop.permute.xlu0 %1206
      %vm1210 = vcmask 257152
      %1211 = vst.msk [vmem:[#allocation5] sm:$0xf] %vm1210, %v1205
      %1212 = vst.msk [vmem:[#allocation5 + $0x8] sm:$0xf] %vm1210, %v1207
      %vm1213 = vcmask 1041408
      %vm1214 = vcmask 1045508
      %vm1215 = vmor %vm1213, %vm1214
      %v1216 = vrot.slane %v1147, 6
      %v1217 = vrot.slane %v1216, 4
      %v1218 = vrot.slane %v1171, 6
      %v1219 = vsel %vm1215, %v1217, %v1218
      %v1220 = vrot.slane %v1148, 6
      %v1221 = vrot.slane %v1220, 4
      %v1222 = vrot.slane %v1172, 6
      %v1223 = vsel %vm1215, %v1221, %v1222
      %v1224 = vrot.slane %v1149, 6
      %v1225 = vrot.slane %v1224, 4
      %v1226 = vrot.slane %v1173, 6
      %v1227 = vsel %vm1215, %v1225, %v1226
      %v1228 = vrot.slane %v1150, 6
      %v1229 = vrot.slane %v1228, 4
      %v1230 = vrot.slane %v1174, 6
      %v1231 = vsel %vm1215, %v1229, %v1230
      %v1232 = vcombine.low %v1219, %v1223
      %v1233 = vcombine.low %v1227, %v1231
      %v1236 = vpack.c.bf16 %v1233, %v1232
      %v1238 = vunpack.c.l.b16 %v1236
      %v1239 = vunpack.c.h.b16 %v1236
      %v1240 = vpack.c.b16 %v1238, %v1238
      %v1241 = vpack.c.b16 %v1239, %v1239
      %1242 = vrot.lane.b32.xlu0 %v1240, 32
      %v1243 = vpop.permute.xlu0 %1242
      %1244 = vrot.lane.b32.xlu0 %v1241, 32
      %v1245 = vpop.permute.xlu0 %1244
      %vm1248 = vcmask 388352
      %1249 = vst.msk [vmem:[#allocation5] sm:$0xf] %vm1248, %v1243
      %1250 = vst.msk [vmem:[#allocation5 + $0x8] sm:$0xf] %vm1248, %v1245
      %v1252 = vcombine.low %v1148, %v1149
      %v1253 = vcombine.low %v1150, %v1151
      %v1256 = vpack.c.bf16 %v1253, %v1252
      %v1258 = vunpack.c.l.b16 %v1256
      %v1259 = vunpack.c.h.b16 %v1256
      %v1260 = vpack.c.b16 %v1258, %v1258
      %v1261 = vpack.c.b16 %v1259, %v1259
      %1262 = vrot.lane.b32.xlu0 %v1260, 48
      %v1263 = vpop.permute.xlu0 %1262
      %1264 = vrot.lane.b32.xlu0 %v1261, 48
      %v1265 = vpop.permute.xlu0 %1264
      %vm1268 = vcmask 519552
      %1269 = vst.msk [vmem:[#allocation5] sm:$0xf] %vm1268, %v1263
      %1270 = vst.msk [vmem:[#allocation5 + $0x8] sm:$0xf] %vm1268, %v1265
      %v1271 = vcombine.high %v1151, %v1151
      %v1272 = vrot.slane %v1151, 5
      %v1273 = vrot.slane %v1272, 4
      %v1274 = vrot.slane %v1271, 5
      %v1275 = vsel %vm1177, %v1273, %v1274
      %v1276 = vcombine.low %v1185, %v1189
      %v1277 = vcombine.low %v1193, %v1275
      %v1280 = vpack.c.bf16 %v1277, %v1276
      %v1282 = vunpack.c.l.b16 %v1280
      %v1283 = vunpack.c.h.b16 %v1280
      %v1284 = vpack.c.b16 %v1282, %v1282
      %v1285 = vpack.c.b16 %v1283, %v1283
      %1286 = vrot.lane.b32.xlu0 %v1284, 64
      %v1287 = vpop.permute.xlu0 %1286
      %1288 = vrot.lane.b32.xlu0 %v1285, 64
      %v1289 = vpop.permute.xlu0 %1288
      %vm1292 = vcmask 650752
      %1293 = vst.msk [vmem:[#allocation5] sm:$0xf] %vm1292, %v1287
      %1294 = vst.msk [vmem:[#allocation5 + $0x8] sm:$0xf] %vm1292, %v1289
      %v1295 = vrot.slane %v1151, 6
      %v1296 = vrot.slane %v1295, 4
      %v1297 = vrot.slane %v1271, 6
      %v1298 = vsel %vm1215, %v1296, %v1297
      %v1299 = vcombine.low %v1223, %v1227
      %v1300 = vcombine.low %v1231, %v1298
      %v1303 = vpack.c.bf16 %v1300, %v1299
      %v1305 = vunpack.c.l.b16 %v1303
      %v1306 = vunpack.c.h.b16 %v1303
      %v1307 = vpack.c.b16 %v1305, %v1305
      %v1308 = vpack.c.b16 %v1306, %v1306
      %1309 = vrot.lane.b32.xlu0 %v1307, 80
      %v1310 = vpop.permute.xlu0 %1309
      %1311 = vrot.lane.b32.xlu0 %v1308, 80
      %v1312 = vpop.permute.xlu0 %1311
      %vm1315 = vcmask 781952
      %1316 = vst.msk [vmem:[#allocation5] sm:$0xf] %vm1315, %v1310
      %1317 = vst.msk [vmem:[#allocation5 + $0x8] sm:$0xf] %vm1315, %v1312
      %v1319 = vcombine.low %v1151, %v1152
      %v1321 = vpack.c.bf16 %v1319, %v1158
      %v1323 = vunpack.c.l.b16 %v1321
      %v1324 = vunpack.c.h.b16 %v1321
      %v1325 = vpack.c.b16 %v1323, %v1323
      %v1326 = vpack.c.b16 %v1324, %v1324
      %1327 = vrot.lane.b32.xlu0 %v1325, 96
      %v1328 = vpop.permute.xlu0 %1327
      %1329 = vrot.lane.b32.xlu0 %v1326, 96
      %v1330 = vpop.permute.xlu0 %1329
      %vm1333 = vcmask 913152
      %1334 = vst.msk [vmem:[#allocation5] sm:$0xf] %vm1333, %v1328
      %1335 = vst.msk [vmem:[#allocation5 + $0x8] sm:$0xf] %vm1333, %v1330
      %v1336 = vcombine.high %v1152, %v1152
      %v1337 = vrot.slane %v1152, 5
      %v1338 = vrot.slane %v1337, 4
      %v1339 = vrot.slane %v1336, 5
      %v1340 = vsel %vm1177, %v1338, %v1339
      %v1341 = vcombine.low %v1275, %v1340
      %v1343 = vpack.c.bf16 %v1341, %v1195
      %v1345 = vunpack.c.l.b16 %v1343
      %v1346 = vunpack.c.h.b16 %v1343
      %v1347 = vpack.c.b16 %v1345, %v1345
      %v1348 = vpack.c.b16 %v1346, %v1346
      %1349 = vrot.lane.b32.xlu0 %v1347, 112
      %v1350 = vpop.permute.xlu0 %1349
      %1351 = vrot.lane.b32.xlu0 %v1348, 112
      %v1352 = vpop.permute.xlu0 %1351
      %vm1355 = vcmask 1044352
      %1356 = vst.msk [vmem:[#allocation5] sm:$0xf] %vm1355, %v1350
      %1357 = vst.msk [vmem:[#allocation5 + $0x8] sm:$0xf] %vm1355, %v1352
      %v1358 = vrot.slane %v1152, 6
      %v1359 = vrot.slane %v1358, 4
      %v1360 = vrot.slane %v1336, 6
      %v1361 = vsel %vm1215, %v1359, %v1360
      %v1362 = vcombine.low %v1298, %v1361
      %v1364 = vpack.c.bf16 %v1362, %v1233
      %v1366 = vunpack.c.l.b16 %v1364
      %v1367 = vunpack.c.h.b16 %v1364
      %v1368 = vpack.c.b16 %v1366, %v1366
      %v1369 = vpack.c.b16 %v1367, %v1367
      %1372 = vst.msk [vmem:[#allocation5 + $0x4] sm:$0xf] %vm1142, %v1368
      %1373 = vst.msk [vmem:[#allocation5 + $0xc] sm:$0xf] %vm1142, %v1369
      %v1374 = vld [vmem:[#allocation5] sm:$0xff]
      %v1375 = vld [vmem:[#allocation5 + $0x8] sm:$0xff]
      %v1376 = vld [vmem:[%s7] sm:$0xf]
      %v1377 = vld [vmem:[%s7 + $0x4] sm:$0xf]
      %v1378 = vld [vmem:[%s7 + $0x8] sm:$0xf]
      %v1379 = vld [vmem:[%s7 + $0xc] sm:$0xf]
      %v1380 = vld [vmem:[%s7 + $0x10] sm:$0xf]
      %v1381 = vld [vmem:[%s7 + $0x14] sm:$0xf]
      %v1382 = vld [vmem:[%s7 + $0x18] sm:$0xf]
      %v1383 = vld [vmem:[%s7 + $0x1c] sm:$0xf]
      %v1384 = vld [vmem:[%s7 + $0x20] sm:$0xf]
      %v1385 = vld [vmem:[%s7 + $0x24] sm:$0xf]
      %v1386 = vld [vmem:[%s7 + $0x28] sm:$0xf]
      %v1387 = vld [vmem:[%s7 + $0x2c] sm:$0xf]
      %v1388 = vld [vmem:[%s7 + $0x30] sm:$0xf]
      %v1389 = vld [vmem:[%s7 + $0x34] sm:$0xf]
      %v1390 = vld [vmem:[%s7 + $0x38] sm:$0xf]
      %v1391 = vld [vmem:[%s7 + $0x3c] sm:$0xf]
      %v1392 = vld [vmem:[%s7 + $0x40] sm:$0xf]
      %v1393 = vld [vmem:[%s7 + $0x44] sm:$0xf]
      %v1396 = vunpack.c.l.b16 %v1374
      %v1397 = vunpack.c.h.b16 %v1374
      %v1398 = vunpack.c.l.b16 %v1375
      %v1399 = vunpack.c.h.b16 %v1375
      %v1400 = vpack.c.b16 %v1398, %v1396
      %v1401 = vpack.c.b16 %v1399, %v1397
      %v1421 = vunpack.c.l.b16 %v1376
      %v1422 = vunpack.c.l.b16 %v1377
      %v1423 = vunpack.c.l.b16 %v1378
      %v1424 = vunpack.c.l.b16 %v1379
      %v1425 = vunpack.c.l.b16 %v1380
      %v1426 = vunpack.c.l.b16 %v1381
      %v1427 = vunpack.c.l.b16 %v1382
      %v1428 = vunpack.c.l.b16 %v1383
      %v1429 = vunpack.c.l.b16 %v1384
      %v1430 = vunpack.c.l.b16 %v1385
      %v1431 = vunpack.c.l.b16 %v1386
      %v1432 = vunpack.c.l.b16 %v1387
      %v1433 = vunpack.c.l.b16 %v1388
      %v1434 = vunpack.c.l.b16 %v1389
      %v1435 = vunpack.c.l.b16 %v1390
      %v1436 = vunpack.c.l.b16 %v1391
      %v1437 = vunpack.c.l.b16 %v1392
      %v1438 = vunpack.c.l.b16 %v1393
      %v1439 = vpack.c.b16 %v1422, %v1421
      %v1440 = vpack.c.b16 %v1424, %v1423
      %v1441 = vpack.c.b16 %v1426, %v1425
      %v1442 = vpack.c.b16 %v1428, %v1427
      %v1443 = vpack.c.b16 %v1430, %v1429
      %v1444 = vpack.c.b16 %v1432, %v1431
      %v1445 = vpack.c.b16 %v1434, %v1433
      %v1446 = vpack.c.b16 %v1436, %v1435
      %v1447 = vpack.c.b16 %v1438, %v1437
      %vm1457 = vcmask 130048
      %v1459 = vsel %vm1457, %v1401, 0
      %1461 = vmatprep.subr.bf16.mxu0 0
      %1462 = vmatpush1.bf16.msra.mxu0 %v1446
      %1463 = vmatprep.subr.bf16.mxu0 0
      %1464 = vmatpush1.bf16.msra.mxu0 %v1445
      %1465 = vmatprep.subr.bf16.mxu0 0
      %1466 = vmatpush1.bf16.msra.mxu0 %v1444
      %1467 = vmatprep.subr.bf16.mxu0 0
      %1468 = vmatpush1.bf16.msra.mxu0 %v1443
      %1469 = vmatprep.subr.bf16.mxu0 0
      %1470 = vmatpush1.bf16.msra.mxu0 %v1442
      %1471 = vmatprep.subr.bf16.mxu0 0
      %1472 = vmatpush1.bf16.msra.mxu0 %v1441
      %1473 = vmatprep.subr.bf16.mxu0 0
      %1474 = vmatpush1.bf16.msra.mxu0 %v1440
      %1475 = vmatprep.subr.bf16.mxu0 0
      %1476 = vmatpush1.bf16.msra.mxu0 %v1439
      %1477 = vmatprep.subr.bf16.mxu0 0
      %1478 = vmatpush2.bf16.msra.mxu0 0
      %1479 = vmatprep.subr.bf16.mxu0 0
      %1480 = vmatpush2.bf16.msra.mxu0 0
      %1481 = vmatprep.subr.bf16.mxu0 0
      %1482 = vmatpush2.bf16.msra.mxu0 0
      %1483 = vmatprep.subr.bf16.mxu0 0
      %1484 = vmatpush2.bf16.msra.mxu0 0
      %1485 = vmatprep.subr.bf16.mxu0 0
      %1486 = vmatpush2.bf16.msra.mxu0 0
      %1487 = vmatprep.subr.bf16.mxu0 0
      %1488 = vmatpush2.bf16.msra.mxu0 0
      %1489 = vmatprep.subr.bf16.mxu0 0
      %1490 = vmatpush2.bf16.msra.mxu0 0
      %1491 = vmatprep.subr.bf16.mxu0 0
      %1492 = vmatpush2.bf16.msra.mxu0 %v1447
      %1493 = vmatprep.mubr.bf16.mxu0 %v1459
      %1494 = vmatmul.mubr.bf16.gmra.mxu0 %v1400
      %v1495 = vpop.f32.mrf.mxu0
      %v1496 = vadd.f32 0.0, %v1495
      %v1497 = vpop.f32.mrf.mxu0
      %v1498 = vpop.f32.mrf.mxu0
      %v1499 = vadd.f32 0.0, %v1498
      %v1500 = vpop.f32.mrf.mxu0
      %1501 = vdwg.mxu0
      %v1502 = vld [vmem:[%s8] sm:$0x1]
      %v1504 = vlaneseq
      %v1505 = vshrl.u32 %v1504, 7
      %v1506 = vsub.s32 0, %v1505
      %v1507 = vrot.slane %v1502, %v1506
      %v1509 = vmul.f32 %v1496, %v1507
      %v1510 = vmul.f32 %v1499, %v1507
      %v1511 = vld [vmem:[%s9] sm:$0x1]
      %v1513 = vlaneseq
      %v1514 = vshrl.u32 %v1513, 7
      %v1515 = vsub.s32 0, %v1514
      %v1516 = vrot.slane %v1511, %v1515
      %v1518 = vadd.f32 %v1509, %v1516
      %v1519 = vadd.f32 %v1510, %v1516
      %v1520 = vmax.f32 %v1518, 0.0
      %v1521 = vmax.f32 %v1519, 0.0
      %v1522 = vld [vmem:[%s10] sm:$0x1]
      %v1524 = vlaneseq
      %v1525 = vshrl.u32 %v1524, 7
      %v1526 = vsub.s32 0, %v1525
      %v1527 = vrot.slane %v1522, %v1526
      %v1529 = vmul.f32 %v1520, %v1527
      %v1530 = vmul.f32 %v1521, %v1527
      %vm1531 = vcmask 31744
      %v1532 = vsel %vm1531, %v1529, 0.0
      %1533 = vadd.xlane.f32.xlu0 %v1532
      %v1534 = vpop.xlane.xlu0 %1533
      %v1535 = vsel %vm1531, %v1530, 0.0
      %1536 = vadd.xlane.f32.xlu0 %v1535
      %v1537 = vpop.xlane.xlu0 %1536
      %v1538 = vld [vmem:[#allocation7] sm:$0x1]
      %v1540 = vlaneseq
      %v1541 = vshrl.u32 %v1540, 7
      %v1542 = vsub.s32 0, %v1541
      %v1543 = vrot.slane %v1538, %v1542
      %v1545 = vadd.f32 %v1534, %v1543
      %v1546 = vadd.f32 %v1537, %v1543
      %v1549 = vcombine.high %v1545, %v1545
      %v1550 = vcombine.high %v1546, %v1546
      %v1553 = vpack.c.bf16 %v1545, %v1545
      %v1554 = vpack.c.bf16 %v1549, %v1549
      %v1555 = vpack.c.bf16 %v1546, %v1546
      %v1556 = vpack.c.bf16 %v1550, %v1550
      %v1562 = vunpack.c.l.s4 1983009808
      %v1563 = vunpack.c.0.s8 %v1562
      %v1564 = vlaneseq
      %v1565 = vshrl.u32 %v1564, 7
      %v1566 = vsub.s32 %v1563, %v1565
      %v1567 = vrot.slane %v1553, %v1566
      %v1569 = vunpack.c.l.s4 1983009808
      %v1570 = vunpack.c.0.s8 %v1569
      %v1571 = vlaneseq
      %v1572 = vshrl.u32 %v1571, 7
      %v1573 = vsub.s32 %v1570, %v1572
      %v1574 = vrot.slane %v1554, %v1573
      %v1576 = vunpack.c.l.s4 1983009808
      %v1577 = vunpack.c.0.s8 %v1576
      %v1578 = vlaneseq
      %v1579 = vshrl.u32 %v1578, 7
      %v1580 = vsub.s32 %v1577, %v1579
      %v1581 = vrot.slane %v1555, %v1580
      %v1583 = vunpack.c.l.s4 1983009808
      %v1584 = vunpack.c.0.s8 %v1583
      %v1585 = vlaneseq
      %v1586 = vshrl.u32 %v1585, 7
      %v1587 = vsub.s32 %v1584, %v1586
      %v1588 = vrot.slane %v1556, %v1587
      %v1590 = vunpack.c.l.s4 1983009808
      %v1591 = vunpack.c.0.s8 %v1590
      %v1592 = vlaneseq
      %v1593 = vshrl.u32 %v1592, 7
      %v1594 = vsub.s32 %v1591, %v1593
      %v1595 = vrot.slane %v1567, %v1594
      %v1597 = vunpack.c.l.s4 1983009808
      %v1598 = vunpack.c.0.s8 %v1597
      %v1599 = vlaneseq
      %v1600 = vshrl.u32 %v1599, 7
      %v1601 = vsub.s32 %v1598, %v1600
      %v1602 = vrot.slane %v1574, %v1601
      %v1604 = vunpack.c.l.s4 1983009808
      %v1605 = vunpack.c.0.s8 %v1604
      %v1606 = vlaneseq
      %v1607 = vshrl.u32 %v1606, 7
      %v1608 = vsub.s32 %v1605, %v1607
      %v1609 = vrot.slane %v1581, %v1608
      %v1611 = vunpack.c.l.s4 1983009808
      %v1612 = vunpack.c.0.s8 %v1611
      %v1613 = vlaneseq
      %v1614 = vshrl.u32 %v1613, 7
      %v1615 = vsub.s32 %v1612, %v1614
      %v1616 = vrot.slane %v1588, %v1615
      %v1617 = vunpack.c.l.b16 %v1595
      %v1618 = vunpack.c.l.b16 %v1602
      %v1619 = vunpack.c.l.b16 %v1609
      %v1620 = vunpack.c.l.b16 %v1616
      %1621 = vset.pattern.permute.xlu0 0
      %1622 = vperm.xlu0 %1621, %v1617
      %v1623 = vpop.permute.xlu0 %1622
      %1624 = vset.pattern.permute.xlu0 0
      %1625 = vperm.xlu0 %1624, %v1618
      %v1626 = vpop.permute.xlu0 %1625
      %1627 = vset.pattern.permute.xlu0 0
      %1628 = vperm.xlu0 %1627, %v1619
      %v1629 = vpop.permute.xlu0 %1628
      %1630 = vset.pattern.permute.xlu0 0
      %1631 = vperm.xlu0 %1630, %v1620
      %v1632 = vpop.permute.xlu0 %1631
      %v1633 = vlaneseq
      %v1634 = vshrl.u32 %v1633, 7
      %v1635 = vsub.s32 %v1087, %v1634
      %v1636 = vrot.slane %v1623, %v1635
      %v1637 = vlaneseq
      %v1638 = vshrl.u32 %v1637, 7
      %v1639 = vsub.s32 %v1087, %v1638
      %v1640 = vrot.slane %v1626, %v1639
      %v1641 = vlaneseq
      %v1642 = vshrl.u32 %v1641, 7
      %v1643 = vsub.s32 %v1087, %v1642
      %v1644 = vrot.slane %v1629, %v1643
      %v1645 = vlaneseq
      %v1646 = vshrl.u32 %v1645, 7
      %v1647 = vsub.s32 %v1087, %v1646
      %v1648 = vrot.slane %v1632, %v1647
      %v1649 = vsel %vm1096, %v1640, %v1636
      %v1650 = vsel %vm525, %v1644, %v1649
      %vm1651 = vcmask 1043459
      %v1652 = vsel %vm1651, %v1648, %v1650
      %v1653 = vpack.c.b16 %v1652, %v1652
      %v1655 = vunpack.c.l.s4 1983009808
      %v1656 = vunpack.c.0.s8 %v1655
      %v1657 = vlaneseq
      %v1658 = vshrl.u32 %v1657, 7
      %v1659 = vsub.s32 %v1656, %v1658
      %v1660 = vrot.slane %v1653, %v1659
      %vm1662 = vcmask 25600
      %1663 = vst.msk [vmem:[%s468] sm:$0x3] %vm1662, %v1660
      %p1664 = scmp.lt.s32.totalorder %s29, 1
      %s1665 = scalar_select %p1664, %s29, 1
      %s1666 = scalar_lea.vmem %s12, %s1665
      %p1667 = scmp.lt.s32.totalorder %s29, 1
      %s1668 = scalar_select %p1667, %s29, 1
      %s1669 = smul.addr %s1668, 2
      %s1670 = scalar_lea.vmem %s13, %s1669
      // Predicated region
      $region69: #{efficientnet_seg_forward.6} parent=67 // pred_check
        %p1671 = pneg %p309
      $region70: #{efficientnet_seg_forward.6} parent=67 // pred_check_branch
        %1673 = sbr.rel (%p1671) target = $region72
      $region71: #{efficientnet_seg_forward.6} parent=67 // pred_region
        _
      $region72: #{efficientnet_seg_forward.6} parent=67 // pred_fallthru
        _
      // Predicated region
      $region73: #{efficientnet_seg_forward.6} parent=67 // pred_check
        %p1674 = pneg %p335
      $region74: #{efficientnet_seg_forward.6} parent=67 // pred_check_branch
        %1676 = sbr.rel (%p1674) target = $region76
      $region75: #{efficientnet_seg_forward.6} parent=67 // pred_region
        _
      $region76: #{efficientnet_seg_forward.6} parent=67 // pred_fallthru
        _
    $region68: #{efficientnet_seg_forward.6} parent=5 // pred_fallthru
      _
    %p1677 = scmp.le.s32.totalorder 2, %s24
    // Predicated region
    $region77: #{efficientnet_seg_forward.6} parent=5 // pred_check
      %p1678 = pneg %p1677
    $region78: #{efficientnet_seg_forward.6} parent=5 // pred_check_branch
      %1680 = sbr.rel (%p1678) target = $region80
    $region79: #{efficientnet_seg_forward.6} parent=5 // pred_region
      %s1681 = ssub.s32 %s24, 2
      // Predicated region
      $region81: #{efficientnet_seg_forward.6} parent=79 // pred_check
        %p1682 = pneg %p315
      $region82: #{efficientnet_seg_forward.6} parent=79 // pred_check_branch
        %1684 = sbr.rel (%p1682) target = $region84
      $region83: #{efficientnet_seg_forward.6} parent=79 // pred_region
        %p1685 = scmp.lt.s32.totalorder %s30, 1
        %s1686 = scalar_select %p1685, %s30, 1
        %s1687 = scalar_lea.vmem %s12, %s1686
      $region84: #{efficientnet_seg_forward.6} parent=79 // pred_fallthru
        _
      // Predicated region
      $region85: #{efficientnet_seg_forward.6} parent=79 // pred_check
        %p1688 = pneg %p341
      $region86: #{efficientnet_seg_forward.6} parent=79 // pred_check_branch
        %1690 = sbr.rel (%p1688) target = $region88
      $region87: #{efficientnet_seg_forward.6} parent=79 // pred_region
        %p1691 = scmp.lt.s32.totalorder %s30, 1
        %s1692 = scalar_select %p1691, %s30, 1
        %s1693 = smul.addr %s1692, 2
        %s1694 = scalar_lea.vmem %s13, %s1693
      $region88: #{efficientnet_seg_forward.6} parent=79 // pred_fallthru
        _
    $region80: #{efficientnet_seg_forward.6} parent=5 // pred_fallthru
      _
  $region6: #{efficientnet_seg_forward.6} parent=0 // loop_footer
    %s28 = sadd.s32 1, %s24
  $region7: #{efficientnet_seg_forward.6} parent=0 // loop_footer_branch
    %23 = sbr.rel target = $region3
  $region8: #{efficientnet_seg_forward.6} parent=0 // loop_exit
    _

</llo_original>
